<compile_context>
chip_gen: v6e
topology: v6e:2x2x1
jax: 0.10.0
libtpu: 0.0.40
codegen_flags: <defaults>
</compile_context>

<pallas_src>
import jax
import jax.numpy as jnp
from jax.experimental import pallas as pl
from jax.experimental.pallas import tpu as pltpu

N, C_IN, H, W = 2, 512, 6, 6          # fc1_ls(16,1) => conv output 4x4 => H=W=6
KH = KW = 3
OH, OW = H - KH + 1, W - KW + 1       # 4, 4
P = OH * OW                           # 16 flattened features per sample
K = C_IN * KH * KW                    # 4608 elements per conv patch
BN_EPS = 2e-5


def _lengthscale_kernel(x_ref, wrow_ref, wfc_ref, scal_ref, out_ref):
    # x_ref:    (N, H, W*C)   f32, channels lane-dense
    # wrow_ref: (KH, OW, W*C) f32, expanded conv weight (kw taps folded in)
    # wfc_ref:  (OH, OW)      f32, fc weight in row-major flatten order
    # scal_ref: (4,) SMEM     [conv_bias, bn_gamma, bn_beta, fc_bias]
    # out_ref:  (1, N)        lane-dense output row
    conv_b = scal_ref[0]
    gamma = scal_ref[1]
    beta = scal_ref[2]
    fc_b = scal_ref[3]
    n_batch = x_ref.shape[0]

    # row-major K contraction against an rhs that is stored transposed (q @ k.T style)
    contract = (((1,), (1,)), ((), ()))

    # Conv2d(512 -> 1, k=3, VALID): per sample, 3 MXU dots (one per kernel row).
    convs = []
    for s in range(n_batch):
        acc = jnp.zeros((OH, OW), jnp.float32)
        for kh in range(KH):
            xs = x_ref[s, kh:kh + OH, :]                          # (4, W*C), input rows oh+kh
            acc = acc + jax.lax.dot_general(
                xs, wrow_ref[kh], contract,
                preferred_element_type=jnp.float32)               # (4, 4)
        convs.append(acc + conv_b)

    # BatchNorm2d(1, eps=2e-5) with training-mode batch statistics over the whole
    # (N, 4, 4) conv output (single channel).  Eval mode would use running stats.
    cnt = float(n_batch * OH * OW)
    mean = sum([jnp.sum(c) for c in convs]) / cnt
    var = sum([jnp.sum(jnp.square(c - mean)) for c in convs]) / cnt
    scale = jax.lax.rsqrt(var + BN_EPS) * gamma

    # ReLU + Linear(16 -> 1); collect per-sample scalars into a lane-dense row.
    wfc = wfc_ref[...]                                            # (4, 4)
    lane = jax.lax.broadcasted_iota(jnp.int32, (1, n_batch), 1)
    zrow = jnp.zeros((1, n_batch), jnp.float32)
    for s in range(n_batch):
        y = jnp.maximum((convs[s] - mean) * scale + beta, 0.0)    # BN + ReLU, (4, 4)
        z = jnp.sum(y * wfc) + fc_b                               # Linear(16 -> 1)
        zrow = jnp.where(lane == s, z, zrow)

    # Softplus with PyTorch defaults (beta=1, threshold=20).
    out_ref[...] = jnp.where(zrow > 20.0, zrow,
                             jnp.log1p(jnp.exp(jnp.minimum(zrow, 20.0))))


def _expand_conv_weight(w_conv):
    """(1, C, 3, 3) OIHW -> (KH, OW, W*C): wrow[kh, ow, w*C + c] = w[0, c, kh, w-ow]."""
    wc = w_conv.reshape(C_IN, KH, KW).astype(jnp.float32)          # (C, kh, kw)
    kwi = jnp.arange(W)[:, None] - jnp.arange(OW)[None, :]         # (W, OW): kw = w - ow
    valid = ((kwi >= 0) & (kwi < KW)).astype(jnp.float32)
    kwi_c = jnp.clip(kwi, 0, KW - 1)
    g = wc[:, :, kwi_c] * valid[None, None, :, :]                  # (C, KH, W, OW)
    return jnp.transpose(g, (1, 3, 2, 0)).reshape(KH, OW, W * C_IN)  # (KH, OW, W*C)


@jax.jit
def lengthscale_forward(x_nchw, w_conv, b_conv, bn_gamma, bn_beta, w_fc, b_fc):
    n = x_nchw.shape[0]

    # Minimal activation relayout: channels onto the lane axis, (N, C, H, W) -> (N, H, W*C).
    x_rows = jnp.transpose(x_nchw, (0, 2, 3, 1)).reshape(n, H, W * C_IN)
    x_rows = x_rows.astype(jnp.float32)

    w_rows = _expand_conv_weight(w_conv)                           # one-time weight prep
    w_fc2 = w_fc.reshape(OH, OW).astype(jnp.float32)               # matches row-major flatten
    scalars = jnp.array([b_conv[0], bn_gamma[0], bn_beta[0], b_fc[0]], jnp.float32)

    out_row = pl.pallas_call(
        _lengthscale_kernel,
        out_shape=jax.ShapeDtypeStruct((1, n), jnp.float32),       # lane-dense output row
        in_specs=[
            pl.BlockSpec(memory_space=pltpu.MemorySpace.VMEM),     # x rows
            pl.BlockSpec(memory_space=pltpu.MemorySpace.VMEM),     # expanded conv weight
            pl.BlockSpec(memory_space=pltpu.MemorySpace.VMEM),     # fc weight
            pl.BlockSpec(memory_space=pltpu.MemorySpace.SMEM),     # scalar params
        ],
        out_specs=pl.BlockSpec(memory_space=pltpu.MemorySpace.VMEM),
    )(x_rows, w_rows, w_fc2, scalars)
    return out_row.reshape(n, 1)


def ref_forward(x, w_conv, b_conv, gamma, beta, w_fc, b_fc):
    conv = jax.lax.conv_general_dilated(
        x.astype(jnp.float32), w_conv.astype(jnp.float32),
        window_strides=(1, 1), padding="VALID",
        dimension_numbers=("NCHW", "OIHW", "NCHW")) + b_conv.reshape(1, 1, 1, 1)
    m = conv.mean()
    v = jnp.mean(jnp.square(conv - m))
    y = (conv - m) / jnp.sqrt(v + BN_EPS) * gamma[0] + beta[0]
    y = jnp.maximum(y, 0.0)
    h = y.reshape(x.shape[0], -1)
    z = h @ w_fc.T.astype(jnp.float32) + b_fc
    return jnp.where(z > 20.0, z, jnp.log1p(jnp.exp(jnp.minimum(z, 20.0))))


if __name__ == "__main__":
    key = jax.random.PRNGKey(0)
    kx, kw1, kb1, kg, kb, kwf, kbf = jax.random.split(key, 7)

    # Deterministic synthetic parameters (shapes from LengthScaleBlock.__init__).
    x = jax.random.normal(kx, (N, C_IN, H, W), dtype=jnp.float32)
    w_conv = jax.random.normal(kw1, (1, C_IN, KH, KW), jnp.float32) / (K ** 0.5)
    b_conv = jax.random.normal(kb1, (1,), jnp.float32) * 0.05
    bn_gamma = 1.0 + 0.1 * jax.random.normal(kg, (1,), jnp.float32)
    bn_beta = 0.1 * jax.random.normal(kb, (1,), jnp.float32)
    w_fc = jax.random.normal(kwf, (1, P), jnp.float32) / (P ** 0.5)
    b_fc = jax.random.normal(kbf, (1,), jnp.float32) * 0.05

    out = lengthscale_forward(x, w_conv, b_conv, bn_gamma, bn_beta, w_fc, b_fc)
    out = jax.block_until_ready(out)

    ref = ref_forward(x, w_conv, b_conv, bn_gamma, bn_beta, w_fc, b_fc)
    assert out.shape == (N, 1), out.shape
    assert jnp.allclose(out, ref, rtol=1e-4, atol=1e-4), (out, ref)
    print("KERNEL_OK")
</pallas_src>

<mosaic_0001>
module attributes {stable_mosaic.version = 11 : i64} {
  func.func @_lengthscale_kernel(%arg0: memref<2x6x3072xf32, #tpu.memory_space<vmem>>, %arg1: memref<3x4x3072xf32, #tpu.memory_space<vmem>>, %arg2: memref<4x4xf32, #tpu.memory_space<vmem>>, %arg3: memref<4xf32, #tpu.memory_space<smem>>, %arg4: memref<1x2xf32, #tpu.memory_space<vmem>>) attributes {dimension_semantics = [], scalar_prefetch = 0 : i64, scratch_operands = 0 : i64, tpu.core_type = #tpu.core_type<tc>} {
    %c0 = arith.constant 0 : index
    %0 = memref.load %arg3[%c0] : memref<4xf32, #tpu.memory_space<smem>>
    %c1 = arith.constant 1 : index
    %1 = memref.load %arg3[%c1] : memref<4xf32, #tpu.memory_space<smem>>
    %c2 = arith.constant 2 : index
    %2 = memref.load %arg3[%c2] : memref<4xf32, #tpu.memory_space<smem>>
    %c3 = arith.constant 3 : index
    %3 = memref.load %arg3[%c3] : memref<4xf32, #tpu.memory_space<smem>>
    %cst = arith.constant 0.000000e+00 : f32
    %4 = vector.broadcast %cst : f32 to vector<4x4xf32>
    %c0_0 = arith.constant 0 : index
    %c0_1 = arith.constant 0 : index
    %c0_2 = arith.constant 0 : index
    %5 = vector.load %arg0[%c0_0, %c0_1, %c0_2] : memref<2x6x3072xf32, #tpu.memory_space<vmem>>, vector<1x4x3072xf32>
    %6 = vector.shape_cast %5 : vector<1x4x3072xf32> to vector<4x3072xf32>
    %c0_3 = arith.constant 0 : index
    %c0_4 = arith.constant 0 : index
    %c0_5 = arith.constant 0 : index
    %7 = vector.load %arg1[%c0_3, %c0_4, %c0_5] : memref<3x4x3072xf32, #tpu.memory_space<vmem>>, vector<1x4x3072xf32>
    %8 = vector.shape_cast %7 : vector<1x4x3072xf32> to vector<4x3072xf32>
    %cst_6 = arith.constant dense<0.000000e+00> : vector<4x4xf32>
    %9 = tpu.matmul %6, %8, %cst_6 {dimension_numbers = #tpu.dot_dimension_numbers<[1], [1], [0], [0], [0, 0, 1, 0], [], []>} : vector<4x3072xf32>, vector<4x3072xf32>, vector<4x4xf32> -> vector<4x4xf32>
    %10 = arith.addf %4, %9 : vector<4x4xf32>
    %c0_7 = arith.constant 0 : index
    %c1_8 = arith.constant 1 : index
    %c0_9 = arith.constant 0 : index
    %11 = vector.load %arg0[%c0_7, %c1_8, %c0_9] : memref<2x6x3072xf32, #tpu.memory_space<vmem>>, vector<1x4x3072xf32>
    %12 = vector.shape_cast %11 : vector<1x4x3072xf32> to vector<4x3072xf32>
    %c1_10 = arith.constant 1 : index
    %c0_11 = arith.constant 0 : index
    %c0_12 = arith.constant 0 : index
    %13 = vector.load %arg1[%c1_10, %c0_11, %c0_12] : memref<3x4x3072xf32, #tpu.memory_space<vmem>>, vector<1x4x3072xf32>
    %14 = vector.shape_cast %13 : vector<1x4x3072xf32> to vector<4x3072xf32>
    %cst_13 = arith.constant dense<0.000000e+00> : vector<4x4xf32>
    %15 = tpu.matmul %12, %14, %cst_13 {dimension_numbers = #tpu.dot_dimension_numbers<[1], [1], [0], [0], [0, 0, 1, 0], [], []>} : vector<4x3072xf32>, vector<4x3072xf32>, vector<4x4xf32> -> vector<4x4xf32>
    %16 = arith.addf %10, %15 : vector<4x4xf32>
    %c0_14 = arith.constant 0 : index
    %c2_15 = arith.constant 2 : index
    %c0_16 = arith.constant 0 : index
    %17 = vector.load %arg0[%c0_14, %c2_15, %c0_16] : memref<2x6x3072xf32, #tpu.memory_space<vmem>>, vector<1x4x3072xf32>
    %18 = vector.shape_cast %17 : vector<1x4x3072xf32> to vector<4x3072xf32>
    %c2_17 = arith.constant 2 : index
    %c0_18 = arith.constant 0 : index
    %c0_19 = arith.constant 0 : index
    %19 = vector.load %arg1[%c2_17, %c0_18, %c0_19] : memref<3x4x3072xf32, #tpu.memory_space<vmem>>, vector<1x4x3072xf32>
    %20 = vector.shape_cast %19 : vector<1x4x3072xf32> to vector<4x3072xf32>
    %cst_20 = arith.constant dense<0.000000e+00> : vector<4x4xf32>
    %21 = tpu.matmul %18, %20, %cst_20 {dimension_numbers = #tpu.dot_dimension_numbers<[1], [1], [0], [0], [0, 0, 1, 0], [], []>} : vector<4x3072xf32>, vector<4x3072xf32>, vector<4x4xf32> -> vector<4x4xf32>
    %22 = arith.addf %16, %21 : vector<4x4xf32>
    %23 = vector.broadcast %0 : f32 to vector<4x4xf32>
    %24 = arith.addf %22, %23 : vector<4x4xf32>
    %cst_21 = arith.constant 0.000000e+00 : f32
    %25 = vector.broadcast %cst_21 : f32 to vector<4x4xf32>
    %c1_22 = arith.constant 1 : index
    %c0_23 = arith.constant 0 : index
    %c0_24 = arith.constant 0 : index
    %26 = vector.load %arg0[%c1_22, %c0_23, %c0_24] : memref<2x6x3072xf32, #tpu.memory_space<vmem>>, vector<1x4x3072xf32>
    %27 = vector.shape_cast %26 : vector<1x4x3072xf32> to vector<4x3072xf32>
    %c0_25 = arith.constant 0 : index
    %c0_26 = arith.constant 0 : index
    %c0_27 = arith.constant 0 : index
    %28 = vector.load %arg1[%c0_25, %c0_26, %c0_27] : memref<3x4x3072xf32, #tpu.memory_space<vmem>>, vector<1x4x3072xf32>
    %29 = vector.shape_cast %28 : vector<1x4x3072xf32> to vector<4x3072xf32>
    %cst_28 = arith.constant dense<0.000000e+00> : vector<4x4xf32>
    %30 = tpu.matmul %27, %29, %cst_28 {dimension_numbers = #tpu.dot_dimension_numbers<[1], [1], [0], [0], [0, 0, 1, 0], [], []>} : vector<4x3072xf32>, vector<4x3072xf32>, vector<4x4xf32> -> vector<4x4xf32>
    %31 = arith.addf %25, %30 : vector<4x4xf32>
    %c1_29 = arith.constant 1 : index
    %c1_30 = arith.constant 1 : index
    %c0_31 = arith.constant 0 : index
    %32 = vector.load %arg0[%c1_29, %c1_30, %c0_31] : memref<2x6x3072xf32, #tpu.memory_space<vmem>>, vector<1x4x3072xf32>
    %33 = vector.shape_cast %32 : vector<1x4x3072xf32> to vector<4x3072xf32>
    %c1_32 = arith.constant 1 : index
    %c0_33 = arith.constant 0 : index
    %c0_34 = arith.constant 0 : index
    %34 = vector.load %arg1[%c1_32, %c0_33, %c0_34] : memref<3x4x3072xf32, #tpu.memory_space<vmem>>, vector<1x4x3072xf32>
    %35 = vector.shape_cast %34 : vector<1x4x3072xf32> to vector<4x3072xf32>
    %cst_35 = arith.constant dense<0.000000e+00> : vector<4x4xf32>
    %36 = tpu.matmul %33, %35, %cst_35 {dimension_numbers = #tpu.dot_dimension_numbers<[1], [1], [0], [0], [0, 0, 1, 0], [], []>} : vector<4x3072xf32>, vector<4x3072xf32>, vector<4x4xf32> -> vector<4x4xf32>
    %37 = arith.addf %31, %36 : vector<4x4xf32>
    %c1_36 = arith.constant 1 : index
    %c2_37 = arith.constant 2 : index
    %c0_38 = arith.constant 0 : index
    %38 = vector.load %arg0[%c1_36, %c2_37, %c0_38] : memref<2x6x3072xf32, #tpu.memory_space<vmem>>, vector<1x4x3072xf32>
    %39 = vector.shape_cast %38 : vector<1x4x3072xf32> to vector<4x3072xf32>
    %c2_39 = arith.constant 2 : index
    %c0_40 = arith.constant 0 : index
    %c0_41 = arith.constant 0 : index
    %40 = vector.load %arg1[%c2_39, %c0_40, %c0_41] : memref<3x4x3072xf32, #tpu.memory_space<vmem>>, vector<1x4x3072xf32>
    %41 = vector.shape_cast %40 : vector<1x4x3072xf32> to vector<4x3072xf32>
    %cst_42 = arith.constant dense<0.000000e+00> : vector<4x4xf32>
    %42 = tpu.matmul %39, %41, %cst_42 {dimension_numbers = #tpu.dot_dimension_numbers<[1], [1], [0], [0], [0, 0, 1, 0], [], []>} : vector<4x3072xf32>, vector<4x3072xf32>, vector<4x4xf32> -> vector<4x4xf32>
    %43 = arith.addf %37, %42 : vector<4x4xf32>
    %44 = vector.broadcast %0 : f32 to vector<4x4xf32>
    %45 = arith.addf %43, %44 : vector<4x4xf32>
    %46 = vector.shape_cast %24 : vector<4x4xf32> to vector<1x4x4xf32>
    %cst_43 = arith.constant dense<0.000000e+00> : vector<1xf32>
    %47 = vector.multi_reduction <add>, %46, %cst_43 [1, 2] : vector<1x4x4xf32> to vector<1xf32>
    %48 = vector.shape_cast %47 : vector<1xf32> to vector<1x1x1xf32>
    %49 = vector.extract %48[0, 0, 0] : f32 from vector<1x1x1xf32>
    %50 = vector.shape_cast %45 : vector<4x4xf32> to vector<1x4x4xf32>
    %cst_44 = arith.constant dense<0.000000e+00> : vector<1xf32>
    %51 = vector.multi_reduction <add>, %50, %cst_44 [1, 2] : vector<1x4x4xf32> to vector<1xf32>
    %52 = vector.shape_cast %51 : vector<1xf32> to vector<1x1x1xf32>
    %53 = vector.extract %52[0, 0, 0] : f32 from vector<1x1x1xf32>
    %cst_45 = arith.constant 0.000000e+00 : f32
    %54 = arith.addf %cst_45, %49 : f32
    %55 = arith.addf %54, %53 : f32
    %cst_46 = arith.constant 3.200000e+01 : f32
    %56 = arith.divf %55, %cst_46 : f32
    %57 = vector.broadcast %56 : f32 to vector<4x4xf32>
    %58 = arith.subf %24, %57 : vector<4x4xf32>
    %59 = arith.mulf %58, %58 : vector<4x4xf32>
    %60 = vector.shape_cast %59 : vector<4x4xf32> to vector<1x4x4xf32>
    %cst_47 = arith.constant dense<0.000000e+00> : vector<1xf32>
    %61 = vector.multi_reduction <add>, %60, %cst_47 [1, 2] : vector<1x4x4xf32> to vector<1xf32>
    %62 = vector.shape_cast %61 : vector<1xf32> to vector<1x1x1xf32>
    %63 = vector.extract %62[0, 0, 0] : f32 from vector<1x1x1xf32>
    %64 = vector.broadcast %56 : f32 to vector<4x4xf32>
    %65 = arith.subf %45, %64 : vector<4x4xf32>
    %66 = arith.mulf %65, %65 : vector<4x4xf32>
    %67 = vector.shape_cast %66 : vector<4x4xf32> to vector<1x4x4xf32>
    %cst_48 = arith.constant dense<0.000000e+00> : vector<1xf32>
    %68 = vector.multi_reduction <add>, %67, %cst_48 [1, 2] : vector<1x4x4xf32> to vector<1xf32>
    %69 = vector.shape_cast %68 : vector<1xf32> to vector<1x1x1xf32>
    %70 = vector.extract %69[0, 0, 0] : f32 from vector<1x1x1xf32>
    %cst_49 = arith.constant 0.000000e+00 : f32
    %71 = arith.addf %cst_49, %63 : f32
    %72 = arith.addf %71, %70 : f32
    %cst_50 = arith.constant 3.200000e+01 : f32
    %73 = arith.divf %72, %cst_50 : f32
    %cst_51 = arith.constant 2.000000e-05 : f32
    %74 = arith.addf %73, %cst_51 : f32
    %75 = math.rsqrt %74 : f32
    %76 = arith.mulf %75, %1 : f32
    %c0_52 = arith.constant 0 : index
    %c0_53 = arith.constant 0 : index
    %77 = vector.load %arg2[%c0_52, %c0_53] : memref<4x4xf32, #tpu.memory_space<vmem>>, vector<4x4xf32>
    %78 = tpu.iota {dimensions = array<i32: 1>} : vector<1x2xi32>
    %cst_54 = arith.constant 0.000000e+00 : f32
    %79 = vector.broadcast %cst_54 : f32 to vector<1x2xf32>
    %80 = vector.broadcast %56 : f32 to vector<4x4xf32>
    %81 = arith.subf %24, %80 : vector<4x4xf32>
    %82 = vector.broadcast %76 : f32 to vector<4x4xf32>
    %83 = arith.mulf %81, %82 : vector<4x4xf32>
    %84 = vector.broadcast %2 : f32 to vector<4x4xf32>
    %85 = arith.addf %83, %84 : vector<4x4xf32>
    %cst_55 = arith.constant 0.000000e+00 : f32
    %86 = vector.broadcast %cst_55 : f32 to vector<4x4xf32>
    %87 = arith.maximumf %85, %86 : vector<4x4xf32>
    %88 = arith.mulf %87, %77 : vector<4x4xf32>
    %89 = vector.shape_cast %88 : vector<4x4xf32> to vector<1x4x4xf32>
    %cst_56 = arith.constant dense<0.000000e+00> : vector<1xf32>
    %90 = vector.multi_reduction <add>, %89, %cst_56 [1, 2] : vector<1x4x4xf32> to vector<1xf32>
    %91 = vector.shape_cast %90 : vector<1xf32> to vector<1x1x1xf32>
    %92 = vector.extract %91[0, 0, 0] : f32 from vector<1x1x1xf32>
    %93 = arith.addf %92, %3 : f32
    %c0_i32 = arith.constant 0 : i32
    %94 = vector.broadcast %c0_i32 : i32 to vector<1x2xi32>
    %95 = arith.cmpi eq, %78, %94 : vector<1x2xi32>
    %96 = vector.broadcast %93 : f32 to vector<1x2xf32>
    %97 = arith.select %95, %96, %79 : vector<1x2xi1>, vector<1x2xf32>
    %98 = vector.broadcast %56 : f32 to vector<4x4xf32>
    %99 = arith.subf %45, %98 : vector<4x4xf32>
    %100 = vector.broadcast %76 : f32 to vector<4x4xf32>
    %101 = arith.mulf %99, %100 : vector<4x4xf32>
    %102 = vector.broadcast %2 : f32 to vector<4x4xf32>
    %103 = arith.addf %101, %102 : vector<4x4xf32>
    %cst_57 = arith.constant 0.000000e+00 : f32
    %104 = vector.broadcast %cst_57 : f32 to vector<4x4xf32>
    %105 = arith.maximumf %103, %104 : vector<4x4xf32>
    %106 = arith.mulf %105, %77 : vector<4x4xf32>
    %107 = vector.shape_cast %106 : vector<4x4xf32> to vector<1x4x4xf32>
    %cst_58 = arith.constant dense<0.000000e+00> : vector<1xf32>
    %108 = vector.multi_reduction <add>, %107, %cst_58 [1, 2] : vector<1x4x4xf32> to vector<1xf32>
    %109 = vector.shape_cast %108 : vector<1xf32> to vector<1x1x1xf32>
    %110 = vector.extract %109[0, 0, 0] : f32 from vector<1x1x1xf32>
    %111 = arith.addf %110, %3 : f32
    %c1_i32 = arith.constant 1 : i32
    %112 = vector.broadcast %c1_i32 : i32 to vector<1x2xi32>
    %113 = arith.cmpi eq, %78, %112 : vector<1x2xi32>
    %114 = vector.broadcast %111 : f32 to vector<1x2xf32>
    %115 = arith.select %113, %114, %97 : vector<1x2xi1>, vector<1x2xf32>
    %cst_59 = arith.constant 2.000000e+01 : f32
    %116 = vector.broadcast %cst_59 : f32 to vector<1x2xf32>
    %117 = arith.cmpf ogt, %115, %116 : vector<1x2xf32>
    %cst_60 = arith.constant 2.000000e+01 : f32
    %118 = vector.broadcast %cst_60 : f32 to vector<1x2xf32>
    %119 = arith.minimumf %115, %118 : vector<1x2xf32>
    %120 = math.exp %119 : vector<1x2xf32>
    %121 = math.log1p %120 : vector<1x2xf32>
    %122 = arith.select %117, %115, %121 : vector<1x2xi1>, vector<1x2xf32>
    %c0_61 = arith.constant 0 : index
    %c0_62 = arith.constant 0 : index
    %123 = vector.load %arg4[%c0_61, %c0_62] : memref<1x2xf32, #tpu.memory_space<vmem>>, vector<1x2xf32>
    tpu.vector_store %arg4[%c0_61, %c0_62], %122 {strides = array<i32>} : memref<1x2xf32, #tpu.memory_space<vmem>>, vector<1x2xf32>,
    return
  }
}

</mosaic_0001>

<llo_original>
// kernel: lengthscale_forward.1
$region0: #{lengthscale_forward.1}
  #allocation0 [shape = 'u32[]', space=smem, size = 0x4, offset = 0x4, fixed_abs, tag = 'smem constant byte address 0x4 - core index']
  #allocation1 [shape = 'u32[144,128]{1,0:T(1,128)}', space=vmem, size = 0x12000, scoped, tag = 'internal scratch']
  %s0 = inlined_call_operand.vmem [shape: f32[2,6,3072], index: 0, kind: input, shape index: {}]
  %s1 = inlined_call_operand.vmem [shape: f32[3,4,3072], index: 1, kind: input, shape index: {}]
  %s2 = inlined_call_operand.vmem [shape: f32[4,4], index: 2, kind: input, shape index: {}]
  %s3 = inlined_call_operand.vmem [shape: f32[4], index: 3, kind: input, shape index: {}]
  %s4 = inlined_call_operand.hbm [shape: f32[1,2], index: 4, kind: output, shape index: {}]
  %s5 = sld [smem:[#allocation0]]
  $region30: #{lengthscale_forward.1} parent=0
    _
  %s7 = ssub.s32 1, %s5
  %s8 = scalar_select 0, %s7, %s5
  $region1: #{lengthscale_forward.1} parent=0
    #allocation2 [shape = 'u8[512]{0}', space=smem, size = 0x200, scoped, tag = 'input window, operand 3, single buffered']
    #allocation3 [shape = 's32[1]{0}', space=sflag, size = 0x4, scoped, tag = 'scoped memory for lengthscale_forward.1']
    #allocation4 [shape = 's32[1]{0}', space=sflag, size = 0x4, scoped, tag = 'scoped memory for lengthscale_forward.1']
    #allocation5 [shape = 'u8[512]{0}', space=vmem, size = 0x400, scoped, tag = 'output window, operand 0, single buffered']
    %9 = vsyncpa [#allocation4], 0
    %10 = vsyncpa [#allocation3], 0
    // Predicated region
    $region2: #{lengthscale_forward.1} parent=1 // pred_check
      _
    $region3: #{lengthscale_forward.1} parent=1 // pred_check_branch
      %12 = sbr.rel (0) target = $region5
    $region4: #{lengthscale_forward.1} parent=1 // pred_region
      _
    $region5: #{lengthscale_forward.1} parent=1 // pred_fallthru
      _
    // Predicated region
    $region6: #{lengthscale_forward.1} parent=1 // pred_check
      _
    $region7: #{lengthscale_forward.1} parent=1 // pred_check_branch
      %14 = sbr.rel (0) target = $region9
    $region8: #{lengthscale_forward.1} parent=1 // pred_region
      _
    $region9: #{lengthscale_forward.1} parent=1 // pred_fallthru
      _
    // Predicated region
    $region10: #{lengthscale_forward.1} parent=1 // pred_check
      _
    $region11: #{lengthscale_forward.1} parent=1 // pred_check_branch
      %16 = sbr.rel (0) target = $region13
    $region12: #{lengthscale_forward.1} parent=1 // pred_region
      _
    $region13: #{lengthscale_forward.1} parent=1 // pred_fallthru
      _
    // Predicated region
    $region14: #{lengthscale_forward.1} parent=1 // pred_check
      _
    $region15: #{lengthscale_forward.1} parent=1 // pred_check_branch
      %18 = sbr.rel (0) target = $region17
    $region16: #{lengthscale_forward.1} parent=1 // pred_region
      %s20 = ssub.s32 16, 16
      %21 = vsyncadd [#allocation4], %s20
      %s23 = sshll.u32 %s3, 4
      %s24 = int_to_ptr.vmem [resolvable:$true] %s23
      %26 = dma.vmem_to_smem %s24, 16, [#allocation2], [#allocation4]
    $region17: #{lengthscale_forward.1} parent=1 // pred_fallthru
      _
    // Predicated region
    $region18: #{lengthscale_forward.1} parent=1 // pred_check
      _
    $region19: #{lengthscale_forward.1} parent=1 // pred_check_branch
      %28 = sbr.rel (0) target = $region21
    $region20: #{lengthscale_forward.1} parent=1 // pred_region
      %29 = dma.done [#allocation4], 16
    $region21: #{lengthscale_forward.1} parent=1 // pred_fallthru
      _
    %30 = sfence
    %s31 = sld [smem:[#allocation2]]
    %s32 = sld [smem:[#allocation2 + $0x1]]
    %s33 = sld [smem:[#allocation2 + $0x2]]
    %s34 = sld [smem:[#allocation2 + $0x3]]
    %v35 = vld [vmem:[%s0] sm:$0xf]
    %v36 = vld [vmem:[%s0 + $0x8] sm:$0xf]
    %v37 = vld [vmem:[%s0 + $0x10] sm:$0xf]
    %v38 = vld [vmem:[%s0 + $0x18] sm:$0xf]
    %v39 = vld [vmem:[%s0 + $0x20] sm:$0xf]
    %v40 = vld [vmem:[%s0 + $0x28] sm:$0xf]
    %v41 = vld [vmem:[%s0 + $0x30] sm:$0xf]
    %v42 = vld [vmem:[%s0 + $0x38] sm:$0xf]
    %v43 = vld [vmem:[%s0 + $0x40] sm:$0xf]
    %v44 = vld [vmem:[%s0 + $0x48] sm:$0xf]
    %v45 = vld [vmem:[%s0 + $0x50] sm:$0xf]
    %v46 = vld [vmem:[%s0 + $0x58] sm:$0xf]
    %v47 = vld [vmem:[%s0 + $0x60] sm:$0xf]
    %v48 = vld [vmem:[%s0 + $0x68] sm:$0xf]
    %v49 = vld [vmem:[%s0 + $0x70] sm:$0xf]
    %v50 = vld [vmem:[%s0 + $0x78] sm:$0xf]
    %v51 = vld [vmem:[%s0 + $0x80] sm:$0xf]
    %v52 = vld [vmem:[%s0 + $0x88] sm:$0xf]
    %v53 = vld [vmem:[%s0 + $0x90] sm:$0xf]
    %v54 = vld [vmem:[%s0 + $0x98] sm:$0xf]
    %v55 = vld [vmem:[%s0 + $0xa0] sm:$0xf]
    %v56 = vld [vmem:[%s0 + $0xa8] sm:$0xf]
    %v57 = vld [vmem:[%s0 + $0xb0] sm:$0xf]
    %v58 = vld [vmem:[%s0 + $0xb8] sm:$0xf]
    %v59 = vld [vmem:[%s1] sm:$0xff]
    %v60 = vld [vmem:[%s1 + $0x8] sm:$0xff]
    %v61 = vld [vmem:[%s1 + $0x10] sm:$0xff]
    %v62 = vld [vmem:[%s1 + $0x18] sm:$0xff]
    %v63 = vld [vmem:[%s1 + $0x20] sm:$0xff]
    %v64 = vld [vmem:[%s1 + $0x28] sm:$0xff]
    %v65 = vld [vmem:[%s1 + $0x30] sm:$0xff]
    %v66 = vld [vmem:[%s1 + $0x38] sm:$0xff]
    %v67 = vld [vmem:[%s1 + $0x40] sm:$0xff]
    %v68 = vld [vmem:[%s1 + $0x48] sm:$0xff]
    %v69 = vld [vmem:[%s1 + $0x50] sm:$0xff]
    %v70 = vld [vmem:[%s1 + $0x58] sm:$0xff]
    %v71 = vld [vmem:[%s0] sm:$0x1e]
    %v72 = vld [vmem:[%s0 + $0x8] sm:$0x1e]
    %v73 = vld [vmem:[%s0 + $0x10] sm:$0x1e]
    %v74 = vld [vmem:[%s0 + $0x18] sm:$0x1e]
    %v75 = vld [vmem:[%s0 + $0x20] sm:$0x1e]
    %v76 = vld [vmem:[%s0 + $0x28] sm:$0x1e]
    %v77 = vld [vmem:[%s0 + $0x30] sm:$0x1e]
    %v78 = vld [vmem:[%s0 + $0x38] sm:$0x1e]
    %v79 = vld [vmem:[%s0 + $0x40] sm:$0x1e]
    %v80 = vld [vmem:[%s0 + $0x48] sm:$0x1e]
    %v81 = vld [vmem:[%s0 + $0x50] sm:$0x1e]
    %v82 = vld [vmem:[%s0 + $0x58] sm:$0x1e]
    %v83 = vld [vmem:[%s0 + $0x60] sm:$0x1e]
    %v84 = vld [vmem:[%s0 + $0x68] sm:$0x1e]
    %v85 = vld [vmem:[%s0 + $0x70] sm:$0x1e]
    %v86 = vld [vmem:[%s0 + $0x78] sm:$0x1e]
    %v87 = vld [vmem:[%s0 + $0x80] sm:$0x1e]
    %v88 = vld [vmem:[%s0 + $0x88] sm:$0x1e]
    %v89 = vld [vmem:[%s0 + $0x90] sm:$0x1e]
    %v90 = vld [vmem:[%s0 + $0x98] sm:$0x1e]
    %v91 = vld [vmem:[%s0 + $0xa0] sm:$0x1e]
    %v92 = vld [vmem:[%s0 + $0xa8] sm:$0x1e]
    %v93 = vld [vmem:[%s0 + $0xb0] sm:$0x1e]
    %v94 = vld [vmem:[%s0 + $0xb8] sm:$0x1e]
    %s95 = scalar_lea.vmem %s1, 96
    %v96 = vld [vmem:[%s95] sm:$0xff]
    %v97 = vld [vmem:[%s95 + $0x8] sm:$0xff]
    %v98 = vld [vmem:[%s95 + $0x10] sm:$0xff]
    %v99 = vld [vmem:[%s95 + $0x18] sm:$0xff]
    %v100 = vld [vmem:[%s95 + $0x20] sm:$0xff]
    %v101 = vld [vmem:[%s95 + $0x28] sm:$0xff]
    %v102 = vld [vmem:[%s95 + $0x30] sm:$0xff]
    %v103 = vld [vmem:[%s95 + $0x38] sm:$0xff]
    %v104 = vld [vmem:[%s95 + $0x40] sm:$0xff]
    %v105 = vld [vmem:[%s95 + $0x48] sm:$0xff]
    %v106 = vld [vmem:[%s95 + $0x50] sm:$0xff]
    %v107 = vld [vmem:[%s95 + $0x58] sm:$0xff]
    %v132 = vrot.slane %v71, 1
    %v133 = vrot.slane %v72, 1
    %v134 = vrot.slane %v73, 1
    %v135 = vrot.slane %v74, 1
    %v136 = vrot.slane %v75, 1
    %v137 = vrot.slane %v76, 1
    %v138 = vrot.slane %v77, 1
    %v139 = vrot.slane %v78, 1
    %v140 = vrot.slane %v79, 1
    %v141 = vrot.slane %v80, 1
    %v142 = vrot.slane %v81, 1
    %v143 = vrot.slane %v82, 1
    %v144 = vrot.slane %v83, 1
    %v145 = vrot.slane %v84, 1
    %v146 = vrot.slane %v85, 1
    %v147 = vrot.slane %v86, 1
    %v148 = vrot.slane %v87, 1
    %v149 = vrot.slane %v88, 1
    %v150 = vrot.slane %v89, 1
    %v151 = vrot.slane %v90, 1
    %v152 = vrot.slane %v91, 1
    %v153 = vrot.slane %v92, 1
    %v154 = vrot.slane %v93, 1
    %v155 = vrot.slane %v94, 1
    %v192 = vcombine.high %v96, %v96
    %v193 = vcombine.high %v97, %v97
    %v194 = vcombine.high %v98, %v98
    %v195 = vcombine.high %v99, %v99
    %v196 = vcombine.high %v100, %v100
    %v197 = vcombine.high %v101, %v101
    %v198 = vcombine.high %v102, %v102
    %v199 = vcombine.high %v103, %v103
    %v200 = vcombine.high %v104, %v104
    %v201 = vcombine.high %v105, %v105
    %v202 = vcombine.high %v106, %v106
    %v203 = vcombine.high %v107, %v107
    %216 = vmatprep.subr.mxu0 0.0
    %217 = vmatpush1.xpose.msra.mxu0 0.0
    %218 = vmatprep.subr.mxu0 0.0
    %219 = vmatpush1.xpose.msra.mxu0 0.0
    %220 = vmatprep.subr.mxu0 0.0
    %221 = vmatpush1.xpose.msra.mxu0 0.0
    %222 = vmatprep.subr.mxu0 0.0
    %223 = vmatpush1.xpose.msra.mxu0 0.0
    %224 = vmatprep.subr.mxu0 0.0
    %225 = vmatpush1.xpose.msra.mxu0 0.0
    %226 = vmatprep.subr.mxu0 0.0
    %227 = vmatpush1.xpose.msra.mxu0 0.0
    %228 = vmatprep.subr.mxu0 0.0
    %229 = vmatpush1.xpose.msra.mxu0 0.0
    %230 = vmatprep.subr.mxu0 0.0
    %231 = vmatpush1.xpose.msra.mxu0 0.0
    %232 = vmatprep.subr.mxu0 0.0
    %233 = vmatpush1.xpose.msra.mxu0 0.0
    %234 = vmatprep.subr.mxu0 0.0
    %235 = vmatpush1.xpose.msra.mxu0 0.0
    %236 = vmatprep.subr.mxu0 0.0
    %237 = vmatpush1.xpose.msra.mxu0 0.0
    %238 = vmatprep.subr.mxu0 0.0
    %239 = vmatpush1.xpose.msra.mxu0 0.0
    %240 = vmatprep.subr.mxu0 0.0
    %241 = vmatpush1.xpose.msra.mxu0 0.0
    %242 = vmatprep.subr.mxu0 0.0
    %243 = vmatpush1.xpose.msra.mxu0 0.0
    %244 = vmatprep.subr.mxu0 0.0
    %245 = vmatpush1.xpose.msra.mxu0 0.0
    %246 = vmatprep.subr.mxu0 %v192
    %247 = vmatpush1.xpose.msra.mxu0 %v96
    %248 = vmatprep.subr.mxu0 0.0
    %249 = vmatpush2.xpose.msra.mxu0 0.0
    %250 = vmatprep.subr.mxu0 0.0
    %251 = vmatpush2.xpose.msra.mxu0 0.0
    %252 = vmatprep.subr.mxu0 0.0
    %253 = vmatpush2.xpose.msra.mxu0 0.0
    %254 = vmatprep.subr.mxu0 0.0
    %255 = vmatpush2.xpose.msra.mxu0 0.0
    %256 = vmatprep.subr.mxu0 0.0
    %257 = vmatpush2.xpose.msra.mxu0 0.0
    %258 = vmatprep.subr.mxu0 0.0
    %259 = vmatpush2.xpose.msra.mxu0 0.0
    %260 = vmatprep.subr.mxu0 0.0
    %261 = vmatpush2.xpose.msra.mxu0 0.0
    %262 = vmatprep.subr.mxu0 0.0
    %263 = vmatpush2.xpose.msra.mxu0 0.0
    %264 = vmatprep.subr.mxu0 0.0
    %265 = vmatpush2.xpose.msra.mxu0 0.0
    %266 = vmatprep.subr.mxu0 0.0
    %267 = vmatpush2.xpose.msra.mxu0 0.0
    %268 = vmatprep.subr.mxu0 0.0
    %269 = vmatpush2.xpose.msra.mxu0 0.0
    %270 = vmatprep.subr.mxu0 0.0
    %271 = vmatpush2.xpose.msra.mxu0 0.0
    %272 = vmatprep.subr.mxu0 0.0
    %273 = vmatpush2.xpose.msra.mxu0 0.0
    %274 = vmatprep.subr.mxu0 0.0
    %275 = vmatpush2.xpose.msra.mxu0 0.0
    %276 = vmatprep.subr.mxu0 0.0
    %277 = vmatpush2.xpose.msra.mxu0 0.0
    %278 = vmatprep.subr.mxu0 0.0
    %279 = vmatpush2.xpose.msra.mxu0 0.0
    %280 = vmatprep.mubr.f32.mxu0 %v133
    %281 = vmatmul.mubr.f32.gmra.mxu0 %v132
    %v282 = vpop.f32.mrf.mxu0
    %v283 = vadd.f32 0.0, %v282
    %v284 = vpop.f32.mrf.mxu0
    %285 = vdwg.mxu0
    %286 = vmatprep.subr.mxu0 0.0
    %287 = vmatpush1.xpose.msra.mxu0 0.0
    %288 = vmatprep.subr.mxu0 0.0
    %289 = vmatpush1.xpose.msra.mxu0 0.0
    %290 = vmatprep.subr.mxu0 0.0
    %291 = vmatpush1.xpose.msra.mxu0 0.0
    %292 = vmatprep.subr.mxu0 0.0
    %293 = vmatpush1.xpose.msra.mxu0 0.0
    %294 = vmatprep.subr.mxu0 0.0
    %295 = vmatpush1.xpose.msra.mxu0 0.0
    %296 = vmatprep.subr.mxu0 0.0
    %297 = vmatpush1.xpose.msra.mxu0 0.0
    %298 = vmatprep.subr.mxu0 0.0
    %299 = vmatpush1.xpose.msra.mxu0 0.0
    %300 = vmatprep.subr.mxu0 0.0
    %301 = vmatpush1.xpose.msra.mxu0 0.0
    %302 = vmatprep.subr.mxu0 0.0
    %303 = vmatpush1.xpose.msra.mxu0 0.0
    %304 = vmatprep.subr.mxu0 0.0
    %305 = vmatpush1.xpose.msra.mxu0 0.0
    %306 = vmatprep.subr.mxu0 0.0
    %307 = vmatpush1.xpose.msra.mxu0 0.0
    %308 = vmatprep.subr.mxu0 0.0
    %309 = vmatpush1.xpose.msra.mxu0 0.0
    %310 = vmatprep.subr.mxu0 0.0
    %311 = vmatpush1.xpose.msra.mxu0 0.0
    %312 = vmatprep.subr.mxu0 0.0
    %313 = vmatpush1.xpose.msra.mxu0 0.0
    %314 = vmatprep.subr.mxu0 0.0
    %315 = vmatpush1.xpose.msra.mxu0 0.0
    %316 = vmatprep.subr.mxu0 %v193
    %317 = vmatpush1.xpose.msra.mxu0 %v97
    %318 = vmatprep.subr.mxu0 0.0
    %319 = vmatpush2.xpose.msra.mxu0 0.0
    %320 = vmatprep.subr.mxu0 0.0
    %321 = vmatpush2.xpose.msra.mxu0 0.0
    %322 = vmatprep.subr.mxu0 0.0
    %323 = vmatpush2.xpose.msra.mxu0 0.0
    %324 = vmatprep.subr.mxu0 0.0
    %325 = vmatpush2.xpose.msra.mxu0 0.0
    %326 = vmatprep.subr.mxu0 0.0
    %327 = vmatpush2.xpose.msra.mxu0 0.0
    %328 = vmatprep.subr.mxu0 0.0
    %329 = vmatpush2.xpose.msra.mxu0 0.0
    %330 = vmatprep.subr.mxu0 0.0
    %331 = vmatpush2.xpose.msra.mxu0 0.0
    %332 = vmatprep.subr.mxu0 0.0
    %333 = vmatpush2.xpose.msra.mxu0 0.0
    %334 = vmatprep.subr.mxu0 0.0
    %335 = vmatpush2.xpose.msra.mxu0 0.0
    %336 = vmatprep.subr.mxu0 0.0
    %337 = vmatpush2.xpose.msra.mxu0 0.0
    %338 = vmatprep.subr.mxu0 0.0
    %339 = vmatpush2.xpose.msra.mxu0 0.0
    %340 = vmatprep.subr.mxu0 0.0
    %341 = vmatpush2.xpose.msra.mxu0 0.0
    %342 = vmatprep.subr.mxu0 0.0
    %343 = vmatpush2.xpose.msra.mxu0 0.0
    %344 = vmatprep.subr.mxu0 0.0
    %345 = vmatpush2.xpose.msra.mxu0 0.0
    %346 = vmatprep.subr.mxu0 0.0
    %347 = vmatpush2.xpose.msra.mxu0 0.0
    %348 = vmatprep.subr.mxu0 0.0
    %349 = vmatpush2.xpose.msra.mxu0 0.0
    %350 = vmatprep.mubr.f32.mxu0 %v135
    %351 = vmatmul.mubr.f32.gmra.mxu0 %v134
    %v352 = vpop.f32.mrf.mxu0
    %v353 = vadd.f32 %v283, %v352
    %v354 = vpop.f32.mrf.mxu0
    %355 = vdwg.mxu0
    %356 = vmatprep.subr.mxu0 0.0
    %357 = vmatpush1.xpose.msra.mxu0 0.0
    %358 = vmatprep.subr.mxu0 0.0
    %359 = vmatpush1.xpose.msra.mxu0 0.0
    %360 = vmatprep.subr.mxu0 0.0
    %361 = vmatpush1.xpose.msra.mxu0 0.0
    %362 = vmatprep.subr.mxu0 0.0
    %363 = vmatpush1.xpose.msra.mxu0 0.0
    %364 = vmatprep.subr.mxu0 0.0
    %365 = vmatpush1.xpose.msra.mxu0 0.0
    %366 = vmatprep.subr.mxu0 0.0
    %367 = vmatpush1.xpose.msra.mxu0 0.0
    %368 = vmatprep.subr.mxu0 0.0
    %369 = vmatpush1.xpose.msra.mxu0 0.0
    %370 = vmatprep.subr.mxu0 0.0
    %371 = vmatpush1.xpose.msra.mxu0 0.0
    %372 = vmatprep.subr.mxu0 0.0
    %373 = vmatpush1.xpose.msra.mxu0 0.0
    %374 = vmatprep.subr.mxu0 0.0
    %375 = vmatpush1.xpose.msra.mxu0 0.0
    %376 = vmatprep.subr.mxu0 0.0
    %377 = vmatpush1.xpose.msra.mxu0 0.0
    %378 = vmatprep.subr.mxu0 0.0
    %379 = vmatpush1.xpose.msra.mxu0 0.0
    %380 = vmatprep.subr.mxu0 0.0
    %381 = vmatpush1.xpose.msra.mxu0 0.0
    %382 = vmatprep.subr.mxu0 0.0
    %383 = vmatpush1.xpose.msra.mxu0 0.0
    %384 = vmatprep.subr.mxu0 0.0
    %385 = vmatpush1.xpose.msra.mxu0 0.0
    %386 = vmatprep.subr.mxu0 %v194
    %387 = vmatpush1.xpose.msra.mxu0 %v98
    %388 = vmatprep.subr.mxu0 0.0
    %389 = vmatpush2.xpose.msra.mxu0 0.0
    %390 = vmatprep.subr.mxu0 0.0
    %391 = vmatpush2.xpose.msra.mxu0 0.0
    %392 = vmatprep.subr.mxu0 0.0
    %393 = vmatpush2.xpose.msra.mxu0 0.0
    %394 = vmatprep.subr.mxu0 0.0
    %395 = vmatpush2.xpose.msra.mxu0 0.0
    %396 = vmatprep.subr.mxu0 0.0
    %397 = vmatpush2.xpose.msra.mxu0 0.0
    %398 = vmatprep.subr.mxu0 0.0
    %399 = vmatpush2.xpose.msra.mxu0 0.0
    %400 = vmatprep.subr.mxu0 0.0
    %401 = vmatpush2.xpose.msra.mxu0 0.0
    %402 = vmatprep.subr.mxu0 0.0
    %403 = vmatpush2.xpose.msra.mxu0 0.0
    %404 = vmatprep.subr.mxu0 0.0
    %405 = vmatpush2.xpose.msra.mxu0 0.0
    %406 = vmatprep.subr.mxu0 0.0
    %407 = vmatpush2.xpose.msra.mxu0 0.0
    %408 = vmatprep.subr.mxu0 0.0
    %409 = vmatpush2.xpose.msra.mxu0 0.0
    %410 = vmatprep.subr.mxu0 0.0
    %411 = vmatpush2.xpose.msra.mxu0 0.0
    %412 = vmatprep.subr.mxu0 0.0
    %413 = vmatpush2.xpose.msra.mxu0 0.0
    %414 = vmatprep.subr.mxu0 0.0
    %415 = vmatpush2.xpose.msra.mxu0 0.0
    %416 = vmatprep.subr.mxu0 0.0
    %417 = vmatpush2.xpose.msra.mxu0 0.0
    %418 = vmatprep.subr.mxu0 0.0
    %419 = vmatpush2.xpose.msra.mxu0 0.0
    %420 = vmatprep.mubr.f32.mxu0 %v137
    %421 = vmatmul.mubr.f32.gmra.mxu0 %v136
    %v422 = vpop.f32.mrf.mxu0
    %v423 = vadd.f32 %v353, %v422
    %v424 = vpop.f32.mrf.mxu0
    %425 = vdwg.mxu0
    %426 = vmatprep.subr.mxu0 0.0
    %427 = vmatpush1.xpose.msra.mxu0 0.0
    %428 = vmatprep.subr.mxu0 0.0
    %429 = vmatpush1.xpose.msra.mxu0 0.0
    %430 = vmatprep.subr.mxu0 0.0
    %431 = vmatpush1.xpose.msra.mxu0 0.0
    %432 = vmatprep.subr.mxu0 0.0
    %433 = vmatpush1.xpose.msra.mxu0 0.0
    %434 = vmatprep.subr.mxu0 0.0
    %435 = vmatpush1.xpose.msra.mxu0 0.0
    %436 = vmatprep.subr.mxu0 0.0
    %437 = vmatpush1.xpose.msra.mxu0 0.0
    %438 = vmatprep.subr.mxu0 0.0
    %439 = vmatpush1.xpose.msra.mxu0 0.0
    %440 = vmatprep.subr.mxu0 0.0
    %441 = vmatpush1.xpose.msra.mxu0 0.0
    %442 = vmatprep.subr.mxu0 0.0
    %443 = vmatpush1.xpose.msra.mxu0 0.0
    %444 = vmatprep.subr.mxu0 0.0
    %445 = vmatpush1.xpose.msra.mxu0 0.0
    %446 = vmatprep.subr.mxu0 0.0
    %447 = vmatpush1.xpose.msra.mxu0 0.0
    %448 = vmatprep.subr.mxu0 0.0
    %449 = vmatpush1.xpose.msra.mxu0 0.0
    %450 = vmatprep.subr.mxu0 0.0
    %451 = vmatpush1.xpose.msra.mxu0 0.0
    %452 = vmatprep.subr.mxu0 0.0
    %453 = vmatpush1.xpose.msra.mxu0 0.0
    %454 = vmatprep.subr.mxu0 0.0
    %455 = vmatpush1.xpose.msra.mxu0 0.0
    %456 = vmatprep.subr.mxu0 %v195
    %457 = vmatpush1.xpose.msra.mxu0 %v99
    %458 = vmatprep.subr.mxu0 0.0
    %459 = vmatpush2.xpose.msra.mxu0 0.0
    %460 = vmatprep.subr.mxu0 0.0
    %461 = vmatpush2.xpose.msra.mxu0 0.0
    %462 = vmatprep.subr.mxu0 0.0
    %463 = vmatpush2.xpose.msra.mxu0 0.0
    %464 = vmatprep.subr.mxu0 0.0
    %465 = vmatpush2.xpose.msra.mxu0 0.0
    %466 = vmatprep.subr.mxu0 0.0
    %467 = vmatpush2.xpose.msra.mxu0 0.0
    %468 = vmatprep.subr.mxu0 0.0
    %469 = vmatpush2.xpose.msra.mxu0 0.0
    %470 = vmatprep.subr.mxu0 0.0
    %471 = vmatpush2.xpose.msra.mxu0 0.0
    %472 = vmatprep.subr.mxu0 0.0
    %473 = vmatpush2.xpose.msra.mxu0 0.0
    %474 = vmatprep.subr.mxu0 0.0
    %475 = vmatpush2.xpose.msra.mxu0 0.0
    %476 = vmatprep.subr.mxu0 0.0
    %477 = vmatpush2.xpose.msra.mxu0 0.0
    %478 = vmatprep.subr.mxu0 0.0
    %479 = vmatpush2.xpose.msra.mxu0 0.0
    %480 = vmatprep.subr.mxu0 0.0
    %481 = vmatpush2.xpose.msra.mxu0 0.0
    %482 = vmatprep.subr.mxu0 0.0
    %483 = vmatpush2.xpose.msra.mxu0 0.0
    %484 = vmatprep.subr.mxu0 0.0
    %485 = vmatpush2.xpose.msra.mxu0 0.0
    %486 = vmatprep.subr.mxu0 0.0
    %487 = vmatpush2.xpose.msra.mxu0 0.0
    %488 = vmatprep.subr.mxu0 0.0
    %489 = vmatpush2.xpose.msra.mxu0 0.0
    %490 = vmatprep.mubr.f32.mxu0 %v139
    %491 = vmatmul.mubr.f32.gmra.mxu0 %v138
    %v492 = vpop.f32.mrf.mxu0
    %v493 = vadd.f32 %v423, %v492
    %v494 = vpop.f32.mrf.mxu0
    %495 = vdwg.mxu0
    %496 = vmatprep.subr.mxu0 0.0
    %497 = vmatpush1.xpose.msra.mxu0 0.0
    %498 = vmatprep.subr.mxu0 0.0
    %499 = vmatpush1.xpose.msra.mxu0 0.0
    %500 = vmatprep.subr.mxu0 0.0
    %501 = vmatpush1.xpose.msra.mxu0 0.0
    %502 = vmatprep.subr.mxu0 0.0
    %503 = vmatpush1.xpose.msra.mxu0 0.0
    %504 = vmatprep.subr.mxu0 0.0
    %505 = vmatpush1.xpose.msra.mxu0 0.0
    %506 = vmatprep.subr.mxu0 0.0
    %507 = vmatpush1.xpose.msra.mxu0 0.0
    %508 = vmatprep.subr.mxu0 0.0
    %509 = vmatpush1.xpose.msra.mxu0 0.0
    %510 = vmatprep.subr.mxu0 0.0
    %511 = vmatpush1.xpose.msra.mxu0 0.0
    %512 = vmatprep.subr.mxu0 0.0
    %513 = vmatpush1.xpose.msra.mxu0 0.0
    %514 = vmatprep.subr.mxu0 0.0
    %515 = vmatpush1.xpose.msra.mxu0 0.0
    %516 = vmatprep.subr.mxu0 0.0
    %517 = vmatpush1.xpose.msra.mxu0 0.0
    %518 = vmatprep.subr.mxu0 0.0
    %519 = vmatpush1.xpose.msra.mxu0 0.0
    %520 = vmatprep.subr.mxu0 0.0
    %521 = vmatpush1.xpose.msra.mxu0 0.0
    %522 = vmatprep.subr.mxu0 0.0
    %523 = vmatpush1.xpose.msra.mxu0 0.0
    %524 = vmatprep.subr.mxu0 0.0
    %525 = vmatpush1.xpose.msra.mxu0 0.0
    %526 = vmatprep.subr.mxu0 %v196
    %527 = vmatpush1.xpose.msra.mxu0 %v100
    %528 = vmatprep.subr.mxu0 0.0
    %529 = vmatpush2.xpose.msra.mxu0 0.0
    %530 = vmatprep.subr.mxu0 0.0
    %531 = vmatpush2.xpose.msra.mxu0 0.0
    %532 = vmatprep.subr.mxu0 0.0
    %533 = vmatpush2.xpose.msra.mxu0 0.0
    %534 = vmatprep.subr.mxu0 0.0
    %535 = vmatpush2.xpose.msra.mxu0 0.0
    %536 = vmatprep.subr.mxu0 0.0
    %537 = vmatpush2.xpose.msra.mxu0 0.0
    %538 = vmatprep.subr.mxu0 0.0
    %539 = vmatpush2.xpose.msra.mxu0 0.0
    %540 = vmatprep.subr.mxu0 0.0
    %541 = vmatpush2.xpose.msra.mxu0 0.0
    %542 = vmatprep.subr.mxu0 0.0
    %543 = vmatpush2.xpose.msra.mxu0 0.0
    %544 = vmatprep.subr.mxu0 0.0
    %545 = vmatpush2.xpose.msra.mxu0 0.0
    %546 = vmatprep.subr.mxu0 0.0
    %547 = vmatpush2.xpose.msra.mxu0 0.0
    %548 = vmatprep.subr.mxu0 0.0
    %549 = vmatpush2.xpose.msra.mxu0 0.0
    %550 = vmatprep.subr.mxu0 0.0
    %551 = vmatpush2.xpose.msra.mxu0 0.0
    %552 = vmatprep.subr.mxu0 0.0
    %553 = vmatpush2.xpose.msra.mxu0 0.0
    %554 = vmatprep.subr.mxu0 0.0
    %555 = vmatpush2.xpose.msra.mxu0 0.0
    %556 = vmatprep.subr.mxu0 0.0
    %557 = vmatpush2.xpose.msra.mxu0 0.0
    %558 = vmatprep.subr.mxu0 0.0
    %559 = vmatpush2.xpose.msra.mxu0 0.0
    %560 = vmatprep.mubr.f32.mxu0 %v141
    %561 = vmatmul.mubr.f32.gmra.mxu0 %v140
    %v562 = vpop.f32.mrf.mxu0
    %v563 = vadd.f32 %v493, %v562
    %v564 = vpop.f32.mrf.mxu0
    %565 = vdwg.mxu0
    %566 = vmatprep.subr.mxu0 0.0
    %567 = vmatpush1.xpose.msra.mxu0 0.0
    %568 = vmatprep.subr.mxu0 0.0
    %569 = vmatpush1.xpose.msra.mxu0 0.0
    %570 = vmatprep.subr.mxu0 0.0
    %571 = vmatpush1.xpose.msra.mxu0 0.0
    %572 = vmatprep.subr.mxu0 0.0
    %573 = vmatpush1.xpose.msra.mxu0 0.0
    %574 = vmatprep.subr.mxu0 0.0
    %575 = vmatpush1.xpose.msra.mxu0 0.0
    %576 = vmatprep.subr.mxu0 0.0
    %577 = vmatpush1.xpose.msra.mxu0 0.0
    %578 = vmatprep.subr.mxu0 0.0
    %579 = vmatpush1.xpose.msra.mxu0 0.0
    %580 = vmatprep.subr.mxu0 0.0
    %581 = vmatpush1.xpose.msra.mxu0 0.0
    %582 = vmatprep.subr.mxu0 0.0
    %583 = vmatpush1.xpose.msra.mxu0 0.0
    %584 = vmatprep.subr.mxu0 0.0
    %585 = vmatpush1.xpose.msra.mxu0 0.0
    %586 = vmatprep.subr.mxu0 0.0
    %587 = vmatpush1.xpose.msra.mxu0 0.0
    %588 = vmatprep.subr.mxu0 0.0
    %589 = vmatpush1.xpose.msra.mxu0 0.0
    %590 = vmatprep.subr.mxu0 0.0
    %591 = vmatpush1.xpose.msra.mxu0 0.0
    %592 = vmatprep.subr.mxu0 0.0
    %593 = vmatpush1.xpose.msra.mxu0 0.0
    %594 = vmatprep.subr.mxu0 0.0
    %595 = vmatpush1.xpose.msra.mxu0 0.0
    %596 = vmatprep.subr.mxu0 %v197
    %597 = vmatpush1.xpose.msra.mxu0 %v101
    %598 = vmatprep.subr.mxu0 0.0
    %599 = vmatpush2.xpose.msra.mxu0 0.0
    %600 = vmatprep.subr.mxu0 0.0
    %601 = vmatpush2.xpose.msra.mxu0 0.0
    %602 = vmatprep.subr.mxu0 0.0
    %603 = vmatpush2.xpose.msra.mxu0 0.0
    %604 = vmatprep.subr.mxu0 0.0
    %605 = vmatpush2.xpose.msra.mxu0 0.0
    %606 = vmatprep.subr.mxu0 0.0
    %607 = vmatpush2.xpose.msra.mxu0 0.0
    %608 = vmatprep.subr.mxu0 0.0
    %609 = vmatpush2.xpose.msra.mxu0 0.0
    %610 = vmatprep.subr.mxu0 0.0
    %611 = vmatpush2.xpose.msra.mxu0 0.0
    %612 = vmatprep.subr.mxu0 0.0
    %613 = vmatpush2.xpose.msra.mxu0 0.0
    %614 = vmatprep.subr.mxu0 0.0
    %615 = vmatpush2.xpose.msra.mxu0 0.0
    %616 = vmatprep.subr.mxu0 0.0
    %617 = vmatpush2.xpose.msra.mxu0 0.0
    %618 = vmatprep.subr.mxu0 0.0
    %619 = vmatpush2.xpose.msra.mxu0 0.0
    %620 = vmatprep.subr.mxu0 0.0
    %621 = vmatpush2.xpose.msra.mxu0 0.0
    %622 = vmatprep.subr.mxu0 0.0
    %623 = vmatpush2.xpose.msra.mxu0 0.0
    %624 = vmatprep.subr.mxu0 0.0
    %625 = vmatpush2.xpose.msra.mxu0 0.0
    %626 = vmatprep.subr.mxu0 0.0
    %627 = vmatpush2.xpose.msra.mxu0 0.0
    %628 = vmatprep.subr.mxu0 0.0
    %629 = vmatpush2.xpose.msra.mxu0 0.0
    %630 = vmatprep.mubr.f32.mxu0 %v143
    %631 = vmatmul.mubr.f32.gmra.mxu0 %v142
    %v632 = vpop.f32.mrf.mxu0
    %v633 = vadd.f32 %v563, %v632
    %v634 = vpop.f32.mrf.mxu0
    %635 = vdwg.mxu0
    %636 = vmatprep.subr.mxu0 0.0
    %637 = vmatpush1.xpose.msra.mxu0 0.0
    %638 = vmatprep.subr.mxu0 0.0
    %639 = vmatpush1.xpose.msra.mxu0 0.0
    %640 = vmatprep.subr.mxu0 0.0
    %641 = vmatpush1.xpose.msra.mxu0 0.0
    %642 = vmatprep.subr.mxu0 0.0
    %643 = vmatpush1.xpose.msra.mxu0 0.0
    %644 = vmatprep.subr.mxu0 0.0
    %645 = vmatpush1.xpose.msra.mxu0 0.0
    %646 = vmatprep.subr.mxu0 0.0
    %647 = vmatpush1.xpose.msra.mxu0 0.0
    %648 = vmatprep.subr.mxu0 0.0
    %649 = vmatpush1.xpose.msra.mxu0 0.0
    %650 = vmatprep.subr.mxu0 0.0
    %651 = vmatpush1.xpose.msra.mxu0 0.0
    %652 = vmatprep.subr.mxu0 0.0
    %653 = vmatpush1.xpose.msra.mxu0 0.0
    %654 = vmatprep.subr.mxu0 0.0
    %655 = vmatpush1.xpose.msra.mxu0 0.0
    %656 = vmatprep.subr.mxu0 0.0
    %657 = vmatpush1.xpose.msra.mxu0 0.0
    %658 = vmatprep.subr.mxu0 0.0
    %659 = vmatpush1.xpose.msra.mxu0 0.0
    %660 = vmatprep.subr.mxu0 0.0
    %661 = vmatpush1.xpose.msra.mxu0 0.0
    %662 = vmatprep.subr.mxu0 0.0
    %663 = vmatpush1.xpose.msra.mxu0 0.0
    %664 = vmatprep.subr.mxu0 0.0
    %665 = vmatpush1.xpose.msra.mxu0 0.0
    %666 = vmatprep.subr.mxu0 %v198
    %667 = vmatpush1.xpose.msra.mxu0 %v102
    %668 = vmatprep.subr.mxu0 0.0
    %669 = vmatpush2.xpose.msra.mxu0 0.0
    %670 = vmatprep.subr.mxu0 0.0
    %671 = vmatpush2.xpose.msra.mxu0 0.0
    %672 = vmatprep.subr.mxu0 0.0
    %673 = vmatpush2.xpose.msra.mxu0 0.0
    %674 = vmatprep.subr.mxu0 0.0
    %675 = vmatpush2.xpose.msra.mxu0 0.0
    %676 = vmatprep.subr.mxu0 0.0
    %677 = vmatpush2.xpose.msra.mxu0 0.0
    %678 = vmatprep.subr.mxu0 0.0
    %679 = vmatpush2.xpose.msra.mxu0 0.0
    %680 = vmatprep.subr.mxu0 0.0
    %681 = vmatpush2.xpose.msra.mxu0 0.0
    %682 = vmatprep.subr.mxu0 0.0
    %683 = vmatpush2.xpose.msra.mxu0 0.0
    %684 = vmatprep.subr.mxu0 0.0
    %685 = vmatpush2.xpose.msra.mxu0 0.0
    %686 = vmatprep.subr.mxu0 0.0
    %687 = vmatpush2.xpose.msra.mxu0 0.0
    %688 = vmatprep.subr.mxu0 0.0
    %689 = vmatpush2.xpose.msra.mxu0 0.0
    %690 = vmatprep.subr.mxu0 0.0
    %691 = vmatpush2.xpose.msra.mxu0 0.0
    %692 = vmatprep.subr.mxu0 0.0
    %693 = vmatpush2.xpose.msra.mxu0 0.0
    %694 = vmatprep.subr.mxu0 0.0
    %695 = vmatpush2.xpose.msra.mxu0 0.0
    %696 = vmatprep.subr.mxu0 0.0
    %697 = vmatpush2.xpose.msra.mxu0 0.0
    %698 = vmatprep.subr.mxu0 0.0
    %699 = vmatpush2.xpose.msra.mxu0 0.0
    %700 = vmatprep.mubr.f32.mxu0 %v145
    %701 = vmatmul.mubr.f32.gmra.mxu0 %v144
    %v702 = vpop.f32.mrf.mxu0
    %v703 = vadd.f32 %v633, %v702
    %v704 = vpop.f32.mrf.mxu0
    %705 = vdwg.mxu0
    %706 = vmatprep.subr.mxu0 0.0
    %707 = vmatpush1.xpose.msra.mxu0 0.0
    %708 = vmatprep.subr.mxu0 0.0
    %709 = vmatpush1.xpose.msra.mxu0 0.0
    %710 = vmatprep.subr.mxu0 0.0
    %711 = vmatpush1.xpose.msra.mxu0 0.0
    %712 = vmatprep.subr.mxu0 0.0
    %713 = vmatpush1.xpose.msra.mxu0 0.0
    %714 = vmatprep.subr.mxu0 0.0
    %715 = vmatpush1.xpose.msra.mxu0 0.0
    %716 = vmatprep.subr.mxu0 0.0
    %717 = vmatpush1.xpose.msra.mxu0 0.0
    %718 = vmatprep.subr.mxu0 0.0
    %719 = vmatpush1.xpose.msra.mxu0 0.0
    %720 = vmatprep.subr.mxu0 0.0
    %721 = vmatpush1.xpose.msra.mxu0 0.0
    %722 = vmatprep.subr.mxu0 0.0
    %723 = vmatpush1.xpose.msra.mxu0 0.0
    %724 = vmatprep.subr.mxu0 0.0
    %725 = vmatpush1.xpose.msra.mxu0 0.0
    %726 = vmatprep.subr.mxu0 0.0
    %727 = vmatpush1.xpose.msra.mxu0 0.0
    %728 = vmatprep.subr.mxu0 0.0
    %729 = vmatpush1.xpose.msra.mxu0 0.0
    %730 = vmatprep.subr.mxu0 0.0
    %731 = vmatpush1.xpose.msra.mxu0 0.0
    %732 = vmatprep.subr.mxu0 0.0
    %733 = vmatpush1.xpose.msra.mxu0 0.0
    %734 = vmatprep.subr.mxu0 0.0
    %735 = vmatpush1.xpose.msra.mxu0 0.0
    %736 = vmatprep.subr.mxu0 %v199
    %737 = vmatpush1.xpose.msra.mxu0 %v103
    %738 = vmatprep.subr.mxu0 0.0
    %739 = vmatpush2.xpose.msra.mxu0 0.0
    %740 = vmatprep.subr.mxu0 0.0
    %741 = vmatpush2.xpose.msra.mxu0 0.0
    %742 = vmatprep.subr.mxu0 0.0
    %743 = vmatpush2.xpose.msra.mxu0 0.0
    %744 = vmatprep.subr.mxu0 0.0
    %745 = vmatpush2.xpose.msra.mxu0 0.0
    %746 = vmatprep.subr.mxu0 0.0
    %747 = vmatpush2.xpose.msra.mxu0 0.0
    %748 = vmatprep.subr.mxu0 0.0
    %749 = vmatpush2.xpose.msra.mxu0 0.0
    %750 = vmatprep.subr.mxu0 0.0
    %751 = vmatpush2.xpose.msra.mxu0 0.0
    %752 = vmatprep.subr.mxu0 0.0
    %753 = vmatpush2.xpose.msra.mxu0 0.0
    %754 = vmatprep.subr.mxu0 0.0
    %755 = vmatpush2.xpose.msra.mxu0 0.0
    %756 = vmatprep.subr.mxu0 0.0
    %757 = vmatpush2.xpose.msra.mxu0 0.0
    %758 = vmatprep.subr.mxu0 0.0
    %759 = vmatpush2.xpose.msra.mxu0 0.0
    %760 = vmatprep.subr.mxu0 0.0
    %761 = vmatpush2.xpose.msra.mxu0 0.0
    %762 = vmatprep.subr.mxu0 0.0
    %763 = vmatpush2.xpose.msra.mxu0 0.0
    %764 = vmatprep.subr.mxu0 0.0
    %765 = vmatpush2.xpose.msra.mxu0 0.0
    %766 = vmatprep.subr.mxu0 0.0
    %767 = vmatpush2.xpose.msra.mxu0 0.0
    %768 = vmatprep.subr.mxu0 0.0
    %769 = vmatpush2.xpose.msra.mxu0 0.0
    %770 = vmatprep.mubr.f32.mxu0 %v147
    %771 = vmatmul.mubr.f32.gmra.mxu0 %v146
    %v772 = vpop.f32.mrf.mxu0
    %v773 = vadd.f32 %v703, %v772
    %v774 = vpop.f32.mrf.mxu0
    %775 = vdwg.mxu0
    %776 = vmatprep.subr.mxu0 0.0
    %777 = vmatpush1.xpose.msra.mxu0 0.0
    %778 = vmatprep.subr.mxu0 0.0
    %779 = vmatpush1.xpose.msra.mxu0 0.0
    %780 = vmatprep.subr.mxu0 0.0
    %781 = vmatpush1.xpose.msra.mxu0 0.0
    %782 = vmatprep.subr.mxu0 0.0
    %783 = vmatpush1.xpose.msra.mxu0 0.0
    %784 = vmatprep.subr.mxu0 0.0
    %785 = vmatpush1.xpose.msra.mxu0 0.0
    %786 = vmatprep.subr.mxu0 0.0
    %787 = vmatpush1.xpose.msra.mxu0 0.0
    %788 = vmatprep.subr.mxu0 0.0
    %789 = vmatpush1.xpose.msra.mxu0 0.0
    %790 = vmatprep.subr.mxu0 0.0
    %791 = vmatpush1.xpose.msra.mxu0 0.0
    %792 = vmatprep.subr.mxu0 0.0
    %793 = vmatpush1.xpose.msra.mxu0 0.0
    %794 = vmatprep.subr.mxu0 0.0
    %795 = vmatpush1.xpose.msra.mxu0 0.0
    %796 = vmatprep.subr.mxu0 0.0
    %797 = vmatpush1.xpose.msra.mxu0 0.0
    %798 = vmatprep.subr.mxu0 0.0
    %799 = vmatpush1.xpose.msra.mxu0 0.0
    %800 = vmatprep.subr.mxu0 0.0
    %801 = vmatpush1.xpose.msra.mxu0 0.0
    %802 = vmatprep.subr.mxu0 0.0
    %803 = vmatpush1.xpose.msra.mxu0 0.0
    %804 = vmatprep.subr.mxu0 0.0
    %805 = vmatpush1.xpose.msra.mxu0 0.0
    %806 = vmatprep.subr.mxu0 %v200
    %807 = vmatpush1.xpose.msra.mxu0 %v104
    %808 = vmatprep.subr.mxu0 0.0
    %809 = vmatpush2.xpose.msra.mxu0 0.0
    %810 = vmatprep.subr.mxu0 0.0
    %811 = vmatpush2.xpose.msra.mxu0 0.0
    %812 = vmatprep.subr.mxu0 0.0
    %813 = vmatpush2.xpose.msra.mxu0 0.0
    %814 = vmatprep.subr.mxu0 0.0
    %815 = vmatpush2.xpose.msra.mxu0 0.0
    %816 = vmatprep.subr.mxu0 0.0
    %817 = vmatpush2.xpose.msra.mxu0 0.0
    %818 = vmatprep.subr.mxu0 0.0
    %819 = vmatpush2.xpose.msra.mxu0 0.0
    %820 = vmatprep.subr.mxu0 0.0
    %821 = vmatpush2.xpose.msra.mxu0 0.0
    %822 = vmatprep.subr.mxu0 0.0
    %823 = vmatpush2.xpose.msra.mxu0 0.0
    %824 = vmatprep.subr.mxu0 0.0
    %825 = vmatpush2.xpose.msra.mxu0 0.0
    %826 = vmatprep.subr.mxu0 0.0
    %827 = vmatpush2.xpose.msra.mxu0 0.0
    %828 = vmatprep.subr.mxu0 0.0
    %829 = vmatpush2.xpose.msra.mxu0 0.0
    %830 = vmatprep.subr.mxu0 0.0
    %831 = vmatpush2.xpose.msra.mxu0 0.0
    %832 = vmatprep.subr.mxu0 0.0
    %833 = vmatpush2.xpose.msra.mxu0 0.0
    %834 = vmatprep.subr.mxu0 0.0
    %835 = vmatpush2.xpose.msra.mxu0 0.0
    %836 = vmatprep.subr.mxu0 0.0
    %837 = vmatpush2.xpose.msra.mxu0 0.0
    %838 = vmatprep.subr.mxu0 0.0
    %839 = vmatpush2.xpose.msra.mxu0 0.0
    %840 = vmatprep.mubr.f32.mxu0 %v149
    %841 = vmatmul.mubr.f32.gmra.mxu0 %v148
    %v842 = vpop.f32.mrf.mxu0
    %v843 = vadd.f32 %v773, %v842
    %v844 = vpop.f32.mrf.mxu0
    %845 = vdwg.mxu0
    %846 = vmatprep.subr.mxu0 0.0
    %847 = vmatpush1.xpose.msra.mxu0 0.0
    %848 = vmatprep.subr.mxu0 0.0
    %849 = vmatpush1.xpose.msra.mxu0 0.0
    %850 = vmatprep.subr.mxu0 0.0
    %851 = vmatpush1.xpose.msra.mxu0 0.0
    %852 = vmatprep.subr.mxu0 0.0
    %853 = vmatpush1.xpose.msra.mxu0 0.0
    %854 = vmatprep.subr.mxu0 0.0
    %855 = vmatpush1.xpose.msra.mxu0 0.0
    %856 = vmatprep.subr.mxu0 0.0
    %857 = vmatpush1.xpose.msra.mxu0 0.0
    %858 = vmatprep.subr.mxu0 0.0
    %859 = vmatpush1.xpose.msra.mxu0 0.0
    %860 = vmatprep.subr.mxu0 0.0
    %861 = vmatpush1.xpose.msra.mxu0 0.0
    %862 = vmatprep.subr.mxu0 0.0
    %863 = vmatpush1.xpose.msra.mxu0 0.0
    %864 = vmatprep.subr.mxu0 0.0
    %865 = vmatpush1.xpose.msra.mxu0 0.0
    %866 = vmatprep.subr.mxu0 0.0
    %867 = vmatpush1.xpose.msra.mxu0 0.0
    %868 = vmatprep.subr.mxu0 0.0
    %869 = vmatpush1.xpose.msra.mxu0 0.0
    %870 = vmatprep.subr.mxu0 0.0
    %871 = vmatpush1.xpose.msra.mxu0 0.0
    %872 = vmatprep.subr.mxu0 0.0
    %873 = vmatpush1.xpose.msra.mxu0 0.0
    %874 = vmatprep.subr.mxu0 0.0
    %875 = vmatpush1.xpose.msra.mxu0 0.0
    %876 = vmatprep.subr.mxu0 %v201
    %877 = vmatpush1.xpose.msra.mxu0 %v105
    %878 = vmatprep.subr.mxu0 0.0
    %879 = vmatpush2.xpose.msra.mxu0 0.0
    %880 = vmatprep.subr.mxu0 0.0
    %881 = vmatpush2.xpose.msra.mxu0 0.0
    %882 = vmatprep.subr.mxu0 0.0
    %883 = vmatpush2.xpose.msra.mxu0 0.0
    %884 = vmatprep.subr.mxu0 0.0
    %885 = vmatpush2.xpose.msra.mxu0 0.0
    %886 = vmatprep.subr.mxu0 0.0
    %887 = vmatpush2.xpose.msra.mxu0 0.0
    %888 = vmatprep.subr.mxu0 0.0
    %889 = vmatpush2.xpose.msra.mxu0 0.0
    %890 = vmatprep.subr.mxu0 0.0
    %891 = vmatpush2.xpose.msra.mxu0 0.0
    %892 = vmatprep.subr.mxu0 0.0
    %893 = vmatpush2.xpose.msra.mxu0 0.0
    %894 = vmatprep.subr.mxu0 0.0
    %895 = vmatpush2.xpose.msra.mxu0 0.0
    %896 = vmatprep.subr.mxu0 0.0
    %897 = vmatpush2.xpose.msra.mxu0 0.0
    %898 = vmatprep.subr.mxu0 0.0
    %899 = vmatpush2.xpose.msra.mxu0 0.0
    %900 = vmatprep.subr.mxu0 0.0
    %901 = vmatpush2.xpose.msra.mxu0 0.0
    %902 = vmatprep.subr.mxu0 0.0
    %903 = vmatpush2.xpose.msra.mxu0 0.0
    %904 = vmatprep.subr.mxu0 0.0
    %905 = vmatpush2.xpose.msra.mxu0 0.0
    %906 = vmatprep.subr.mxu0 0.0
    %907 = vmatpush2.xpose.msra.mxu0 0.0
    %908 = vmatprep.subr.mxu0 0.0
    %909 = vmatpush2.xpose.msra.mxu0 0.0
    %910 = vmatprep.mubr.f32.mxu0 %v151
    %911 = vmatmul.mubr.f32.gmra.mxu0 %v150
    %v912 = vpop.f32.mrf.mxu0
    %v913 = vadd.f32 %v843, %v912
    %v914 = vpop.f32.mrf.mxu0
    %915 = vdwg.mxu0
    %916 = vmatprep.subr.mxu0 0.0
    %917 = vmatpush1.xpose.msra.mxu0 0.0
    %918 = vmatprep.subr.mxu0 0.0
    %919 = vmatpush1.xpose.msra.mxu0 0.0
    %920 = vmatprep.subr.mxu0 0.0
    %921 = vmatpush1.xpose.msra.mxu0 0.0
    %922 = vmatprep.subr.mxu0 0.0
    %923 = vmatpush1.xpose.msra.mxu0 0.0
    %924 = vmatprep.subr.mxu0 0.0
    %925 = vmatpush1.xpose.msra.mxu0 0.0
    %926 = vmatprep.subr.mxu0 0.0
    %927 = vmatpush1.xpose.msra.mxu0 0.0
    %928 = vmatprep.subr.mxu0 0.0
    %929 = vmatpush1.xpose.msra.mxu0 0.0
    %930 = vmatprep.subr.mxu0 0.0
    %931 = vmatpush1.xpose.msra.mxu0 0.0
    %932 = vmatprep.subr.mxu0 0.0
    %933 = vmatpush1.xpose.msra.mxu0 0.0
    %934 = vmatprep.subr.mxu0 0.0
    %935 = vmatpush1.xpose.msra.mxu0 0.0
    %936 = vmatprep.subr.mxu0 0.0
    %937 = vmatpush1.xpose.msra.mxu0 0.0
    %938 = vmatprep.subr.mxu0 0.0
    %939 = vmatpush1.xpose.msra.mxu0 0.0
    %940 = vmatprep.subr.mxu0 0.0
    %941 = vmatpush1.xpose.msra.mxu0 0.0
    %942 = vmatprep.subr.mxu0 0.0
    %943 = vmatpush1.xpose.msra.mxu0 0.0
    %944 = vmatprep.subr.mxu0 0.0
    %945 = vmatpush1.xpose.msra.mxu0 0.0
    %946 = vmatprep.subr.mxu0 %v202
    %947 = vmatpush1.xpose.msra.mxu0 %v106
    %948 = vmatprep.subr.mxu0 0.0
    %949 = vmatpush2.xpose.msra.mxu0 0.0
    %950 = vmatprep.subr.mxu0 0.0
    %951 = vmatpush2.xpose.msra.mxu0 0.0
    %952 = vmatprep.subr.mxu0 0.0
    %953 = vmatpush2.xpose.msra.mxu0 0.0
    %954 = vmatprep.subr.mxu0 0.0
    %955 = vmatpush2.xpose.msra.mxu0 0.0
    %956 = vmatprep.subr.mxu0 0.0
    %957 = vmatpush2.xpose.msra.mxu0 0.0
    %958 = vmatprep.subr.mxu0 0.0
    %959 = vmatpush2.xpose.msra.mxu0 0.0
    %960 = vmatprep.subr.mxu0 0.0
    %961 = vmatpush2.xpose.msra.mxu0 0.0
    %962 = vmatprep.subr.mxu0 0.0
    %963 = vmatpush2.xpose.msra.mxu0 0.0
    %964 = vmatprep.subr.mxu0 0.0
    %965 = vmatpush2.xpose.msra.mxu0 0.0
    %966 = vmatprep.subr.mxu0 0.0
    %967 = vmatpush2.xpose.msra.mxu0 0.0
    %968 = vmatprep.subr.mxu0 0.0
    %969 = vmatpush2.xpose.msra.mxu0 0.0
    %970 = vmatprep.subr.mxu0 0.0
    %971 = vmatpush2.xpose.msra.mxu0 0.0
    %972 = vmatprep.subr.mxu0 0.0
    %973 = vmatpush2.xpose.msra.mxu0 0.0
    %974 = vmatprep.subr.mxu0 0.0
    %975 = vmatpush2.xpose.msra.mxu0 0.0
    %976 = vmatprep.subr.mxu0 0.0
    %977 = vmatpush2.xpose.msra.mxu0 0.0
    %978 = vmatprep.subr.mxu0 0.0
    %979 = vmatpush2.xpose.msra.mxu0 0.0
    %980 = vmatprep.mubr.f32.mxu0 %v153
    %981 = vmatmul.mubr.f32.gmra.mxu0 %v152
    %v982 = vpop.f32.mrf.mxu0
    %v983 = vadd.f32 %v913, %v982
    %v984 = vpop.f32.mrf.mxu0
    %985 = vdwg.mxu0
    %986 = vmatprep.subr.mxu0 0.0
    %987 = vmatpush1.xpose.msra.mxu0 0.0
    %988 = vmatprep.subr.mxu0 0.0
    %989 = vmatpush1.xpose.msra.mxu0 0.0
    %990 = vmatprep.subr.mxu0 0.0
    %991 = vmatpush1.xpose.msra.mxu0 0.0
    %992 = vmatprep.subr.mxu0 0.0
    %993 = vmatpush1.xpose.msra.mxu0 0.0
    %994 = vmatprep.subr.mxu0 0.0
    %995 = vmatpush1.xpose.msra.mxu0 0.0
    %996 = vmatprep.subr.mxu0 0.0
    %997 = vmatpush1.xpose.msra.mxu0 0.0
    %998 = vmatprep.subr.mxu0 0.0
    %999 = vmatpush1.xpose.msra.mxu0 0.0
    %1000 = vmatprep.subr.mxu0 0.0
    %1001 = vmatpush1.xpose.msra.mxu0 0.0
    %1002 = vmatprep.subr.mxu0 0.0
    %1003 = vmatpush1.xpose.msra.mxu0 0.0
    %1004 = vmatprep.subr.mxu0 0.0
    %1005 = vmatpush1.xpose.msra.mxu0 0.0
    %1006 = vmatprep.subr.mxu0 0.0
    %1007 = vmatpush1.xpose.msra.mxu0 0.0
    %1008 = vmatprep.subr.mxu0 0.0
    %1009 = vmatpush1.xpose.msra.mxu0 0.0
    %1010 = vmatprep.subr.mxu0 0.0
    %1011 = vmatpush1.xpose.msra.mxu0 0.0
    %1012 = vmatprep.subr.mxu0 0.0
    %1013 = vmatpush1.xpose.msra.mxu0 0.0
    %1014 = vmatprep.subr.mxu0 0.0
    %1015 = vmatpush1.xpose.msra.mxu0 0.0
    %1016 = vmatprep.subr.mxu0 %v203
    %1017 = vmatpush1.xpose.msra.mxu0 %v107
    %1018 = vmatprep.subr.mxu0 0.0
    %1019 = vmatpush2.xpose.msra.mxu0 0.0
    %1020 = vmatprep.subr.mxu0 0.0
    %1021 = vmatpush2.xpose.msra.mxu0 0.0
    %1022 = vmatprep.subr.mxu0 0.0
    %1023 = vmatpush2.xpose.msra.mxu0 0.0
    %1024 = vmatprep.subr.mxu0 0.0
    %1025 = vmatpush2.xpose.msra.mxu0 0.0
    %1026 = vmatprep.subr.mxu0 0.0
    %1027 = vmatpush2.xpose.msra.mxu0 0.0
    %1028 = vmatprep.subr.mxu0 0.0
    %1029 = vmatpush2.xpose.msra.mxu0 0.0
    %1030 = vmatprep.subr.mxu0 0.0
    %1031 = vmatpush2.xpose.msra.mxu0 0.0
    %1032 = vmatprep.subr.mxu0 0.0
    %1033 = vmatpush2.xpose.msra.mxu0 0.0
    %1034 = vmatprep.subr.mxu0 0.0
    %1035 = vmatpush2.xpose.msra.mxu0 0.0
    %1036 = vmatprep.subr.mxu0 0.0
    %1037 = vmatpush2.xpose.msra.mxu0 0.0
    %1038 = vmatprep.subr.mxu0 0.0
    %1039 = vmatpush2.xpose.msra.mxu0 0.0
    %1040 = vmatprep.subr.mxu0 0.0
    %1041 = vmatpush2.xpose.msra.mxu0 0.0
    %1042 = vmatprep.subr.mxu0 0.0
    %1043 = vmatpush2.xpose.msra.mxu0 0.0
    %1044 = vmatprep.subr.mxu0 0.0
    %1045 = vmatpush2.xpose.msra.mxu0 0.0
    %1046 = vmatprep.subr.mxu0 0.0
    %1047 = vmatpush2.xpose.msra.mxu0 0.0
    %1048 = vmatprep.subr.mxu0 0.0
    %1049 = vmatpush2.xpose.msra.mxu0 0.0
    %1050 = vmatprep.mubr.f32.mxu0 %v155
    %1051 = vmatmul.mubr.f32.gmra.mxu0 %v154
    %v1052 = vpop.f32.mrf.mxu0
    %v1053 = vadd.f32 %v983, %v1052
    %v1054 = vpop.f32.mrf.mxu0
    %1055 = vdwg.mxu0
    %v1068 = vcombine.high %v59, %v59
    %v1069 = vcombine.high %v60, %v60
    %v1070 = vcombine.high %v61, %v61
    %v1071 = vcombine.high %v62, %v62
    %v1072 = vcombine.high %v63, %v63
    %v1073 = vcombine.high %v64, %v64
    %v1074 = vcombine.high %v65, %v65
    %v1075 = vcombine.high %v66, %v66
    %v1076 = vcombine.high %v67, %v67
    %v1077 = vcombine.high %v68, %v68
    %v1078 = vcombine.high %v69, %v69
    %v1079 = vcombine.high %v70, %v70
    %1092 = vmatprep.subr.mxu0 0.0
    %1093 = vmatpush1.xpose.msra.mxu0 0.0
    %1094 = vmatprep.subr.mxu0 0.0
    %1095 = vmatpush1.xpose.msra.mxu0 0.0
    %1096 = vmatprep.subr.mxu0 0.0
    %1097 = vmatpush1.xpose.msra.mxu0 0.0
    %1098 = vmatprep.subr.mxu0 0.0
    %1099 = vmatpush1.xpose.msra.mxu0 0.0
    %1100 = vmatprep.subr.mxu0 0.0
    %1101 = vmatpush1.xpose.msra.mxu0 0.0
    %1102 = vmatprep.subr.mxu0 0.0
    %1103 = vmatpush1.xpose.msra.mxu0 0.0
    %1104 = vmatprep.subr.mxu0 0.0
    %1105 = vmatpush1.xpose.msra.mxu0 0.0
    %1106 = vmatprep.subr.mxu0 0.0
    %1107 = vmatpush1.xpose.msra.mxu0 0.0
    %1108 = vmatprep.subr.mxu0 0.0
    %1109 = vmatpush1.xpose.msra.mxu0 0.0
    %1110 = vmatprep.subr.mxu0 0.0
    %1111 = vmatpush1.xpose.msra.mxu0 0.0
    %1112 = vmatprep.subr.mxu0 0.0
    %1113 = vmatpush1.xpose.msra.mxu0 0.0
    %1114 = vmatprep.subr.mxu0 0.0
    %1115 = vmatpush1.xpose.msra.mxu0 0.0
    %1116 = vmatprep.subr.mxu0 0.0
    %1117 = vmatpush1.xpose.msra.mxu0 0.0
    %1118 = vmatprep.subr.mxu0 0.0
    %1119 = vmatpush1.xpose.msra.mxu0 0.0
    %1120 = vmatprep.subr.mxu0 0.0
    %1121 = vmatpush1.xpose.msra.mxu0 0.0
    %1122 = vmatprep.subr.mxu0 %v1068
    %1123 = vmatpush1.xpose.msra.mxu0 %v59
    %1124 = vmatprep.subr.mxu0 0.0
    %1125 = vmatpush2.xpose.msra.mxu0 0.0
    %1126 = vmatprep.subr.mxu0 0.0
    %1127 = vmatpush2.xpose.msra.mxu0 0.0
    %1128 = vmatprep.subr.mxu0 0.0
    %1129 = vmatpush2.xpose.msra.mxu0 0.0
    %1130 = vmatprep.subr.mxu0 0.0
    %1131 = vmatpush2.xpose.msra.mxu0 0.0
    %1132 = vmatprep.subr.mxu0 0.0
    %1133 = vmatpush2.xpose.msra.mxu0 0.0
    %1134 = vmatprep.subr.mxu0 0.0
    %1135 = vmatpush2.xpose.msra.mxu0 0.0
    %1136 = vmatprep.subr.mxu0 0.0
    %1137 = vmatpush2.xpose.msra.mxu0 0.0
    %1138 = vmatprep.subr.mxu0 0.0
    %1139 = vmatpush2.xpose.msra.mxu0 0.0
    %1140 = vmatprep.subr.mxu0 0.0
    %1141 = vmatpush2.xpose.msra.mxu0 0.0
    %1142 = vmatprep.subr.mxu0 0.0
    %1143 = vmatpush2.xpose.msra.mxu0 0.0
    %1144 = vmatprep.subr.mxu0 0.0
    %1145 = vmatpush2.xpose.msra.mxu0 0.0
    %1146 = vmatprep.subr.mxu0 0.0
    %1147 = vmatpush2.xpose.msra.mxu0 0.0
    %1148 = vmatprep.subr.mxu0 0.0
    %1149 = vmatpush2.xpose.msra.mxu0 0.0
    %1150 = vmatprep.subr.mxu0 0.0
    %1151 = vmatpush2.xpose.msra.mxu0 0.0
    %1152 = vmatprep.subr.mxu0 0.0
    %1153 = vmatpush2.xpose.msra.mxu0 0.0
    %1154 = vmatprep.subr.mxu0 0.0
    %1155 = vmatpush2.xpose.msra.mxu0 0.0
    %1156 = vmatprep.mubr.f32.mxu0 %v36
    %1157 = vmatmul.mubr.f32.gmra.mxu0 %v35
    %v1158 = vpop.f32.mrf.mxu0
    %v1159 = vadd.f32 %v1053, %v1158
    %v1160 = vpop.f32.mrf.mxu0
    %1161 = vdwg.mxu0
    %1162 = vmatprep.subr.mxu0 0.0
    %1163 = vmatpush1.xpose.msra.mxu0 0.0
    %1164 = vmatprep.subr.mxu0 0.0
    %1165 = vmatpush1.xpose.msra.mxu0 0.0
    %1166 = vmatprep.subr.mxu0 0.0
    %1167 = vmatpush1.xpose.msra.mxu0 0.0
    %1168 = vmatprep.subr.mxu0 0.0
    %1169 = vmatpush1.xpose.msra.mxu0 0.0
    %1170 = vmatprep.subr.mxu0 0.0
    %1171 = vmatpush1.xpose.msra.mxu0 0.0
    %1172 = vmatprep.subr.mxu0 0.0
    %1173 = vmatpush1.xpose.msra.mxu0 0.0
    %1174 = vmatprep.subr.mxu0 0.0
    %1175 = vmatpush1.xpose.msra.mxu0 0.0
    %1176 = vmatprep.subr.mxu0 0.0
    %1177 = vmatpush1.xpose.msra.mxu0 0.0
    %1178 = vmatprep.subr.mxu0 0.0
    %1179 = vmatpush1.xpose.msra.mxu0 0.0
    %1180 = vmatprep.subr.mxu0 0.0
    %1181 = vmatpush1.xpose.msra.mxu0 0.0
    %1182 = vmatprep.subr.mxu0 0.0
    %1183 = vmatpush1.xpose.msra.mxu0 0.0
    %1184 = vmatprep.subr.mxu0 0.0
    %1185 = vmatpush1.xpose.msra.mxu0 0.0
    %1186 = vmatprep.subr.mxu0 0.0
    %1187 = vmatpush1.xpose.msra.mxu0 0.0
    %1188 = vmatprep.subr.mxu0 0.0
    %1189 = vmatpush1.xpose.msra.mxu0 0.0
    %1190 = vmatprep.subr.mxu0 0.0
    %1191 = vmatpush1.xpose.msra.mxu0 0.0
    %1192 = vmatprep.subr.mxu0 %v1069
    %1193 = vmatpush1.xpose.msra.mxu0 %v60
    %1194 = vmatprep.subr.mxu0 0.0
    %1195 = vmatpush2.xpose.msra.mxu0 0.0
    %1196 = vmatprep.subr.mxu0 0.0
    %1197 = vmatpush2.xpose.msra.mxu0 0.0
    %1198 = vmatprep.subr.mxu0 0.0
    %1199 = vmatpush2.xpose.msra.mxu0 0.0
    %1200 = vmatprep.subr.mxu0 0.0
    %1201 = vmatpush2.xpose.msra.mxu0 0.0
    %1202 = vmatprep.subr.mxu0 0.0
    %1203 = vmatpush2.xpose.msra.mxu0 0.0
    %1204 = vmatprep.subr.mxu0 0.0
    %1205 = vmatpush2.xpose.msra.mxu0 0.0
    %1206 = vmatprep.subr.mxu0 0.0
    %1207 = vmatpush2.xpose.msra.mxu0 0.0
    %1208 = vmatprep.subr.mxu0 0.0
    %1209 = vmatpush2.xpose.msra.mxu0 0.0
    %1210 = vmatprep.subr.mxu0 0.0
    %1211 = vmatpush2.xpose.msra.mxu0 0.0
    %1212 = vmatprep.subr.mxu0 0.0
    %1213 = vmatpush2.xpose.msra.mxu0 0.0
    %1214 = vmatprep.subr.mxu0 0.0
    %1215 = vmatpush2.xpose.msra.mxu0 0.0
    %1216 = vmatprep.subr.mxu0 0.0
    %1217 = vmatpush2.xpose.msra.mxu0 0.0
    %1218 = vmatprep.subr.mxu0 0.0
    %1219 = vmatpush2.xpose.msra.mxu0 0.0
    %1220 = vmatprep.subr.mxu0 0.0
    %1221 = vmatpush2.xpose.msra.mxu0 0.0
    %1222 = vmatprep.subr.mxu0 0.0
    %1223 = vmatpush2.xpose.msra.mxu0 0.0
    %1224 = vmatprep.subr.mxu0 0.0
    %1225 = vmatpush2.xpose.msra.mxu0 0.0
    %1226 = vmatprep.mubr.f32.mxu0 %v38
    %1227 = vmatmul.mubr.f32.gmra.mxu0 %v37
    %v1228 = vpop.f32.mrf.mxu0
    %v1229 = vadd.f32 %v1159, %v1228
    %v1230 = vpop.f32.mrf.mxu0
    %1231 = vdwg.mxu0
    %1232 = vmatprep.subr.mxu0 0.0
    %1233 = vmatpush1.xpose.msra.mxu0 0.0
    %1234 = vmatprep.subr.mxu0 0.0
    %1235 = vmatpush1.xpose.msra.mxu0 0.0
    %1236 = vmatprep.subr.mxu0 0.0
    %1237 = vmatpush1.xpose.msra.mxu0 0.0
    %1238 = vmatprep.subr.mxu0 0.0
    %1239 = vmatpush1.xpose.msra.mxu0 0.0
    %1240 = vmatprep.subr.mxu0 0.0
    %1241 = vmatpush1.xpose.msra.mxu0 0.0
    %1242 = vmatprep.subr.mxu0 0.0
    %1243 = vmatpush1.xpose.msra.mxu0 0.0
    %1244 = vmatprep.subr.mxu0 0.0
    %1245 = vmatpush1.xpose.msra.mxu0 0.0
    %1246 = vmatprep.subr.mxu0 0.0
    %1247 = vmatpush1.xpose.msra.mxu0 0.0
    %1248 = vmatprep.subr.mxu0 0.0
    %1249 = vmatpush1.xpose.msra.mxu0 0.0
    %1250 = vmatprep.subr.mxu0 0.0
    %1251 = vmatpush1.xpose.msra.mxu0 0.0
    %1252 = vmatprep.subr.mxu0 0.0
    %1253 = vmatpush1.xpose.msra.mxu0 0.0
    %1254 = vmatprep.subr.mxu0 0.0
    %1255 = vmatpush1.xpose.msra.mxu0 0.0
    %1256 = vmatprep.subr.mxu0 0.0
    %1257 = vmatpush1.xpose.msra.mxu0 0.0
    %1258 = vmatprep.subr.mxu0 0.0
    %1259 = vmatpush1.xpose.msra.mxu0 0.0
    %1260 = vmatprep.subr.mxu0 0.0
    %1261 = vmatpush1.xpose.msra.mxu0 0.0
    %1262 = vmatprep.subr.mxu0 %v1070
    %1263 = vmatpush1.xpose.msra.mxu0 %v61
    %1264 = vmatprep.subr.mxu0 0.0
    %1265 = vmatpush2.xpose.msra.mxu0 0.0
    %1266 = vmatprep.subr.mxu0 0.0
    %1267 = vmatpush2.xpose.msra.mxu0 0.0
    %1268 = vmatprep.subr.mxu0 0.0
    %1269 = vmatpush2.xpose.msra.mxu0 0.0
    %1270 = vmatprep.subr.mxu0 0.0
    %1271 = vmatpush2.xpose.msra.mxu0 0.0
    %1272 = vmatprep.subr.mxu0 0.0
    %1273 = vmatpush2.xpose.msra.mxu0 0.0
    %1274 = vmatprep.subr.mxu0 0.0
    %1275 = vmatpush2.xpose.msra.mxu0 0.0
    %1276 = vmatprep.subr.mxu0 0.0
    %1277 = vmatpush2.xpose.msra.mxu0 0.0
    %1278 = vmatprep.subr.mxu0 0.0
    %1279 = vmatpush2.xpose.msra.mxu0 0.0
    %1280 = vmatprep.subr.mxu0 0.0
    %1281 = vmatpush2.xpose.msra.mxu0 0.0
    %1282 = vmatprep.subr.mxu0 0.0
    %1283 = vmatpush2.xpose.msra.mxu0 0.0
    %1284 = vmatprep.subr.mxu0 0.0
    %1285 = vmatpush2.xpose.msra.mxu0 0.0
    %1286 = vmatprep.subr.mxu0 0.0
    %1287 = vmatpush2.xpose.msra.mxu0 0.0
    %1288 = vmatprep.subr.mxu0 0.0
    %1289 = vmatpush2.xpose.msra.mxu0 0.0
    %1290 = vmatprep.subr.mxu0 0.0
    %1291 = vmatpush2.xpose.msra.mxu0 0.0
    %1292 = vmatprep.subr.mxu0 0.0
    %1293 = vmatpush2.xpose.msra.mxu0 0.0
    %1294 = vmatprep.subr.mxu0 0.0
    %1295 = vmatpush2.xpose.msra.mxu0 0.0
    %1296 = vmatprep.mubr.f32.mxu0 %v40
    %1297 = vmatmul.mubr.f32.gmra.mxu0 %v39
    %v1298 = vpop.f32.mrf.mxu0
    %v1299 = vadd.f32 %v1229, %v1298
    %v1300 = vpop.f32.mrf.mxu0
    %1301 = vdwg.mxu0
    %1302 = vmatprep.subr.mxu0 0.0
    %1303 = vmatpush1.xpose.msra.mxu0 0.0
    %1304 = vmatprep.subr.mxu0 0.0
    %1305 = vmatpush1.xpose.msra.mxu0 0.0
    %1306 = vmatprep.subr.mxu0 0.0
    %1307 = vmatpush1.xpose.msra.mxu0 0.0
    %1308 = vmatprep.subr.mxu0 0.0
    %1309 = vmatpush1.xpose.msra.mxu0 0.0
    %1310 = vmatprep.subr.mxu0 0.0
    %1311 = vmatpush1.xpose.msra.mxu0 0.0
    %1312 = vmatprep.subr.mxu0 0.0
    %1313 = vmatpush1.xpose.msra.mxu0 0.0
    %1314 = vmatprep.subr.mxu0 0.0
    %1315 = vmatpush1.xpose.msra.mxu0 0.0
    %1316 = vmatprep.subr.mxu0 0.0
    %1317 = vmatpush1.xpose.msra.mxu0 0.0
    %1318 = vmatprep.subr.mxu0 0.0
    %1319 = vmatpush1.xpose.msra.mxu0 0.0
    %1320 = vmatprep.subr.mxu0 0.0
    %1321 = vmatpush1.xpose.msra.mxu0 0.0
    %1322 = vmatprep.subr.mxu0 0.0
    %1323 = vmatpush1.xpose.msra.mxu0 0.0
    %1324 = vmatprep.subr.mxu0 0.0
    %1325 = vmatpush1.xpose.msra.mxu0 0.0
    %1326 = vmatprep.subr.mxu0 0.0
    %1327 = vmatpush1.xpose.msra.mxu0 0.0
    %1328 = vmatprep.subr.mxu0 0.0
    %1329 = vmatpush1.xpose.msra.mxu0 0.0
    %1330 = vmatprep.subr.mxu0 0.0
    %1331 = vmatpush1.xpose.msra.mxu0 0.0
    %1332 = vmatprep.subr.mxu0 %v1071
    %1333 = vmatpush1.xpose.msra.mxu0 %v62
    %1334 = vmatprep.subr.mxu0 0.0
    %1335 = vmatpush2.xpose.msra.mxu0 0.0
    %1336 = vmatprep.subr.mxu0 0.0
    %1337 = vmatpush2.xpose.msra.mxu0 0.0
    %1338 = vmatprep.subr.mxu0 0.0
    %1339 = vmatpush2.xpose.msra.mxu0 0.0
    %1340 = vmatprep.subr.mxu0 0.0
    %1341 = vmatpush2.xpose.msra.mxu0 0.0
    %1342 = vmatprep.subr.mxu0 0.0
    %1343 = vmatpush2.xpose.msra.mxu0 0.0
    %1344 = vmatprep.subr.mxu0 0.0
    %1345 = vmatpush2.xpose.msra.mxu0 0.0
    %1346 = vmatprep.subr.mxu0 0.0
    %1347 = vmatpush2.xpose.msra.mxu0 0.0
    %1348 = vmatprep.subr.mxu0 0.0
    %1349 = vmatpush2.xpose.msra.mxu0 0.0
    %1350 = vmatprep.subr.mxu0 0.0
    %1351 = vmatpush2.xpose.msra.mxu0 0.0
    %1352 = vmatprep.subr.mxu0 0.0
    %1353 = vmatpush2.xpose.msra.mxu0 0.0
    %1354 = vmatprep.subr.mxu0 0.0
    %1355 = vmatpush2.xpose.msra.mxu0 0.0
    %1356 = vmatprep.subr.mxu0 0.0
    %1357 = vmatpush2.xpose.msra.mxu0 0.0
    %1358 = vmatprep.subr.mxu0 0.0
    %1359 = vmatpush2.xpose.msra.mxu0 0.0
    %1360 = vmatprep.subr.mxu0 0.0
    %1361 = vmatpush2.xpose.msra.mxu0 0.0
    %1362 = vmatprep.subr.mxu0 0.0
    %1363 = vmatpush2.xpose.msra.mxu0 0.0
    %1364 = vmatprep.subr.mxu0 0.0
    %1365 = vmatpush2.xpose.msra.mxu0 0.0
    %1366 = vmatprep.mubr.f32.mxu0 %v42
    %1367 = vmatmul.mubr.f32.gmra.mxu0 %v41
    %v1368 = vpop.f32.mrf.mxu0
    %v1369 = vadd.f32 %v1299, %v1368
    %v1370 = vpop.f32.mrf.mxu0
    %1371 = vdwg.mxu0
    %1372 = vmatprep.subr.mxu0 0.0
    %1373 = vmatpush1.xpose.msra.mxu0 0.0
    %1374 = vmatprep.subr.mxu0 0.0
    %1375 = vmatpush1.xpose.msra.mxu0 0.0
    %1376 = vmatprep.subr.mxu0 0.0
    %1377 = vmatpush1.xpose.msra.mxu0 0.0
    %1378 = vmatprep.subr.mxu0 0.0
    %1379 = vmatpush1.xpose.msra.mxu0 0.0
    %1380 = vmatprep.subr.mxu0 0.0
    %1381 = vmatpush1.xpose.msra.mxu0 0.0
    %1382 = vmatprep.subr.mxu0 0.0
    %1383 = vmatpush1.xpose.msra.mxu0 0.0
    %1384 = vmatprep.subr.mxu0 0.0
    %1385 = vmatpush1.xpose.msra.mxu0 0.0
    %1386 = vmatprep.subr.mxu0 0.0
    %1387 = vmatpush1.xpose.msra.mxu0 0.0
    %1388 = vmatprep.subr.mxu0 0.0
    %1389 = vmatpush1.xpose.msra.mxu0 0.0
    %1390 = vmatprep.subr.mxu0 0.0
    %1391 = vmatpush1.xpose.msra.mxu0 0.0
    %1392 = vmatprep.subr.mxu0 0.0
    %1393 = vmatpush1.xpose.msra.mxu0 0.0
    %1394 = vmatprep.subr.mxu0 0.0
    %1395 = vmatpush1.xpose.msra.mxu0 0.0
    %1396 = vmatprep.subr.mxu0 0.0
    %1397 = vmatpush1.xpose.msra.mxu0 0.0
    %1398 = vmatprep.subr.mxu0 0.0
    %1399 = vmatpush1.xpose.msra.mxu0 0.0
    %1400 = vmatprep.subr.mxu0 0.0
    %1401 = vmatpush1.xpose.msra.mxu0 0.0
    %1402 = vmatprep.subr.mxu0 %v1072
    %1403 = vmatpush1.xpose.msra.mxu0 %v63
    %1404 = vmatprep.subr.mxu0 0.0
    %1405 = vmatpush2.xpose.msra.mxu0 0.0
    %1406 = vmatprep.subr.mxu0 0.0
    %1407 = vmatpush2.xpose.msra.mxu0 0.0
    %1408 = vmatprep.subr.mxu0 0.0
    %1409 = vmatpush2.xpose.msra.mxu0 0.0
    %1410 = vmatprep.subr.mxu0 0.0
    %1411 = vmatpush2.xpose.msra.mxu0 0.0
    %1412 = vmatprep.subr.mxu0 0.0
    %1413 = vmatpush2.xpose.msra.mxu0 0.0
    %1414 = vmatprep.subr.mxu0 0.0
    %1415 = vmatpush2.xpose.msra.mxu0 0.0
    %1416 = vmatprep.subr.mxu0 0.0
    %1417 = vmatpush2.xpose.msra.mxu0 0.0
    %1418 = vmatprep.subr.mxu0 0.0
    %1419 = vmatpush2.xpose.msra.mxu0 0.0
    %1420 = vmatprep.subr.mxu0 0.0
    %1421 = vmatpush2.xpose.msra.mxu0 0.0
    %1422 = vmatprep.subr.mxu0 0.0
    %1423 = vmatpush2.xpose.msra.mxu0 0.0
    %1424 = vmatprep.subr.mxu0 0.0
    %1425 = vmatpush2.xpose.msra.mxu0 0.0
    %1426 = vmatprep.subr.mxu0 0.0
    %1427 = vmatpush2.xpose.msra.mxu0 0.0
    %1428 = vmatprep.subr.mxu0 0.0
    %1429 = vmatpush2.xpose.msra.mxu0 0.0
    %1430 = vmatprep.subr.mxu0 0.0
    %1431 = vmatpush2.xpose.msra.mxu0 0.0
    %1432 = vmatprep.subr.mxu0 0.0
    %1433 = vmatpush2.xpose.msra.mxu0 0.0
    %1434 = vmatprep.subr.mxu0 0.0
    %1435 = vmatpush2.xpose.msra.mxu0 0.0
    %1436 = vmatprep.mubr.f32.mxu0 %v44
    %1437 = vmatmul.mubr.f32.gmra.mxu0 %v43
    %v1438 = vpop.f32.mrf.mxu0
    %v1439 = vadd.f32 %v1369, %v1438
    %v1440 = vpop.f32.mrf.mxu0
    %1441 = vdwg.mxu0
    %1442 = vmatprep.subr.mxu0 0.0
    %1443 = vmatpush1.xpose.msra.mxu0 0.0
    %1444 = vmatprep.subr.mxu0 0.0
    %1445 = vmatpush1.xpose.msra.mxu0 0.0
    %1446 = vmatprep.subr.mxu0 0.0
    %1447 = vmatpush1.xpose.msra.mxu0 0.0
    %1448 = vmatprep.subr.mxu0 0.0
    %1449 = vmatpush1.xpose.msra.mxu0 0.0
    %1450 = vmatprep.subr.mxu0 0.0
    %1451 = vmatpush1.xpose.msra.mxu0 0.0
    %1452 = vmatprep.subr.mxu0 0.0
    %1453 = vmatpush1.xpose.msra.mxu0 0.0
    %1454 = vmatprep.subr.mxu0 0.0
    %1455 = vmatpush1.xpose.msra.mxu0 0.0
    %1456 = vmatprep.subr.mxu0 0.0
    %1457 = vmatpush1.xpose.msra.mxu0 0.0
    %1458 = vmatprep.subr.mxu0 0.0
    %1459 = vmatpush1.xpose.msra.mxu0 0.0
    %1460 = vmatprep.subr.mxu0 0.0
    %1461 = vmatpush1.xpose.msra.mxu0 0.0
    %1462 = vmatprep.subr.mxu0 0.0
    %1463 = vmatpush1.xpose.msra.mxu0 0.0
    %1464 = vmatprep.subr.mxu0 0.0
    %1465 = vmatpush1.xpose.msra.mxu0 0.0
    %1466 = vmatprep.subr.mxu0 0.0
    %1467 = vmatpush1.xpose.msra.mxu0 0.0
    %1468 = vmatprep.subr.mxu0 0.0
    %1469 = vmatpush1.xpose.msra.mxu0 0.0
    %1470 = vmatprep.subr.mxu0 0.0
    %1471 = vmatpush1.xpose.msra.mxu0 0.0
    %1472 = vmatprep.subr.mxu0 %v1073
    %1473 = vmatpush1.xpose.msra.mxu0 %v64
    %1474 = vmatprep.subr.mxu0 0.0
    %1475 = vmatpush2.xpose.msra.mxu0 0.0
    %1476 = vmatprep.subr.mxu0 0.0
    %1477 = vmatpush2.xpose.msra.mxu0 0.0
    %1478 = vmatprep.subr.mxu0 0.0
    %1479 = vmatpush2.xpose.msra.mxu0 0.0
    %1480 = vmatprep.subr.mxu0 0.0
    %1481 = vmatpush2.xpose.msra.mxu0 0.0
    %1482 = vmatprep.subr.mxu0 0.0
    %1483 = vmatpush2.xpose.msra.mxu0 0.0
    %1484 = vmatprep.subr.mxu0 0.0
    %1485 = vmatpush2.xpose.msra.mxu0 0.0
    %1486 = vmatprep.subr.mxu0 0.0
    %1487 = vmatpush2.xpose.msra.mxu0 0.0
    %1488 = vmatprep.subr.mxu0 0.0
    %1489 = vmatpush2.xpose.msra.mxu0 0.0
    %1490 = vmatprep.subr.mxu0 0.0
    %1491 = vmatpush2.xpose.msra.mxu0 0.0
    %1492 = vmatprep.subr.mxu0 0.0
    %1493 = vmatpush2.xpose.msra.mxu0 0.0
    %1494 = vmatprep.subr.mxu0 0.0
    %1495 = vmatpush2.xpose.msra.mxu0 0.0
    %1496 = vmatprep.subr.mxu0 0.0
    %1497 = vmatpush2.xpose.msra.mxu0 0.0
    %1498 = vmatprep.subr.mxu0 0.0
    %1499 = vmatpush2.xpose.msra.mxu0 0.0
    %1500 = vmatprep.subr.mxu0 0.0
    %1501 = vmatpush2.xpose.msra.mxu0 0.0
    %1502 = vmatprep.subr.mxu0 0.0
    %1503 = vmatpush2.xpose.msra.mxu0 0.0
    %1504 = vmatprep.subr.mxu0 0.0
    %1505 = vmatpush2.xpose.msra.mxu0 0.0
    %1506 = vmatprep.mubr.f32.mxu0 %v46
    %1507 = vmatmul.mubr.f32.gmra.mxu0 %v45
    %v1508 = vpop.f32.mrf.mxu0
    %v1509 = vadd.f32 %v1439, %v1508
    %v1510 = vpop.f32.mrf.mxu0
    %1511 = vdwg.mxu0
    %1512 = vmatprep.subr.mxu0 0.0
    %1513 = vmatpush1.xpose.msra.mxu0 0.0
    %1514 = vmatprep.subr.mxu0 0.0
    %1515 = vmatpush1.xpose.msra.mxu0 0.0
    %1516 = vmatprep.subr.mxu0 0.0
    %1517 = vmatpush1.xpose.msra.mxu0 0.0
    %1518 = vmatprep.subr.mxu0 0.0
    %1519 = vmatpush1.xpose.msra.mxu0 0.0
    %1520 = vmatprep.subr.mxu0 0.0
    %1521 = vmatpush1.xpose.msra.mxu0 0.0
    %1522 = vmatprep.subr.mxu0 0.0
    %1523 = vmatpush1.xpose.msra.mxu0 0.0
    %1524 = vmatprep.subr.mxu0 0.0
    %1525 = vmatpush1.xpose.msra.mxu0 0.0
    %1526 = vmatprep.subr.mxu0 0.0
    %1527 = vmatpush1.xpose.msra.mxu0 0.0
    %1528 = vmatprep.subr.mxu0 0.0
    %1529 = vmatpush1.xpose.msra.mxu0 0.0
    %1530 = vmatprep.subr.mxu0 0.0
    %1531 = vmatpush1.xpose.msra.mxu0 0.0
    %1532 = vmatprep.subr.mxu0 0.0
    %1533 = vmatpush1.xpose.msra.mxu0 0.0
    %1534 = vmatprep.subr.mxu0 0.0
    %1535 = vmatpush1.xpose.msra.mxu0 0.0
    %1536 = vmatprep.subr.mxu0 0.0
    %1537 = vmatpush1.xpose.msra.mxu0 0.0
    %1538 = vmatprep.subr.mxu0 0.0
    %1539 = vmatpush1.xpose.msra.mxu0 0.0
    %1540 = vmatprep.subr.mxu0 0.0
    %1541 = vmatpush1.xpose.msra.mxu0 0.0
    %1542 = vmatprep.subr.mxu0 %v1074
    %1543 = vmatpush1.xpose.msra.mxu0 %v65
    %1544 = vmatprep.subr.mxu0 0.0
    %1545 = vmatpush2.xpose.msra.mxu0 0.0
    %1546 = vmatprep.subr.mxu0 0.0
    %1547 = vmatpush2.xpose.msra.mxu0 0.0
    %1548 = vmatprep.subr.mxu0 0.0
    %1549 = vmatpush2.xpose.msra.mxu0 0.0
    %1550 = vmatprep.subr.mxu0 0.0
    %1551 = vmatpush2.xpose.msra.mxu0 0.0
    %1552 = vmatprep.subr.mxu0 0.0
    %1553 = vmatpush2.xpose.msra.mxu0 0.0
    %1554 = vmatprep.subr.mxu0 0.0
    %1555 = vmatpush2.xpose.msra.mxu0 0.0
    %1556 = vmatprep.subr.mxu0 0.0
    %1557 = vmatpush2.xpose.msra.mxu0 0.0
    %1558 = vmatprep.subr.mxu0 0.0
    %1559 = vmatpush2.xpose.msra.mxu0 0.0
    %1560 = vmatprep.subr.mxu0 0.0
    %1561 = vmatpush2.xpose.msra.mxu0 0.0
    %1562 = vmatprep.subr.mxu0 0.0
    %1563 = vmatpush2.xpose.msra.mxu0 0.0
    %1564 = vmatprep.subr.mxu0 0.0
    %1565 = vmatpush2.xpose.msra.mxu0 0.0
    %1566 = vmatprep.subr.mxu0 0.0
    %1567 = vmatpush2.xpose.msra.mxu0 0.0
    %1568 = vmatprep.subr.mxu0 0.0
    %1569 = vmatpush2.xpose.msra.mxu0 0.0
    %1570 = vmatprep.subr.mxu0 0.0
    %1571 = vmatpush2.xpose.msra.mxu0 0.0
    %1572 = vmatprep.subr.mxu0 0.0
    %1573 = vmatpush2.xpose.msra.mxu0 0.0
    %1574 = vmatprep.subr.mxu0 0.0
    %1575 = vmatpush2.xpose.msra.mxu0 0.0
    %1576 = vmatprep.mubr.f32.mxu0 %v48
    %1577 = vmatmul.mubr.f32.gmra.mxu0 %v47
    %v1578 = vpop.f32.mrf.mxu0
    %v1579 = vadd.f32 %v1509, %v1578
    %v1580 = vpop.f32.mrf.mxu0
    %1581 = vdwg.mxu0
    %1582 = vmatprep.subr.mxu0 0.0
    %1583 = vmatpush1.xpose.msra.mxu0 0.0
    %1584 = vmatprep.subr.mxu0 0.0
    %1585 = vmatpush1.xpose.msra.mxu0 0.0
    %1586 = vmatprep.subr.mxu0 0.0
    %1587 = vmatpush1.xpose.msra.mxu0 0.0
    %1588 = vmatprep.subr.mxu0 0.0
    %1589 = vmatpush1.xpose.msra.mxu0 0.0
    %1590 = vmatprep.subr.mxu0 0.0
    %1591 = vmatpush1.xpose.msra.mxu0 0.0
    %1592 = vmatprep.subr.mxu0 0.0
    %1593 = vmatpush1.xpose.msra.mxu0 0.0
    %1594 = vmatprep.subr.mxu0 0.0
    %1595 = vmatpush1.xpose.msra.mxu0 0.0
    %1596 = vmatprep.subr.mxu0 0.0
    %1597 = vmatpush1.xpose.msra.mxu0 0.0
    %1598 = vmatprep.subr.mxu0 0.0
    %1599 = vmatpush1.xpose.msra.mxu0 0.0
    %1600 = vmatprep.subr.mxu0 0.0
    %1601 = vmatpush1.xpose.msra.mxu0 0.0
    %1602 = vmatprep.subr.mxu0 0.0
    %1603 = vmatpush1.xpose.msra.mxu0 0.0
    %1604 = vmatprep.subr.mxu0 0.0
    %1605 = vmatpush1.xpose.msra.mxu0 0.0
    %1606 = vmatprep.subr.mxu0 0.0
    %1607 = vmatpush1.xpose.msra.mxu0 0.0
    %1608 = vmatprep.subr.mxu0 0.0
    %1609 = vmatpush1.xpose.msra.mxu0 0.0
    %1610 = vmatprep.subr.mxu0 0.0
    %1611 = vmatpush1.xpose.msra.mxu0 0.0
    %1612 = vmatprep.subr.mxu0 %v1075
    %1613 = vmatpush1.xpose.msra.mxu0 %v66
    %1614 = vmatprep.subr.mxu0 0.0
    %1615 = vmatpush2.xpose.msra.mxu0 0.0
    %1616 = vmatprep.subr.mxu0 0.0
    %1617 = vmatpush2.xpose.msra.mxu0 0.0
    %1618 = vmatprep.subr.mxu0 0.0
    %1619 = vmatpush2.xpose.msra.mxu0 0.0
    %1620 = vmatprep.subr.mxu0 0.0
    %1621 = vmatpush2.xpose.msra.mxu0 0.0
    %1622 = vmatprep.subr.mxu0 0.0
    %1623 = vmatpush2.xpose.msra.mxu0 0.0
    %1624 = vmatprep.subr.mxu0 0.0
    %1625 = vmatpush2.xpose.msra.mxu0 0.0
    %1626 = vmatprep.subr.mxu0 0.0
    %1627 = vmatpush2.xpose.msra.mxu0 0.0
    %1628 = vmatprep.subr.mxu0 0.0
    %1629 = vmatpush2.xpose.msra.mxu0 0.0
    %1630 = vmatprep.subr.mxu0 0.0
    %1631 = vmatpush2.xpose.msra.mxu0 0.0
    %1632 = vmatprep.subr.mxu0 0.0
    %1633 = vmatpush2.xpose.msra.mxu0 0.0
    %1634 = vmatprep.subr.mxu0 0.0
    %1635 = vmatpush2.xpose.msra.mxu0 0.0
    %1636 = vmatprep.subr.mxu0 0.0
    %1637 = vmatpush2.xpose.msra.mxu0 0.0
    %1638 = vmatprep.subr.mxu0 0.0
    %1639 = vmatpush2.xpose.msra.mxu0 0.0
    %1640 = vmatprep.subr.mxu0 0.0
    %1641 = vmatpush2.xpose.msra.mxu0 0.0
    %1642 = vmatprep.subr.mxu0 0.0
    %1643 = vmatpush2.xpose.msra.mxu0 0.0
    %1644 = vmatprep.subr.mxu0 0.0
    %1645 = vmatpush2.xpose.msra.mxu0 0.0
    %1646 = vmatprep.mubr.f32.mxu0 %v50
    %1647 = vmatmul.mubr.f32.gmra.mxu0 %v49
    %v1648 = vpop.f32.mrf.mxu0
    %v1649 = vadd.f32 %v1579, %v1648
    %v1650 = vpop.f32.mrf.mxu0
    %1651 = vdwg.mxu0
    %1652 = vmatprep.subr.mxu0 0.0
    %1653 = vmatpush1.xpose.msra.mxu0 0.0
    %1654 = vmatprep.subr.mxu0 0.0
    %1655 = vmatpush1.xpose.msra.mxu0 0.0
    %1656 = vmatprep.subr.mxu0 0.0
    %1657 = vmatpush1.xpose.msra.mxu0 0.0
    %1658 = vmatprep.subr.mxu0 0.0
    %1659 = vmatpush1.xpose.msra.mxu0 0.0
    %1660 = vmatprep.subr.mxu0 0.0
    %1661 = vmatpush1.xpose.msra.mxu0 0.0
    %1662 = vmatprep.subr.mxu0 0.0
    %1663 = vmatpush1.xpose.msra.mxu0 0.0
    %1664 = vmatprep.subr.mxu0 0.0
    %1665 = vmatpush1.xpose.msra.mxu0 0.0
    %1666 = vmatprep.subr.mxu0 0.0
    %1667 = vmatpush1.xpose.msra.mxu0 0.0
    %1668 = vmatprep.subr.mxu0 0.0
    %1669 = vmatpush1.xpose.msra.mxu0 0.0
    %1670 = vmatprep.subr.mxu0 0.0
    %1671 = vmatpush1.xpose.msra.mxu0 0.0
    %1672 = vmatprep.subr.mxu0 0.0
    %1673 = vmatpush1.xpose.msra.mxu0 0.0
    %1674 = vmatprep.subr.mxu0 0.0
    %1675 = vmatpush1.xpose.msra.mxu0 0.0
    %1676 = vmatprep.subr.mxu0 0.0
    %1677 = vmatpush1.xpose.msra.mxu0 0.0
    %1678 = vmatprep.subr.mxu0 0.0
    %1679 = vmatpush1.xpose.msra.mxu0 0.0
    %1680 = vmatprep.subr.mxu0 0.0
    %1681 = vmatpush1.xpose.msra.mxu0 0.0
    %1682 = vmatprep.subr.mxu0 %v1076
    %1683 = vmatpush1.xpose.msra.mxu0 %v67
    %1684 = vmatprep.subr.mxu0 0.0
    %1685 = vmatpush2.xpose.msra.mxu0 0.0
    %1686 = vmatprep.subr.mxu0 0.0
    %1687 = vmatpush2.xpose.msra.mxu0 0.0
    %1688 = vmatprep.subr.mxu0 0.0
    %1689 = vmatpush2.xpose.msra.mxu0 0.0
    %1690 = vmatprep.subr.mxu0 0.0
    %1691 = vmatpush2.xpose.msra.mxu0 0.0
    %1692 = vmatprep.subr.mxu0 0.0
    %1693 = vmatpush2.xpose.msra.mxu0 0.0
    %1694 = vmatprep.subr.mxu0 0.0
    %1695 = vmatpush2.xpose.msra.mxu0 0.0
    %1696 = vmatprep.subr.mxu0 0.0
    %1697 = vmatpush2.xpose.msra.mxu0 0.0
    %1698 = vmatprep.subr.mxu0 0.0
    %1699 = vmatpush2.xpose.msra.mxu0 0.0
    %1700 = vmatprep.subr.mxu0 0.0
    %1701 = vmatpush2.xpose.msra.mxu0 0.0
    %1702 = vmatprep.subr.mxu0 0.0
    %1703 = vmatpush2.xpose.msra.mxu0 0.0
    %1704 = vmatprep.subr.mxu0 0.0
    %1705 = vmatpush2.xpose.msra.mxu0 0.0
    %1706 = vmatprep.subr.mxu0 0.0
    %1707 = vmatpush2.xpose.msra.mxu0 0.0
    %1708 = vmatprep.subr.mxu0 0.0
    %1709 = vmatpush2.xpose.msra.mxu0 0.0
    %1710 = vmatprep.subr.mxu0 0.0
    %1711 = vmatpush2.xpose.msra.mxu0 0.0
    %1712 = vmatprep.subr.mxu0 0.0
    %1713 = vmatpush2.xpose.msra.mxu0 0.0
    %1714 = vmatprep.subr.mxu0 0.0
    %1715 = vmatpush2.xpose.msra.mxu0 0.0
    %1716 = vmatprep.mubr.f32.mxu0 %v52
    %1717 = vmatmul.mubr.f32.gmra.mxu0 %v51
    %v1718 = vpop.f32.mrf.mxu0
    %v1719 = vadd.f32 %v1649, %v1718
    %v1720 = vpop.f32.mrf.mxu0
    %1721 = vdwg.mxu0
    %1722 = vmatprep.subr.mxu0 0.0
    %1723 = vmatpush1.xpose.msra.mxu0 0.0
    %1724 = vmatprep.subr.mxu0 0.0
    %1725 = vmatpush1.xpose.msra.mxu0 0.0
    %1726 = vmatprep.subr.mxu0 0.0
    %1727 = vmatpush1.xpose.msra.mxu0 0.0
    %1728 = vmatprep.subr.mxu0 0.0
    %1729 = vmatpush1.xpose.msra.mxu0 0.0
    %1730 = vmatprep.subr.mxu0 0.0
    %1731 = vmatpush1.xpose.msra.mxu0 0.0
    %1732 = vmatprep.subr.mxu0 0.0
    %1733 = vmatpush1.xpose.msra.mxu0 0.0
    %1734 = vmatprep.subr.mxu0 0.0
    %1735 = vmatpush1.xpose.msra.mxu0 0.0
    %1736 = vmatprep.subr.mxu0 0.0
    %1737 = vmatpush1.xpose.msra.mxu0 0.0
    %1738 = vmatprep.subr.mxu0 0.0
    %1739 = vmatpush1.xpose.msra.mxu0 0.0
    %1740 = vmatprep.subr.mxu0 0.0
    %1741 = vmatpush1.xpose.msra.mxu0 0.0
    %1742 = vmatprep.subr.mxu0 0.0
    %1743 = vmatpush1.xpose.msra.mxu0 0.0
    %1744 = vmatprep.subr.mxu0 0.0
    %1745 = vmatpush1.xpose.msra.mxu0 0.0
    %1746 = vmatprep.subr.mxu0 0.0
    %1747 = vmatpush1.xpose.msra.mxu0 0.0
    %1748 = vmatprep.subr.mxu0 0.0
    %1749 = vmatpush1.xpose.msra.mxu0 0.0
    %1750 = vmatprep.subr.mxu0 0.0
    %1751 = vmatpush1.xpose.msra.mxu0 0.0
    %1752 = vmatprep.subr.mxu0 %v1077
    %1753 = vmatpush1.xpose.msra.mxu0 %v68
    %1754 = vmatprep.subr.mxu0 0.0
    %1755 = vmatpush2.xpose.msra.mxu0 0.0
    %1756 = vmatprep.subr.mxu0 0.0
    %1757 = vmatpush2.xpose.msra.mxu0 0.0
    %1758 = vmatprep.subr.mxu0 0.0
    %1759 = vmatpush2.xpose.msra.mxu0 0.0
    %1760 = vmatprep.subr.mxu0 0.0
    %1761 = vmatpush2.xpose.msra.mxu0 0.0
    %1762 = vmatprep.subr.mxu0 0.0
    %1763 = vmatpush2.xpose.msra.mxu0 0.0
    %1764 = vmatprep.subr.mxu0 0.0
    %1765 = vmatpush2.xpose.msra.mxu0 0.0
    %1766 = vmatprep.subr.mxu0 0.0
    %1767 = vmatpush2.xpose.msra.mxu0 0.0
    %1768 = vmatprep.subr.mxu0 0.0
    %1769 = vmatpush2.xpose.msra.mxu0 0.0
    %1770 = vmatprep.subr.mxu0 0.0
    %1771 = vmatpush2.xpose.msra.mxu0 0.0
    %1772 = vmatprep.subr.mxu0 0.0
    %1773 = vmatpush2.xpose.msra.mxu0 0.0
    %1774 = vmatprep.subr.mxu0 0.0
    %1775 = vmatpush2.xpose.msra.mxu0 0.0
    %1776 = vmatprep.subr.mxu0 0.0
    %1777 = vmatpush2.xpose.msra.mxu0 0.0
    %1778 = vmatprep.subr.mxu0 0.0
    %1779 = vmatpush2.xpose.msra.mxu0 0.0
    %1780 = vmatprep.subr.mxu0 0.0
    %1781 = vmatpush2.xpose.msra.mxu0 0.0
    %1782 = vmatprep.subr.mxu0 0.0
    %1783 = vmatpush2.xpose.msra.mxu0 0.0
    %1784 = vmatprep.subr.mxu0 0.0
    %1785 = vmatpush2.xpose.msra.mxu0 0.0
    %1786 = vmatprep.mubr.f32.mxu0 %v54
    %1787 = vmatmul.mubr.f32.gmra.mxu0 %v53
    %v1788 = vpop.f32.mrf.mxu0
    %v1789 = vadd.f32 %v1719, %v1788
    %v1790 = vpop.f32.mrf.mxu0
    %1791 = vdwg.mxu0
    %1792 = vmatprep.subr.mxu0 0.0
    %1793 = vmatpush1.xpose.msra.mxu0 0.0
    %1794 = vmatprep.subr.mxu0 0.0
    %1795 = vmatpush1.xpose.msra.mxu0 0.0
    %1796 = vmatprep.subr.mxu0 0.0
    %1797 = vmatpush1.xpose.msra.mxu0 0.0
    %1798 = vmatprep.subr.mxu0 0.0
    %1799 = vmatpush1.xpose.msra.mxu0 0.0
    %1800 = vmatprep.subr.mxu0 0.0
    %1801 = vmatpush1.xpose.msra.mxu0 0.0
    %1802 = vmatprep.subr.mxu0 0.0
    %1803 = vmatpush1.xpose.msra.mxu0 0.0
    %1804 = vmatprep.subr.mxu0 0.0
    %1805 = vmatpush1.xpose.msra.mxu0 0.0
    %1806 = vmatprep.subr.mxu0 0.0
    %1807 = vmatpush1.xpose.msra.mxu0 0.0
    %1808 = vmatprep.subr.mxu0 0.0
    %1809 = vmatpush1.xpose.msra.mxu0 0.0
    %1810 = vmatprep.subr.mxu0 0.0
    %1811 = vmatpush1.xpose.msra.mxu0 0.0
    %1812 = vmatprep.subr.mxu0 0.0
    %1813 = vmatpush1.xpose.msra.mxu0 0.0
    %1814 = vmatprep.subr.mxu0 0.0
    %1815 = vmatpush1.xpose.msra.mxu0 0.0
    %1816 = vmatprep.subr.mxu0 0.0
    %1817 = vmatpush1.xpose.msra.mxu0 0.0
    %1818 = vmatprep.subr.mxu0 0.0
    %1819 = vmatpush1.xpose.msra.mxu0 0.0
    %1820 = vmatprep.subr.mxu0 0.0
    %1821 = vmatpush1.xpose.msra.mxu0 0.0
    %1822 = vmatprep.subr.mxu0 %v1078
    %1823 = vmatpush1.xpose.msra.mxu0 %v69
    %1824 = vmatprep.subr.mxu0 0.0
    %1825 = vmatpush2.xpose.msra.mxu0 0.0
    %1826 = vmatprep.subr.mxu0 0.0
    %1827 = vmatpush2.xpose.msra.mxu0 0.0
    %1828 = vmatprep.subr.mxu0 0.0
    %1829 = vmatpush2.xpose.msra.mxu0 0.0
    %1830 = vmatprep.subr.mxu0 0.0
    %1831 = vmatpush2.xpose.msra.mxu0 0.0
    %1832 = vmatprep.subr.mxu0 0.0
    %1833 = vmatpush2.xpose.msra.mxu0 0.0
    %1834 = vmatprep.subr.mxu0 0.0
    %1835 = vmatpush2.xpose.msra.mxu0 0.0
    %1836 = vmatprep.subr.mxu0 0.0
    %1837 = vmatpush2.xpose.msra.mxu0 0.0
    %1838 = vmatprep.subr.mxu0 0.0
    %1839 = vmatpush2.xpose.msra.mxu0 0.0
    %1840 = vmatprep.subr.mxu0 0.0
    %1841 = vmatpush2.xpose.msra.mxu0 0.0
    %1842 = vmatprep.subr.mxu0 0.0
    %1843 = vmatpush2.xpose.msra.mxu0 0.0
    %1844 = vmatprep.subr.mxu0 0.0
    %1845 = vmatpush2.xpose.msra.mxu0 0.0
    %1846 = vmatprep.subr.mxu0 0.0
    %1847 = vmatpush2.xpose.msra.mxu0 0.0
    %1848 = vmatprep.subr.mxu0 0.0
    %1849 = vmatpush2.xpose.msra.mxu0 0.0
    %1850 = vmatprep.subr.mxu0 0.0
    %1851 = vmatpush2.xpose.msra.mxu0 0.0
    %1852 = vmatprep.subr.mxu0 0.0
    %1853 = vmatpush2.xpose.msra.mxu0 0.0
    %1854 = vmatprep.subr.mxu0 0.0
    %1855 = vmatpush2.xpose.msra.mxu0 0.0
    %1856 = vmatprep.mubr.f32.mxu0 %v56
    %1857 = vmatmul.mubr.f32.gmra.mxu0 %v55
    %v1858 = vpop.f32.mrf.mxu0
    %v1859 = vadd.f32 %v1789, %v1858
    %v1860 = vpop.f32.mrf.mxu0
    %1861 = vdwg.mxu0
    %1862 = vmatprep.subr.mxu0 0.0
    %1863 = vmatpush1.xpose.msra.mxu0 0.0
    %1864 = vmatprep.subr.mxu0 0.0
    %1865 = vmatpush1.xpose.msra.mxu0 0.0
    %1866 = vmatprep.subr.mxu0 0.0
    %1867 = vmatpush1.xpose.msra.mxu0 0.0
    %1868 = vmatprep.subr.mxu0 0.0
    %1869 = vmatpush1.xpose.msra.mxu0 0.0
    %1870 = vmatprep.subr.mxu0 0.0
    %1871 = vmatpush1.xpose.msra.mxu0 0.0
    %1872 = vmatprep.subr.mxu0 0.0
    %1873 = vmatpush1.xpose.msra.mxu0 0.0
    %1874 = vmatprep.subr.mxu0 0.0
    %1875 = vmatpush1.xpose.msra.mxu0 0.0
    %1876 = vmatprep.subr.mxu0 0.0
    %1877 = vmatpush1.xpose.msra.mxu0 0.0
    %1878 = vmatprep.subr.mxu0 0.0
    %1879 = vmatpush1.xpose.msra.mxu0 0.0
    %1880 = vmatprep.subr.mxu0 0.0
    %1881 = vmatpush1.xpose.msra.mxu0 0.0
    %1882 = vmatprep.subr.mxu0 0.0
    %1883 = vmatpush1.xpose.msra.mxu0 0.0
    %1884 = vmatprep.subr.mxu0 0.0
    %1885 = vmatpush1.xpose.msra.mxu0 0.0
    %1886 = vmatprep.subr.mxu0 0.0
    %1887 = vmatpush1.xpose.msra.mxu0 0.0
    %1888 = vmatprep.subr.mxu0 0.0
    %1889 = vmatpush1.xpose.msra.mxu0 0.0
    %1890 = vmatprep.subr.mxu0 0.0
    %1891 = vmatpush1.xpose.msra.mxu0 0.0
    %1892 = vmatprep.subr.mxu0 %v1079
    %1893 = vmatpush1.xpose.msra.mxu0 %v70
    %1894 = vmatprep.subr.mxu0 0.0
    %1895 = vmatpush2.xpose.msra.mxu0 0.0
    %1896 = vmatprep.subr.mxu0 0.0
    %1897 = vmatpush2.xpose.msra.mxu0 0.0
    %1898 = vmatprep.subr.mxu0 0.0
    %1899 = vmatpush2.xpose.msra.mxu0 0.0
    %1900 = vmatprep.subr.mxu0 0.0
    %1901 = vmatpush2.xpose.msra.mxu0 0.0
    %1902 = vmatprep.subr.mxu0 0.0
    %1903 = vmatpush2.xpose.msra.mxu0 0.0
    %1904 = vmatprep.subr.mxu0 0.0
    %1905 = vmatpush2.xpose.msra.mxu0 0.0
    %1906 = vmatprep.subr.mxu0 0.0
    %1907 = vmatpush2.xpose.msra.mxu0 0.0
    %1908 = vmatprep.subr.mxu0 0.0
    %1909 = vmatpush2.xpose.msra.mxu0 0.0
    %1910 = vmatprep.subr.mxu0 0.0
    %1911 = vmatpush2.xpose.msra.mxu0 0.0
    %1912 = vmatprep.subr.mxu0 0.0
    %1913 = vmatpush2.xpose.msra.mxu0 0.0
    %1914 = vmatprep.subr.mxu0 0.0
    %1915 = vmatpush2.xpose.msra.mxu0 0.0
    %1916 = vmatprep.subr.mxu0 0.0
    %1917 = vmatpush2.xpose.msra.mxu0 0.0
    %1918 = vmatprep.subr.mxu0 0.0
    %1919 = vmatpush2.xpose.msra.mxu0 0.0
    %1920 = vmatprep.subr.mxu0 0.0
    %1921 = vmatpush2.xpose.msra.mxu0 0.0
    %1922 = vmatprep.subr.mxu0 0.0
    %1923 = vmatpush2.xpose.msra.mxu0 0.0
    %1924 = vmatprep.subr.mxu0 0.0
    %1925 = vmatpush2.xpose.msra.mxu0 0.0
    %1926 = vmatprep.mubr.f32.mxu0 %v58
    %1927 = vmatmul.mubr.f32.gmra.mxu0 %v57
    %v1928 = vpop.f32.mrf.mxu0
    %v1929 = vadd.f32 %v1859, %v1928
    %v1930 = vpop.f32.mrf.mxu0
    %1931 = vdwg.mxu0
    %v1932 = vld [vmem:[%s0] sm:$0x3c]
    %v1933 = vld [vmem:[%s0 + $0x8] sm:$0x3c]
    %v1934 = vld [vmem:[%s0 + $0x10] sm:$0x3c]
    %v1935 = vld [vmem:[%s0 + $0x18] sm:$0x3c]
    %v1936 = vld [vmem:[%s0 + $0x20] sm:$0x3c]
    %v1937 = vld [vmem:[%s0 + $0x28] sm:$0x3c]
    %v1938 = vld [vmem:[%s0 + $0x30] sm:$0x3c]
    %v1939 = vld [vmem:[%s0 + $0x38] sm:$0x3c]
    %v1940 = vld [vmem:[%s0 + $0x40] sm:$0x3c]
    %v1941 = vld [vmem:[%s0 + $0x48] sm:$0x3c]
    %v1942 = vld [vmem:[%s0 + $0x50] sm:$0x3c]
    %v1943 = vld [vmem:[%s0 + $0x58] sm:$0x3c]
    %v1944 = vld [vmem:[%s0 + $0x60] sm:$0x3c]
    %v1945 = vld [vmem:[%s0 + $0x68] sm:$0x3c]
    %v1946 = vld [vmem:[%s0 + $0x70] sm:$0x3c]
    %v1947 = vld [vmem:[%s0 + $0x78] sm:$0x3c]
    %v1948 = vld [vmem:[%s0 + $0x80] sm:$0x3c]
    %v1949 = vld [vmem:[%s0 + $0x88] sm:$0x3c]
    %v1950 = vld [vmem:[%s0 + $0x90] sm:$0x3c]
    %v1951 = vld [vmem:[%s0 + $0x98] sm:$0x3c]
    %v1952 = vld [vmem:[%s0 + $0xa0] sm:$0x3c]
    %v1953 = vld [vmem:[%s0 + $0xa8] sm:$0x3c]
    %v1954 = vld [vmem:[%s0 + $0xb0] sm:$0x3c]
    %v1955 = vld [vmem:[%s0 + $0xb8] sm:$0x3c]
    %s1956 = scalar_lea.vmem %s1, 192
    %v1957 = vld [vmem:[%s1956] sm:$0xff]
    %v1958 = vld [vmem:[%s1956 + $0x8] sm:$0xff]
    %v1959 = vld [vmem:[%s1956 + $0x10] sm:$0xff]
    %v1960 = vld [vmem:[%s1956 + $0x18] sm:$0xff]
    %v1961 = vld [vmem:[%s1956 + $0x20] sm:$0xff]
    %v1962 = vld [vmem:[%s1956 + $0x28] sm:$0xff]
    %v1963 = vld [vmem:[%s1956 + $0x30] sm:$0xff]
    %v1964 = vld [vmem:[%s1956 + $0x38] sm:$0xff]
    %v1965 = vld [vmem:[%s1956 + $0x40] sm:$0xff]
    %v1966 = vld [vmem:[%s1956 + $0x48] sm:$0xff]
    %v1967 = vld [vmem:[%s1956 + $0x50] sm:$0xff]
    %v1968 = vld [vmem:[%s1956 + $0x58] sm:$0xff]
    %v1993 = vrot.slane %v1932, 2
    %v1994 = vrot.slane %v1933, 2
    %v1995 = vrot.slane %v1934, 2
    %v1996 = vrot.slane %v1935, 2
    %v1997 = vrot.slane %v1936, 2
    %v1998 = vrot.slane %v1937, 2
    %v1999 = vrot.slane %v1938, 2
    %v2000 = vrot.slane %v1939, 2
    %v2001 = vrot.slane %v1940, 2
    %v2002 = vrot.slane %v1941, 2
    %v2003 = vrot.slane %v1942, 2
    %v2004 = vrot.slane %v1943, 2
    %v2005 = vrot.slane %v1944, 2
    %v2006 = vrot.slane %v1945, 2
    %v2007 = vrot.slane %v1946, 2
    %v2008 = vrot.slane %v1947, 2
    %v2009 = vrot.slane %v1948, 2
    %v2010 = vrot.slane %v1949, 2
    %v2011 = vrot.slane %v1950, 2
    %v2012 = vrot.slane %v1951, 2
    %v2013 = vrot.slane %v1952, 2
    %v2014 = vrot.slane %v1953, 2
    %v2015 = vrot.slane %v1954, 2
    %v2016 = vrot.slane %v1955, 2
    %v2053 = vcombine.high %v1957, %v1957
    %v2054 = vcombine.high %v1958, %v1958
    %v2055 = vcombine.high %v1959, %v1959
    %v2056 = vcombine.high %v1960, %v1960
    %v2057 = vcombine.high %v1961, %v1961
    %v2058 = vcombine.high %v1962, %v1962
    %v2059 = vcombine.high %v1963, %v1963
    %v2060 = vcombine.high %v1964, %v1964
    %v2061 = vcombine.high %v1965, %v1965
    %v2062 = vcombine.high %v1966, %v1966
    %v2063 = vcombine.high %v1967, %v1967
    %v2064 = vcombine.high %v1968, %v1968
    %2077 = vmatprep.subr.mxu0 0.0
    %2078 = vmatpush1.xpose.msra.mxu0 0.0
    %2079 = vmatprep.subr.mxu0 0.0
    %2080 = vmatpush1.xpose.msra.mxu0 0.0
    %2081 = vmatprep.subr.mxu0 0.0
    %2082 = vmatpush1.xpose.msra.mxu0 0.0
    %2083 = vmatprep.subr.mxu0 0.0
    %2084 = vmatpush1.xpose.msra.mxu0 0.0
    %2085 = vmatprep.subr.mxu0 0.0
    %2086 = vmatpush1.xpose.msra.mxu0 0.0
    %2087 = vmatprep.subr.mxu0 0.0
    %2088 = vmatpush1.xpose.msra.mxu0 0.0
    %2089 = vmatprep.subr.mxu0 0.0
    %2090 = vmatpush1.xpose.msra.mxu0 0.0
    %2091 = vmatprep.subr.mxu0 0.0
    %2092 = vmatpush1.xpose.msra.mxu0 0.0
    %2093 = vmatprep.subr.mxu0 0.0
    %2094 = vmatpush1.xpose.msra.mxu0 0.0
    %2095 = vmatprep.subr.mxu0 0.0
    %2096 = vmatpush1.xpose.msra.mxu0 0.0
    %2097 = vmatprep.subr.mxu0 0.0
    %2098 = vmatpush1.xpose.msra.mxu0 0.0
    %2099 = vmatprep.subr.mxu0 0.0
    %2100 = vmatpush1.xpose.msra.mxu0 0.0
    %2101 = vmatprep.subr.mxu0 0.0
    %2102 = vmatpush1.xpose.msra.mxu0 0.0
    %2103 = vmatprep.subr.mxu0 0.0
    %2104 = vmatpush1.xpose.msra.mxu0 0.0
    %2105 = vmatprep.subr.mxu0 0.0
    %2106 = vmatpush1.xpose.msra.mxu0 0.0
    %2107 = vmatprep.subr.mxu0 %v2053
    %2108 = vmatpush1.xpose.msra.mxu0 %v1957
    %2109 = vmatprep.subr.mxu0 0.0
    %2110 = vmatpush2.xpose.msra.mxu0 0.0
    %2111 = vmatprep.subr.mxu0 0.0
    %2112 = vmatpush2.xpose.msra.mxu0 0.0
    %2113 = vmatprep.subr.mxu0 0.0
    %2114 = vmatpush2.xpose.msra.mxu0 0.0
    %2115 = vmatprep.subr.mxu0 0.0
    %2116 = vmatpush2.xpose.msra.mxu0 0.0
    %2117 = vmatprep.subr.mxu0 0.0
    %2118 = vmatpush2.xpose.msra.mxu0 0.0
    %2119 = vmatprep.subr.mxu0 0.0
    %2120 = vmatpush2.xpose.msra.mxu0 0.0
    %2121 = vmatprep.subr.mxu0 0.0
    %2122 = vmatpush2.xpose.msra.mxu0 0.0
    %2123 = vmatprep.subr.mxu0 0.0
    %2124 = vmatpush2.xpose.msra.mxu0 0.0
    %2125 = vmatprep.subr.mxu0 0.0
    %2126 = vmatpush2.xpose.msra.mxu0 0.0
    %2127 = vmatprep.subr.mxu0 0.0
    %2128 = vmatpush2.xpose.msra.mxu0 0.0
    %2129 = vmatprep.subr.mxu0 0.0
    %2130 = vmatpush2.xpose.msra.mxu0 0.0
    %2131 = vmatprep.subr.mxu0 0.0
    %2132 = vmatpush2.xpose.msra.mxu0 0.0
    %2133 = vmatprep.subr.mxu0 0.0
    %2134 = vmatpush2.xpose.msra.mxu0 0.0
    %2135 = vmatprep.subr.mxu0 0.0
    %2136 = vmatpush2.xpose.msra.mxu0 0.0
    %2137 = vmatprep.subr.mxu0 0.0
    %2138 = vmatpush2.xpose.msra.mxu0 0.0
    %2139 = vmatprep.subr.mxu0 0.0
    %2140 = vmatpush2.xpose.msra.mxu0 0.0
    %2141 = vmatprep.mubr.f32.mxu0 %v1994
    %2142 = vmatmul.mubr.f32.gmra.mxu0 %v1993
    %v2143 = vpop.f32.mrf.mxu0
    %v2144 = vadd.f32 0.0, %v2143
    %v2145 = vpop.f32.mrf.mxu0
    %2146 = vdwg.mxu0
    %2147 = vmatprep.subr.mxu0 0.0
    %2148 = vmatpush1.xpose.msra.mxu0 0.0
    %2149 = vmatprep.subr.mxu0 0.0
    %2150 = vmatpush1.xpose.msra.mxu0 0.0
    %2151 = vmatprep.subr.mxu0 0.0
    %2152 = vmatpush1.xpose.msra.mxu0 0.0
    %2153 = vmatprep.subr.mxu0 0.0
    %2154 = vmatpush1.xpose.msra.mxu0 0.0
    %2155 = vmatprep.subr.mxu0 0.0
    %2156 = vmatpush1.xpose.msra.mxu0 0.0
    %2157 = vmatprep.subr.mxu0 0.0
    %2158 = vmatpush1.xpose.msra.mxu0 0.0
    %2159 = vmatprep.subr.mxu0 0.0
    %2160 = vmatpush1.xpose.msra.mxu0 0.0
    %2161 = vmatprep.subr.mxu0 0.0
    %2162 = vmatpush1.xpose.msra.mxu0 0.0
    %2163 = vmatprep.subr.mxu0 0.0
    %2164 = vmatpush1.xpose.msra.mxu0 0.0
    %2165 = vmatprep.subr.mxu0 0.0
    %2166 = vmatpush1.xpose.msra.mxu0 0.0
    %2167 = vmatprep.subr.mxu0 0.0
    %2168 = vmatpush1.xpose.msra.mxu0 0.0
    %2169 = vmatprep.subr.mxu0 0.0
    %2170 = vmatpush1.xpose.msra.mxu0 0.0
    %2171 = vmatprep.subr.mxu0 0.0
    %2172 = vmatpush1.xpose.msra.mxu0 0.0
    %2173 = vmatprep.subr.mxu0 0.0
    %2174 = vmatpush1.xpose.msra.mxu0 0.0
    %2175 = vmatprep.subr.mxu0 0.0
    %2176 = vmatpush1.xpose.msra.mxu0 0.0
    %2177 = vmatprep.subr.mxu0 %v2054
    %2178 = vmatpush1.xpose.msra.mxu0 %v1958
    %2179 = vmatprep.subr.mxu0 0.0
    %2180 = vmatpush2.xpose.msra.mxu0 0.0
    %2181 = vmatprep.subr.mxu0 0.0
    %2182 = vmatpush2.xpose.msra.mxu0 0.0
    %2183 = vmatprep.subr.mxu0 0.0
    %2184 = vmatpush2.xpose.msra.mxu0 0.0
    %2185 = vmatprep.subr.mxu0 0.0
    %2186 = vmatpush2.xpose.msra.mxu0 0.0
    %2187 = vmatprep.subr.mxu0 0.0
    %2188 = vmatpush2.xpose.msra.mxu0 0.0
    %2189 = vmatprep.subr.mxu0 0.0
    %2190 = vmatpush2.xpose.msra.mxu0 0.0
    %2191 = vmatprep.subr.mxu0 0.0
    %2192 = vmatpush2.xpose.msra.mxu0 0.0
    %2193 = vmatprep.subr.mxu0 0.0
    %2194 = vmatpush2.xpose.msra.mxu0 0.0
    %2195 = vmatprep.subr.mxu0 0.0
    %2196 = vmatpush2.xpose.msra.mxu0 0.0
    %2197 = vmatprep.subr.mxu0 0.0
    %2198 = vmatpush2.xpose.msra.mxu0 0.0
    %2199 = vmatprep.subr.mxu0 0.0
    %2200 = vmatpush2.xpose.msra.mxu0 0.0
    %2201 = vmatprep.subr.mxu0 0.0
    %2202 = vmatpush2.xpose.msra.mxu0 0.0
    %2203 = vmatprep.subr.mxu0 0.0
    %2204 = vmatpush2.xpose.msra.mxu0 0.0
    %2205 = vmatprep.subr.mxu0 0.0
    %2206 = vmatpush2.xpose.msra.mxu0 0.0
    %2207 = vmatprep.subr.mxu0 0.0
    %2208 = vmatpush2.xpose.msra.mxu0 0.0
    %2209 = vmatprep.subr.mxu0 0.0
    %2210 = vmatpush2.xpose.msra.mxu0 0.0
    %2211 = vmatprep.mubr.f32.mxu0 %v1996
    %2212 = vmatmul.mubr.f32.gmra.mxu0 %v1995
    %v2213 = vpop.f32.mrf.mxu0
    %v2214 = vadd.f32 %v2144, %v2213
    %v2215 = vpop.f32.mrf.mxu0
    %2216 = vdwg.mxu0
    %2217 = vmatprep.subr.mxu0 0.0
    %2218 = vmatpush1.xpose.msra.mxu0 0.0
    %2219 = vmatprep.subr.mxu0 0.0
    %2220 = vmatpush1.xpose.msra.mxu0 0.0
    %2221 = vmatprep.subr.mxu0 0.0
    %2222 = vmatpush1.xpose.msra.mxu0 0.0
    %2223 = vmatprep.subr.mxu0 0.0
    %2224 = vmatpush1.xpose.msra.mxu0 0.0
    %2225 = vmatprep.subr.mxu0 0.0
    %2226 = vmatpush1.xpose.msra.mxu0 0.0
    %2227 = vmatprep.subr.mxu0 0.0
    %2228 = vmatpush1.xpose.msra.mxu0 0.0
    %2229 = vmatprep.subr.mxu0 0.0
    %2230 = vmatpush1.xpose.msra.mxu0 0.0
    %2231 = vmatprep.subr.mxu0 0.0
    %2232 = vmatpush1.xpose.msra.mxu0 0.0
    %2233 = vmatprep.subr.mxu0 0.0
    %2234 = vmatpush1.xpose.msra.mxu0 0.0
    %2235 = vmatprep.subr.mxu0 0.0
    %2236 = vmatpush1.xpose.msra.mxu0 0.0
    %2237 = vmatprep.subr.mxu0 0.0
    %2238 = vmatpush1.xpose.msra.mxu0 0.0
    %2239 = vmatprep.subr.mxu0 0.0
    %2240 = vmatpush1.xpose.msra.mxu0 0.0
    %2241 = vmatprep.subr.mxu0 0.0
    %2242 = vmatpush1.xpose.msra.mxu0 0.0
    %2243 = vmatprep.subr.mxu0 0.0
    %2244 = vmatpush1.xpose.msra.mxu0 0.0
    %2245 = vmatprep.subr.mxu0 0.0
    %2246 = vmatpush1.xpose.msra.mxu0 0.0
    %2247 = vmatprep.subr.mxu0 %v2055
    %2248 = vmatpush1.xpose.msra.mxu0 %v1959
    %2249 = vmatprep.subr.mxu0 0.0
    %2250 = vmatpush2.xpose.msra.mxu0 0.0
    %2251 = vmatprep.subr.mxu0 0.0
    %2252 = vmatpush2.xpose.msra.mxu0 0.0
    %2253 = vmatprep.subr.mxu0 0.0
    %2254 = vmatpush2.xpose.msra.mxu0 0.0
    %2255 = vmatprep.subr.mxu0 0.0
    %2256 = vmatpush2.xpose.msra.mxu0 0.0
    %2257 = vmatprep.subr.mxu0 0.0
    %2258 = vmatpush2.xpose.msra.mxu0 0.0
    %2259 = vmatprep.subr.mxu0 0.0
    %2260 = vmatpush2.xpose.msra.mxu0 0.0
    %2261 = vmatprep.subr.mxu0 0.0
    %2262 = vmatpush2.xpose.msra.mxu0 0.0
    %2263 = vmatprep.subr.mxu0 0.0
    %2264 = vmatpush2.xpose.msra.mxu0 0.0
    %2265 = vmatprep.subr.mxu0 0.0
    %2266 = vmatpush2.xpose.msra.mxu0 0.0
    %2267 = vmatprep.subr.mxu0 0.0
    %2268 = vmatpush2.xpose.msra.mxu0 0.0
    %2269 = vmatprep.subr.mxu0 0.0
    %2270 = vmatpush2.xpose.msra.mxu0 0.0
    %2271 = vmatprep.subr.mxu0 0.0
    %2272 = vmatpush2.xpose.msra.mxu0 0.0
    %2273 = vmatprep.subr.mxu0 0.0
    %2274 = vmatpush2.xpose.msra.mxu0 0.0
    %2275 = vmatprep.subr.mxu0 0.0
    %2276 = vmatpush2.xpose.msra.mxu0 0.0
    %2277 = vmatprep.subr.mxu0 0.0
    %2278 = vmatpush2.xpose.msra.mxu0 0.0
    %2279 = vmatprep.subr.mxu0 0.0
    %2280 = vmatpush2.xpose.msra.mxu0 0.0
    %2281 = vmatprep.mubr.f32.mxu0 %v1998
    %2282 = vmatmul.mubr.f32.gmra.mxu0 %v1997
    %v2283 = vpop.f32.mrf.mxu0
    %v2284 = vadd.f32 %v2214, %v2283
    %v2285 = vpop.f32.mrf.mxu0
    %2286 = vdwg.mxu0
    %2287 = vmatprep.subr.mxu0 0.0
    %2288 = vmatpush1.xpose.msra.mxu0 0.0
    %2289 = vmatprep.subr.mxu0 0.0
    %2290 = vmatpush1.xpose.msra.mxu0 0.0
    %2291 = vmatprep.subr.mxu0 0.0
    %2292 = vmatpush1.xpose.msra.mxu0 0.0
    %2293 = vmatprep.subr.mxu0 0.0
    %2294 = vmatpush1.xpose.msra.mxu0 0.0
    %2295 = vmatprep.subr.mxu0 0.0
    %2296 = vmatpush1.xpose.msra.mxu0 0.0
    %2297 = vmatprep.subr.mxu0 0.0
    %2298 = vmatpush1.xpose.msra.mxu0 0.0
    %2299 = vmatprep.subr.mxu0 0.0
    %2300 = vmatpush1.xpose.msra.mxu0 0.0
    %2301 = vmatprep.subr.mxu0 0.0
    %2302 = vmatpush1.xpose.msra.mxu0 0.0
    %2303 = vmatprep.subr.mxu0 0.0
    %2304 = vmatpush1.xpose.msra.mxu0 0.0
    %2305 = vmatprep.subr.mxu0 0.0
    %2306 = vmatpush1.xpose.msra.mxu0 0.0
    %2307 = vmatprep.subr.mxu0 0.0
    %2308 = vmatpush1.xpose.msra.mxu0 0.0
    %2309 = vmatprep.subr.mxu0 0.0
    %2310 = vmatpush1.xpose.msra.mxu0 0.0
    %2311 = vmatprep.subr.mxu0 0.0
    %2312 = vmatpush1.xpose.msra.mxu0 0.0
    %2313 = vmatprep.subr.mxu0 0.0
    %2314 = vmatpush1.xpose.msra.mxu0 0.0
    %2315 = vmatprep.subr.mxu0 0.0
    %2316 = vmatpush1.xpose.msra.mxu0 0.0
    %2317 = vmatprep.subr.mxu0 %v2056
    %2318 = vmatpush1.xpose.msra.mxu0 %v1960
    %2319 = vmatprep.subr.mxu0 0.0
    %2320 = vmatpush2.xpose.msra.mxu0 0.0
    %2321 = vmatprep.subr.mxu0 0.0
    %2322 = vmatpush2.xpose.msra.mxu0 0.0
    %2323 = vmatprep.subr.mxu0 0.0
    %2324 = vmatpush2.xpose.msra.mxu0 0.0
    %2325 = vmatprep.subr.mxu0 0.0
    %2326 = vmatpush2.xpose.msra.mxu0 0.0
    %2327 = vmatprep.subr.mxu0 0.0
    %2328 = vmatpush2.xpose.msra.mxu0 0.0
    %2329 = vmatprep.subr.mxu0 0.0
    %2330 = vmatpush2.xpose.msra.mxu0 0.0
    %2331 = vmatprep.subr.mxu0 0.0
    %2332 = vmatpush2.xpose.msra.mxu0 0.0
    %2333 = vmatprep.subr.mxu0 0.0
    %2334 = vmatpush2.xpose.msra.mxu0 0.0
    %2335 = vmatprep.subr.mxu0 0.0
    %2336 = vmatpush2.xpose.msra.mxu0 0.0
    %2337 = vmatprep.subr.mxu0 0.0
    %2338 = vmatpush2.xpose.msra.mxu0 0.0
    %2339 = vmatprep.subr.mxu0 0.0
    %2340 = vmatpush2.xpose.msra.mxu0 0.0
    %2341 = vmatprep.subr.mxu0 0.0
    %2342 = vmatpush2.xpose.msra.mxu0 0.0
    %2343 = vmatprep.subr.mxu0 0.0
    %2344 = vmatpush2.xpose.msra.mxu0 0.0
    %2345 = vmatprep.subr.mxu0 0.0
    %2346 = vmatpush2.xpose.msra.mxu0 0.0
    %2347 = vmatprep.subr.mxu0 0.0
    %2348 = vmatpush2.xpose.msra.mxu0 0.0
    %2349 = vmatprep.subr.mxu0 0.0
    %2350 = vmatpush2.xpose.msra.mxu0 0.0
    %2351 = vmatprep.mubr.f32.mxu0 %v2000
    %2352 = vmatmul.mubr.f32.gmra.mxu0 %v1999
    %v2353 = vpop.f32.mrf.mxu0
    %v2354 = vadd.f32 %v2284, %v2353
    %v2355 = vpop.f32.mrf.mxu0
    %2356 = vdwg.mxu0
    %2357 = vmatprep.subr.mxu0 0.0
    %2358 = vmatpush1.xpose.msra.mxu0 0.0
    %2359 = vmatprep.subr.mxu0 0.0
    %2360 = vmatpush1.xpose.msra.mxu0 0.0
    %2361 = vmatprep.subr.mxu0 0.0
    %2362 = vmatpush1.xpose.msra.mxu0 0.0
    %2363 = vmatprep.subr.mxu0 0.0
    %2364 = vmatpush1.xpose.msra.mxu0 0.0
    %2365 = vmatprep.subr.mxu0 0.0
    %2366 = vmatpush1.xpose.msra.mxu0 0.0
    %2367 = vmatprep.subr.mxu0 0.0
    %2368 = vmatpush1.xpose.msra.mxu0 0.0
    %2369 = vmatprep.subr.mxu0 0.0
    %2370 = vmatpush1.xpose.msra.mxu0 0.0
    %2371 = vmatprep.subr.mxu0 0.0
    %2372 = vmatpush1.xpose.msra.mxu0 0.0
    %2373 = vmatprep.subr.mxu0 0.0
    %2374 = vmatpush1.xpose.msra.mxu0 0.0
    %2375 = vmatprep.subr.mxu0 0.0
    %2376 = vmatpush1.xpose.msra.mxu0 0.0
    %2377 = vmatprep.subr.mxu0 0.0
    %2378 = vmatpush1.xpose.msra.mxu0 0.0
    %2379 = vmatprep.subr.mxu0 0.0
    %2380 = vmatpush1.xpose.msra.mxu0 0.0
    %2381 = vmatprep.subr.mxu0 0.0
    %2382 = vmatpush1.xpose.msra.mxu0 0.0
    %2383 = vmatprep.subr.mxu0 0.0
    %2384 = vmatpush1.xpose.msra.mxu0 0.0
    %2385 = vmatprep.subr.mxu0 0.0
    %2386 = vmatpush1.xpose.msra.mxu0 0.0
    %2387 = vmatprep.subr.mxu0 %v2057
    %2388 = vmatpush1.xpose.msra.mxu0 %v1961
    %2389 = vmatprep.subr.mxu0 0.0
    %2390 = vmatpush2.xpose.msra.mxu0 0.0
    %2391 = vmatprep.subr.mxu0 0.0
    %2392 = vmatpush2.xpose.msra.mxu0 0.0
    %2393 = vmatprep.subr.mxu0 0.0
    %2394 = vmatpush2.xpose.msra.mxu0 0.0
    %2395 = vmatprep.subr.mxu0 0.0
    %2396 = vmatpush2.xpose.msra.mxu0 0.0
    %2397 = vmatprep.subr.mxu0 0.0
    %2398 = vmatpush2.xpose.msra.mxu0 0.0
    %2399 = vmatprep.subr.mxu0 0.0
    %2400 = vmatpush2.xpose.msra.mxu0 0.0
    %2401 = vmatprep.subr.mxu0 0.0
    %2402 = vmatpush2.xpose.msra.mxu0 0.0
    %2403 = vmatprep.subr.mxu0 0.0
    %2404 = vmatpush2.xpose.msra.mxu0 0.0
    %2405 = vmatprep.subr.mxu0 0.0
    %2406 = vmatpush2.xpose.msra.mxu0 0.0
    %2407 = vmatprep.subr.mxu0 0.0
    %2408 = vmatpush2.xpose.msra.mxu0 0.0
    %2409 = vmatprep.subr.mxu0 0.0
    %2410 = vmatpush2.xpose.msra.mxu0 0.0
    %2411 = vmatprep.subr.mxu0 0.0
    %2412 = vmatpush2.xpose.msra.mxu0 0.0
    %2413 = vmatprep.subr.mxu0 0.0
    %2414 = vmatpush2.xpose.msra.mxu0 0.0
    %2415 = vmatprep.subr.mxu0 0.0
    %2416 = vmatpush2.xpose.msra.mxu0 0.0
    %2417 = vmatprep.subr.mxu0 0.0
    %2418 = vmatpush2.xpose.msra.mxu0 0.0
    %2419 = vmatprep.subr.mxu0 0.0
    %2420 = vmatpush2.xpose.msra.mxu0 0.0
    %2421 = vmatprep.mubr.f32.mxu0 %v2002
    %2422 = vmatmul.mubr.f32.gmra.mxu0 %v2001
    %v2423 = vpop.f32.mrf.mxu0
    %v2424 = vadd.f32 %v2354, %v2423
    %v2425 = vpop.f32.mrf.mxu0
    %2426 = vdwg.mxu0
    %2427 = vmatprep.subr.mxu0 0.0
    %2428 = vmatpush1.xpose.msra.mxu0 0.0
    %2429 = vmatprep.subr.mxu0 0.0
    %2430 = vmatpush1.xpose.msra.mxu0 0.0
    %2431 = vmatprep.subr.mxu0 0.0
    %2432 = vmatpush1.xpose.msra.mxu0 0.0
    %2433 = vmatprep.subr.mxu0 0.0
    %2434 = vmatpush1.xpose.msra.mxu0 0.0
    %2435 = vmatprep.subr.mxu0 0.0
    %2436 = vmatpush1.xpose.msra.mxu0 0.0
    %2437 = vmatprep.subr.mxu0 0.0
    %2438 = vmatpush1.xpose.msra.mxu0 0.0
    %2439 = vmatprep.subr.mxu0 0.0
    %2440 = vmatpush1.xpose.msra.mxu0 0.0
    %2441 = vmatprep.subr.mxu0 0.0
    %2442 = vmatpush1.xpose.msra.mxu0 0.0
    %2443 = vmatprep.subr.mxu0 0.0
    %2444 = vmatpush1.xpose.msra.mxu0 0.0
    %2445 = vmatprep.subr.mxu0 0.0
    %2446 = vmatpush1.xpose.msra.mxu0 0.0
    %2447 = vmatprep.subr.mxu0 0.0
    %2448 = vmatpush1.xpose.msra.mxu0 0.0
    %2449 = vmatprep.subr.mxu0 0.0
    %2450 = vmatpush1.xpose.msra.mxu0 0.0
    %2451 = vmatprep.subr.mxu0 0.0
    %2452 = vmatpush1.xpose.msra.mxu0 0.0
    %2453 = vmatprep.subr.mxu0 0.0
    %2454 = vmatpush1.xpose.msra.mxu0 0.0
    %2455 = vmatprep.subr.mxu0 0.0
    %2456 = vmatpush1.xpose.msra.mxu0 0.0
    %2457 = vmatprep.subr.mxu0 %v2058
    %2458 = vmatpush1.xpose.msra.mxu0 %v1962
    %2459 = vmatprep.subr.mxu0 0.0
    %2460 = vmatpush2.xpose.msra.mxu0 0.0
    %2461 = vmatprep.subr.mxu0 0.0
    %2462 = vmatpush2.xpose.msra.mxu0 0.0
    %2463 = vmatprep.subr.mxu0 0.0
    %2464 = vmatpush2.xpose.msra.mxu0 0.0
    %2465 = vmatprep.subr.mxu0 0.0
    %2466 = vmatpush2.xpose.msra.mxu0 0.0
    %2467 = vmatprep.subr.mxu0 0.0
    %2468 = vmatpush2.xpose.msra.mxu0 0.0
    %2469 = vmatprep.subr.mxu0 0.0
    %2470 = vmatpush2.xpose.msra.mxu0 0.0
    %2471 = vmatprep.subr.mxu0 0.0
    %2472 = vmatpush2.xpose.msra.mxu0 0.0
    %2473 = vmatprep.subr.mxu0 0.0
    %2474 = vmatpush2.xpose.msra.mxu0 0.0
    %2475 = vmatprep.subr.mxu0 0.0
    %2476 = vmatpush2.xpose.msra.mxu0 0.0
    %2477 = vmatprep.subr.mxu0 0.0
    %2478 = vmatpush2.xpose.msra.mxu0 0.0
    %2479 = vmatprep.subr.mxu0 0.0
    %2480 = vmatpush2.xpose.msra.mxu0 0.0
    %2481 = vmatprep.subr.mxu0 0.0
    %2482 = vmatpush2.xpose.msra.mxu0 0.0
    %2483 = vmatprep.subr.mxu0 0.0
    %2484 = vmatpush2.xpose.msra.mxu0 0.0
    %2485 = vmatprep.subr.mxu0 0.0
    %2486 = vmatpush2.xpose.msra.mxu0 0.0
    %2487 = vmatprep.subr.mxu0 0.0
    %2488 = vmatpush2.xpose.msra.mxu0 0.0
    %2489 = vmatprep.subr.mxu0 0.0
    %2490 = vmatpush2.xpose.msra.mxu0 0.0
    %2491 = vmatprep.mubr.f32.mxu0 %v2004
    %2492 = vmatmul.mubr.f32.gmra.mxu0 %v2003
    %v2493 = vpop.f32.mrf.mxu0
    %v2494 = vadd.f32 %v2424, %v2493
    %v2495 = vpop.f32.mrf.mxu0
    %2496 = vdwg.mxu0
    %2497 = vmatprep.subr.mxu0 0.0
    %2498 = vmatpush1.xpose.msra.mxu0 0.0
    %2499 = vmatprep.subr.mxu0 0.0
    %2500 = vmatpush1.xpose.msra.mxu0 0.0
    %2501 = vmatprep.subr.mxu0 0.0
    %2502 = vmatpush1.xpose.msra.mxu0 0.0
    %2503 = vmatprep.subr.mxu0 0.0
    %2504 = vmatpush1.xpose.msra.mxu0 0.0
    %2505 = vmatprep.subr.mxu0 0.0
    %2506 = vmatpush1.xpose.msra.mxu0 0.0
    %2507 = vmatprep.subr.mxu0 0.0
    %2508 = vmatpush1.xpose.msra.mxu0 0.0
    %2509 = vmatprep.subr.mxu0 0.0
    %2510 = vmatpush1.xpose.msra.mxu0 0.0
    %2511 = vmatprep.subr.mxu0 0.0
    %2512 = vmatpush1.xpose.msra.mxu0 0.0
    %2513 = vmatprep.subr.mxu0 0.0
    %2514 = vmatpush1.xpose.msra.mxu0 0.0
    %2515 = vmatprep.subr.mxu0 0.0
    %2516 = vmatpush1.xpose.msra.mxu0 0.0
    %2517 = vmatprep.subr.mxu0 0.0
    %2518 = vmatpush1.xpose.msra.mxu0 0.0
    %2519 = vmatprep.subr.mxu0 0.0
    %2520 = vmatpush1.xpose.msra.mxu0 0.0
    %2521 = vmatprep.subr.mxu0 0.0
    %2522 = vmatpush1.xpose.msra.mxu0 0.0
    %2523 = vmatprep.subr.mxu0 0.0
    %2524 = vmatpush1.xpose.msra.mxu0 0.0
    %2525 = vmatprep.subr.mxu0 0.0
    %2526 = vmatpush1.xpose.msra.mxu0 0.0
    %2527 = vmatprep.subr.mxu0 %v2059
    %2528 = vmatpush1.xpose.msra.mxu0 %v1963
    %2529 = vmatprep.subr.mxu0 0.0
    %2530 = vmatpush2.xpose.msra.mxu0 0.0
    %2531 = vmatprep.subr.mxu0 0.0
    %2532 = vmatpush2.xpose.msra.mxu0 0.0
    %2533 = vmatprep.subr.mxu0 0.0
    %2534 = vmatpush2.xpose.msra.mxu0 0.0
    %2535 = vmatprep.subr.mxu0 0.0
    %2536 = vmatpush2.xpose.msra.mxu0 0.0
    %2537 = vmatprep.subr.mxu0 0.0
    %2538 = vmatpush2.xpose.msra.mxu0 0.0
    %2539 = vmatprep.subr.mxu0 0.0
    %2540 = vmatpush2.xpose.msra.mxu0 0.0
    %2541 = vmatprep.subr.mxu0 0.0
    %2542 = vmatpush2.xpose.msra.mxu0 0.0
    %2543 = vmatprep.subr.mxu0 0.0
    %2544 = vmatpush2.xpose.msra.mxu0 0.0
    %2545 = vmatprep.subr.mxu0 0.0
    %2546 = vmatpush2.xpose.msra.mxu0 0.0
    %2547 = vmatprep.subr.mxu0 0.0
    %2548 = vmatpush2.xpose.msra.mxu0 0.0
    %2549 = vmatprep.subr.mxu0 0.0
    %2550 = vmatpush2.xpose.msra.mxu0 0.0
    %2551 = vmatprep.subr.mxu0 0.0
    %2552 = vmatpush2.xpose.msra.mxu0 0.0
    %2553 = vmatprep.subr.mxu0 0.0
    %2554 = vmatpush2.xpose.msra.mxu0 0.0
    %2555 = vmatprep.subr.mxu0 0.0
    %2556 = vmatpush2.xpose.msra.mxu0 0.0
    %2557 = vmatprep.subr.mxu0 0.0
    %2558 = vmatpush2.xpose.msra.mxu0 0.0
    %2559 = vmatprep.subr.mxu0 0.0
    %2560 = vmatpush2.xpose.msra.mxu0 0.0
    %2561 = vmatprep.mubr.f32.mxu0 %v2006
    %2562 = vmatmul.mubr.f32.gmra.mxu0 %v2005
    %v2563 = vpop.f32.mrf.mxu0
    %v2564 = vadd.f32 %v2494, %v2563
    %v2565 = vpop.f32.mrf.mxu0
    %2566 = vdwg.mxu0
    %2567 = vmatprep.subr.mxu0 0.0
    %2568 = vmatpush1.xpose.msra.mxu0 0.0
    %2569 = vmatprep.subr.mxu0 0.0
    %2570 = vmatpush1.xpose.msra.mxu0 0.0
    %2571 = vmatprep.subr.mxu0 0.0
    %2572 = vmatpush1.xpose.msra.mxu0 0.0
    %2573 = vmatprep.subr.mxu0 0.0
    %2574 = vmatpush1.xpose.msra.mxu0 0.0
    %2575 = vmatprep.subr.mxu0 0.0
    %2576 = vmatpush1.xpose.msra.mxu0 0.0
    %2577 = vmatprep.subr.mxu0 0.0
    %2578 = vmatpush1.xpose.msra.mxu0 0.0
    %2579 = vmatprep.subr.mxu0 0.0
    %2580 = vmatpush1.xpose.msra.mxu0 0.0
    %2581 = vmatprep.subr.mxu0 0.0
    %2582 = vmatpush1.xpose.msra.mxu0 0.0
    %2583 = vmatprep.subr.mxu0 0.0
    %2584 = vmatpush1.xpose.msra.mxu0 0.0
    %2585 = vmatprep.subr.mxu0 0.0
    %2586 = vmatpush1.xpose.msra.mxu0 0.0
    %2587 = vmatprep.subr.mxu0 0.0
    %2588 = vmatpush1.xpose.msra.mxu0 0.0
    %2589 = vmatprep.subr.mxu0 0.0
    %2590 = vmatpush1.xpose.msra.mxu0 0.0
    %2591 = vmatprep.subr.mxu0 0.0
    %2592 = vmatpush1.xpose.msra.mxu0 0.0
    %2593 = vmatprep.subr.mxu0 0.0
    %2594 = vmatpush1.xpose.msra.mxu0 0.0
    %2595 = vmatprep.subr.mxu0 0.0
    %2596 = vmatpush1.xpose.msra.mxu0 0.0
    %2597 = vmatprep.subr.mxu0 %v2060
    %2598 = vmatpush1.xpose.msra.mxu0 %v1964
    %2599 = vmatprep.subr.mxu0 0.0
    %2600 = vmatpush2.xpose.msra.mxu0 0.0
    %2601 = vmatprep.subr.mxu0 0.0
    %2602 = vmatpush2.xpose.msra.mxu0 0.0
    %2603 = vmatprep.subr.mxu0 0.0
    %2604 = vmatpush2.xpose.msra.mxu0 0.0
    %2605 = vmatprep.subr.mxu0 0.0
    %2606 = vmatpush2.xpose.msra.mxu0 0.0
    %2607 = vmatprep.subr.mxu0 0.0
    %2608 = vmatpush2.xpose.msra.mxu0 0.0
    %2609 = vmatprep.subr.mxu0 0.0
    %2610 = vmatpush2.xpose.msra.mxu0 0.0
    %2611 = vmatprep.subr.mxu0 0.0
    %2612 = vmatpush2.xpose.msra.mxu0 0.0
    %2613 = vmatprep.subr.mxu0 0.0
    %2614 = vmatpush2.xpose.msra.mxu0 0.0
    %2615 = vmatprep.subr.mxu0 0.0
    %2616 = vmatpush2.xpose.msra.mxu0 0.0
    %2617 = vmatprep.subr.mxu0 0.0
    %2618 = vmatpush2.xpose.msra.mxu0 0.0
    %2619 = vmatprep.subr.mxu0 0.0
    %2620 = vmatpush2.xpose.msra.mxu0 0.0
    %2621 = vmatprep.subr.mxu0 0.0
    %2622 = vmatpush2.xpose.msra.mxu0 0.0
    %2623 = vmatprep.subr.mxu0 0.0
    %2624 = vmatpush2.xpose.msra.mxu0 0.0
    %2625 = vmatprep.subr.mxu0 0.0
    %2626 = vmatpush2.xpose.msra.mxu0 0.0
    %2627 = vmatprep.subr.mxu0 0.0
    %2628 = vmatpush2.xpose.msra.mxu0 0.0
    %2629 = vmatprep.subr.mxu0 0.0
    %2630 = vmatpush2.xpose.msra.mxu0 0.0
    %2631 = vmatprep.mubr.f32.mxu0 %v2008
    %2632 = vmatmul.mubr.f32.gmra.mxu0 %v2007
    %v2633 = vpop.f32.mrf.mxu0
    %v2634 = vadd.f32 %v2564, %v2633
    %v2635 = vpop.f32.mrf.mxu0
    %2636 = vdwg.mxu0
    %2637 = vmatprep.subr.mxu0 0.0
    %2638 = vmatpush1.xpose.msra.mxu0 0.0
    %2639 = vmatprep.subr.mxu0 0.0
    %2640 = vmatpush1.xpose.msra.mxu0 0.0
    %2641 = vmatprep.subr.mxu0 0.0
    %2642 = vmatpush1.xpose.msra.mxu0 0.0
    %2643 = vmatprep.subr.mxu0 0.0
    %2644 = vmatpush1.xpose.msra.mxu0 0.0
    %2645 = vmatprep.subr.mxu0 0.0
    %2646 = vmatpush1.xpose.msra.mxu0 0.0
    %2647 = vmatprep.subr.mxu0 0.0
    %2648 = vmatpush1.xpose.msra.mxu0 0.0
    %2649 = vmatprep.subr.mxu0 0.0
    %2650 = vmatpush1.xpose.msra.mxu0 0.0
    %2651 = vmatprep.subr.mxu0 0.0
    %2652 = vmatpush1.xpose.msra.mxu0 0.0
    %2653 = vmatprep.subr.mxu0 0.0
    %2654 = vmatpush1.xpose.msra.mxu0 0.0
    %2655 = vmatprep.subr.mxu0 0.0
    %2656 = vmatpush1.xpose.msra.mxu0 0.0
    %2657 = vmatprep.subr.mxu0 0.0
    %2658 = vmatpush1.xpose.msra.mxu0 0.0
    %2659 = vmatprep.subr.mxu0 0.0
    %2660 = vmatpush1.xpose.msra.mxu0 0.0
    %2661 = vmatprep.subr.mxu0 0.0
    %2662 = vmatpush1.xpose.msra.mxu0 0.0
    %2663 = vmatprep.subr.mxu0 0.0
    %2664 = vmatpush1.xpose.msra.mxu0 0.0
    %2665 = vmatprep.subr.mxu0 0.0
    %2666 = vmatpush1.xpose.msra.mxu0 0.0
    %2667 = vmatprep.subr.mxu0 %v2061
    %2668 = vmatpush1.xpose.msra.mxu0 %v1965
    %2669 = vmatprep.subr.mxu0 0.0
    %2670 = vmatpush2.xpose.msra.mxu0 0.0
    %2671 = vmatprep.subr.mxu0 0.0
    %2672 = vmatpush2.xpose.msra.mxu0 0.0
    %2673 = vmatprep.subr.mxu0 0.0
    %2674 = vmatpush2.xpose.msra.mxu0 0.0
    %2675 = vmatprep.subr.mxu0 0.0
    %2676 = vmatpush2.xpose.msra.mxu0 0.0
    %2677 = vmatprep.subr.mxu0 0.0
    %2678 = vmatpush2.xpose.msra.mxu0 0.0
    %2679 = vmatprep.subr.mxu0 0.0
    %2680 = vmatpush2.xpose.msra.mxu0 0.0
    %2681 = vmatprep.subr.mxu0 0.0
    %2682 = vmatpush2.xpose.msra.mxu0 0.0
    %2683 = vmatprep.subr.mxu0 0.0
    %2684 = vmatpush2.xpose.msra.mxu0 0.0
    %2685 = vmatprep.subr.mxu0 0.0
    %2686 = vmatpush2.xpose.msra.mxu0 0.0
    %2687 = vmatprep.subr.mxu0 0.0
    %2688 = vmatpush2.xpose.msra.mxu0 0.0
    %2689 = vmatprep.subr.mxu0 0.0
    %2690 = vmatpush2.xpose.msra.mxu0 0.0
    %2691 = vmatprep.subr.mxu0 0.0
    %2692 = vmatpush2.xpose.msra.mxu0 0.0
    %2693 = vmatprep.subr.mxu0 0.0
    %2694 = vmatpush2.xpose.msra.mxu0 0.0
    %2695 = vmatprep.subr.mxu0 0.0
    %2696 = vmatpush2.xpose.msra.mxu0 0.0
    %2697 = vmatprep.subr.mxu0 0.0
    %2698 = vmatpush2.xpose.msra.mxu0 0.0
    %2699 = vmatprep.subr.mxu0 0.0
    %2700 = vmatpush2.xpose.msra.mxu0 0.0
    %2701 = vmatprep.mubr.f32.mxu0 %v2010
    %2702 = vmatmul.mubr.f32.gmra.mxu0 %v2009
    %v2703 = vpop.f32.mrf.mxu0
    %v2704 = vadd.f32 %v2634, %v2703
    %v2705 = vpop.f32.mrf.mxu0
    %2706 = vdwg.mxu0
    %2707 = vmatprep.subr.mxu0 0.0
    %2708 = vmatpush1.xpose.msra.mxu0 0.0
    %2709 = vmatprep.subr.mxu0 0.0
    %2710 = vmatpush1.xpose.msra.mxu0 0.0
    %2711 = vmatprep.subr.mxu0 0.0
    %2712 = vmatpush1.xpose.msra.mxu0 0.0
    %2713 = vmatprep.subr.mxu0 0.0
    %2714 = vmatpush1.xpose.msra.mxu0 0.0
    %2715 = vmatprep.subr.mxu0 0.0
    %2716 = vmatpush1.xpose.msra.mxu0 0.0
    %2717 = vmatprep.subr.mxu0 0.0
    %2718 = vmatpush1.xpose.msra.mxu0 0.0
    %2719 = vmatprep.subr.mxu0 0.0
    %2720 = vmatpush1.xpose.msra.mxu0 0.0
    %2721 = vmatprep.subr.mxu0 0.0
    %2722 = vmatpush1.xpose.msra.mxu0 0.0
    %2723 = vmatprep.subr.mxu0 0.0
    %2724 = vmatpush1.xpose.msra.mxu0 0.0
    %2725 = vmatprep.subr.mxu0 0.0
    %2726 = vmatpush1.xpose.msra.mxu0 0.0
    %2727 = vmatprep.subr.mxu0 0.0
    %2728 = vmatpush1.xpose.msra.mxu0 0.0
    %2729 = vmatprep.subr.mxu0 0.0
    %2730 = vmatpush1.xpose.msra.mxu0 0.0
    %2731 = vmatprep.subr.mxu0 0.0
    %2732 = vmatpush1.xpose.msra.mxu0 0.0
    %2733 = vmatprep.subr.mxu0 0.0
    %2734 = vmatpush1.xpose.msra.mxu0 0.0
    %2735 = vmatprep.subr.mxu0 0.0
    %2736 = vmatpush1.xpose.msra.mxu0 0.0
    %2737 = vmatprep.subr.mxu0 %v2062
    %2738 = vmatpush1.xpose.msra.mxu0 %v1966
    %2739 = vmatprep.subr.mxu0 0.0
    %2740 = vmatpush2.xpose.msra.mxu0 0.0
    %2741 = vmatprep.subr.mxu0 0.0
    %2742 = vmatpush2.xpose.msra.mxu0 0.0
    %2743 = vmatprep.subr.mxu0 0.0
    %2744 = vmatpush2.xpose.msra.mxu0 0.0
    %2745 = vmatprep.subr.mxu0 0.0
    %2746 = vmatpush2.xpose.msra.mxu0 0.0
    %2747 = vmatprep.subr.mxu0 0.0
    %2748 = vmatpush2.xpose.msra.mxu0 0.0
    %2749 = vmatprep.subr.mxu0 0.0
    %2750 = vmatpush2.xpose.msra.mxu0 0.0
    %2751 = vmatprep.subr.mxu0 0.0
    %2752 = vmatpush2.xpose.msra.mxu0 0.0
    %2753 = vmatprep.subr.mxu0 0.0
    %2754 = vmatpush2.xpose.msra.mxu0 0.0
    %2755 = vmatprep.subr.mxu0 0.0
    %2756 = vmatpush2.xpose.msra.mxu0 0.0
    %2757 = vmatprep.subr.mxu0 0.0
    %2758 = vmatpush2.xpose.msra.mxu0 0.0
    %2759 = vmatprep.subr.mxu0 0.0
    %2760 = vmatpush2.xpose.msra.mxu0 0.0
    %2761 = vmatprep.subr.mxu0 0.0
    %2762 = vmatpush2.xpose.msra.mxu0 0.0
    %2763 = vmatprep.subr.mxu0 0.0
    %2764 = vmatpush2.xpose.msra.mxu0 0.0
    %2765 = vmatprep.subr.mxu0 0.0
    %2766 = vmatpush2.xpose.msra.mxu0 0.0
    %2767 = vmatprep.subr.mxu0 0.0
    %2768 = vmatpush2.xpose.msra.mxu0 0.0
    %2769 = vmatprep.subr.mxu0 0.0
    %2770 = vmatpush2.xpose.msra.mxu0 0.0
    %2771 = vmatprep.mubr.f32.mxu0 %v2012
    %2772 = vmatmul.mubr.f32.gmra.mxu0 %v2011
    %v2773 = vpop.f32.mrf.mxu0
    %v2774 = vadd.f32 %v2704, %v2773
    %v2775 = vpop.f32.mrf.mxu0
    %2776 = vdwg.mxu0
    %2777 = vmatprep.subr.mxu0 0.0
    %2778 = vmatpush1.xpose.msra.mxu0 0.0
    %2779 = vmatprep.subr.mxu0 0.0
    %2780 = vmatpush1.xpose.msra.mxu0 0.0
    %2781 = vmatprep.subr.mxu0 0.0
    %2782 = vmatpush1.xpose.msra.mxu0 0.0
    %2783 = vmatprep.subr.mxu0 0.0
    %2784 = vmatpush1.xpose.msra.mxu0 0.0
    %2785 = vmatprep.subr.mxu0 0.0
    %2786 = vmatpush1.xpose.msra.mxu0 0.0
    %2787 = vmatprep.subr.mxu0 0.0
    %2788 = vmatpush1.xpose.msra.mxu0 0.0
    %2789 = vmatprep.subr.mxu0 0.0
    %2790 = vmatpush1.xpose.msra.mxu0 0.0
    %2791 = vmatprep.subr.mxu0 0.0
    %2792 = vmatpush1.xpose.msra.mxu0 0.0
    %2793 = vmatprep.subr.mxu0 0.0
    %2794 = vmatpush1.xpose.msra.mxu0 0.0
    %2795 = vmatprep.subr.mxu0 0.0
    %2796 = vmatpush1.xpose.msra.mxu0 0.0
    %2797 = vmatprep.subr.mxu0 0.0
    %2798 = vmatpush1.xpose.msra.mxu0 0.0
    %2799 = vmatprep.subr.mxu0 0.0
    %2800 = vmatpush1.xpose.msra.mxu0 0.0
    %2801 = vmatprep.subr.mxu0 0.0
    %2802 = vmatpush1.xpose.msra.mxu0 0.0
    %2803 = vmatprep.subr.mxu0 0.0
    %2804 = vmatpush1.xpose.msra.mxu0 0.0
    %2805 = vmatprep.subr.mxu0 0.0
    %2806 = vmatpush1.xpose.msra.mxu0 0.0
    %2807 = vmatprep.subr.mxu0 %v2063
    %2808 = vmatpush1.xpose.msra.mxu0 %v1967
    %2809 = vmatprep.subr.mxu0 0.0
    %2810 = vmatpush2.xpose.msra.mxu0 0.0
    %2811 = vmatprep.subr.mxu0 0.0
    %2812 = vmatpush2.xpose.msra.mxu0 0.0
    %2813 = vmatprep.subr.mxu0 0.0
    %2814 = vmatpush2.xpose.msra.mxu0 0.0
    %2815 = vmatprep.subr.mxu0 0.0
    %2816 = vmatpush2.xpose.msra.mxu0 0.0
    %2817 = vmatprep.subr.mxu0 0.0
    %2818 = vmatpush2.xpose.msra.mxu0 0.0
    %2819 = vmatprep.subr.mxu0 0.0
    %2820 = vmatpush2.xpose.msra.mxu0 0.0
    %2821 = vmatprep.subr.mxu0 0.0
    %2822 = vmatpush2.xpose.msra.mxu0 0.0
    %2823 = vmatprep.subr.mxu0 0.0
    %2824 = vmatpush2.xpose.msra.mxu0 0.0
    %2825 = vmatprep.subr.mxu0 0.0
    %2826 = vmatpush2.xpose.msra.mxu0 0.0
    %2827 = vmatprep.subr.mxu0 0.0
    %2828 = vmatpush2.xpose.msra.mxu0 0.0
    %2829 = vmatprep.subr.mxu0 0.0
    %2830 = vmatpush2.xpose.msra.mxu0 0.0
    %2831 = vmatprep.subr.mxu0 0.0
    %2832 = vmatpush2.xpose.msra.mxu0 0.0
    %2833 = vmatprep.subr.mxu0 0.0
    %2834 = vmatpush2.xpose.msra.mxu0 0.0
    %2835 = vmatprep.subr.mxu0 0.0
    %2836 = vmatpush2.xpose.msra.mxu0 0.0
    %2837 = vmatprep.subr.mxu0 0.0
    %2838 = vmatpush2.xpose.msra.mxu0 0.0
    %2839 = vmatprep.subr.mxu0 0.0
    %2840 = vmatpush2.xpose.msra.mxu0 0.0
    %2841 = vmatprep.mubr.f32.mxu0 %v2014
    %2842 = vmatmul.mubr.f32.gmra.mxu0 %v2013
    %v2843 = vpop.f32.mrf.mxu0
    %v2844 = vadd.f32 %v2774, %v2843
    %v2845 = vpop.f32.mrf.mxu0
    %2846 = vdwg.mxu0
    %2847 = vmatprep.subr.mxu0 0.0
    %2848 = vmatpush1.xpose.msra.mxu0 0.0
    %2849 = vmatprep.subr.mxu0 0.0
    %2850 = vmatpush1.xpose.msra.mxu0 0.0
    %2851 = vmatprep.subr.mxu0 0.0
    %2852 = vmatpush1.xpose.msra.mxu0 0.0
    %2853 = vmatprep.subr.mxu0 0.0
    %2854 = vmatpush1.xpose.msra.mxu0 0.0
    %2855 = vmatprep.subr.mxu0 0.0
    %2856 = vmatpush1.xpose.msra.mxu0 0.0
    %2857 = vmatprep.subr.mxu0 0.0
    %2858 = vmatpush1.xpose.msra.mxu0 0.0
    %2859 = vmatprep.subr.mxu0 0.0
    %2860 = vmatpush1.xpose.msra.mxu0 0.0
    %2861 = vmatprep.subr.mxu0 0.0
    %2862 = vmatpush1.xpose.msra.mxu0 0.0
    %2863 = vmatprep.subr.mxu0 0.0
    %2864 = vmatpush1.xpose.msra.mxu0 0.0
    %2865 = vmatprep.subr.mxu0 0.0
    %2866 = vmatpush1.xpose.msra.mxu0 0.0
    %2867 = vmatprep.subr.mxu0 0.0
    %2868 = vmatpush1.xpose.msra.mxu0 0.0
    %2869 = vmatprep.subr.mxu0 0.0
    %2870 = vmatpush1.xpose.msra.mxu0 0.0
    %2871 = vmatprep.subr.mxu0 0.0
    %2872 = vmatpush1.xpose.msra.mxu0 0.0
    %2873 = vmatprep.subr.mxu0 0.0
    %2874 = vmatpush1.xpose.msra.mxu0 0.0
    %2875 = vmatprep.subr.mxu0 0.0
    %2876 = vmatpush1.xpose.msra.mxu0 0.0
    %2877 = vmatprep.subr.mxu0 %v2064
    %2878 = vmatpush1.xpose.msra.mxu0 %v1968
    %2879 = vmatprep.subr.mxu0 0.0
    %2880 = vmatpush2.xpose.msra.mxu0 0.0
    %2881 = vmatprep.subr.mxu0 0.0
    %2882 = vmatpush2.xpose.msra.mxu0 0.0
    %2883 = vmatprep.subr.mxu0 0.0
    %2884 = vmatpush2.xpose.msra.mxu0 0.0
    %2885 = vmatprep.subr.mxu0 0.0
    %2886 = vmatpush2.xpose.msra.mxu0 0.0
    %2887 = vmatprep.subr.mxu0 0.0
    %2888 = vmatpush2.xpose.msra.mxu0 0.0
    %2889 = vmatprep.subr.mxu0 0.0
    %2890 = vmatpush2.xpose.msra.mxu0 0.0
    %2891 = vmatprep.subr.mxu0 0.0
    %2892 = vmatpush2.xpose.msra.mxu0 0.0
    %2893 = vmatprep.subr.mxu0 0.0
    %2894 = vmatpush2.xpose.msra.mxu0 0.0
    %2895 = vmatprep.subr.mxu0 0.0
    %2896 = vmatpush2.xpose.msra.mxu0 0.0
    %2897 = vmatprep.subr.mxu0 0.0
    %2898 = vmatpush2.xpose.msra.mxu0 0.0
    %2899 = vmatprep.subr.mxu0 0.0
    %2900 = vmatpush2.xpose.msra.mxu0 0.0
    %2901 = vmatprep.subr.mxu0 0.0
    %2902 = vmatpush2.xpose.msra.mxu0 0.0
    %2903 = vmatprep.subr.mxu0 0.0
    %2904 = vmatpush2.xpose.msra.mxu0 0.0
    %2905 = vmatprep.subr.mxu0 0.0
    %2906 = vmatpush2.xpose.msra.mxu0 0.0
    %2907 = vmatprep.subr.mxu0 0.0
    %2908 = vmatpush2.xpose.msra.mxu0 0.0
    %2909 = vmatprep.subr.mxu0 0.0
    %2910 = vmatpush2.xpose.msra.mxu0 0.0
    %2911 = vmatprep.mubr.f32.mxu0 %v2016
    %2912 = vmatmul.mubr.f32.gmra.mxu0 %v2015
    %v2913 = vpop.f32.mrf.mxu0
    %v2914 = vadd.f32 %v2844, %v2913
    %v2915 = vpop.f32.mrf.mxu0
    %2916 = vdwg.mxu0
    %v2917 = vadd.f32 %v1929, %v2914
    %v2918 = vstv %s31
    %v2919 = vadd.f32 %v2917, %v2918
    %s2920 = scalar_lea.vmem %s0, 192
    %v2921 = vld [vmem:[%s2920] sm:$0xf]
    %v2922 = vld [vmem:[%s2920 + $0x8] sm:$0xf]
    %v2923 = vld [vmem:[%s2920 + $0x10] sm:$0xf]
    %v2924 = vld [vmem:[%s2920 + $0x18] sm:$0xf]
    %v2925 = vld [vmem:[%s2920 + $0x20] sm:$0xf]
    %v2926 = vld [vmem:[%s2920 + $0x28] sm:$0xf]
    %v2927 = vld [vmem:[%s2920 + $0x30] sm:$0xf]
    %v2928 = vld [vmem:[%s2920 + $0x38] sm:$0xf]
    %v2929 = vld [vmem:[%s2920 + $0x40] sm:$0xf]
    %v2930 = vld [vmem:[%s2920 + $0x48] sm:$0xf]
    %v2931 = vld [vmem:[%s2920 + $0x50] sm:$0xf]
    %v2932 = vld [vmem:[%s2920 + $0x58] sm:$0xf]
    %v2933 = vld [vmem:[%s2920 + $0x60] sm:$0xf]
    %v2934 = vld [vmem:[%s2920 + $0x68] sm:$0xf]
    %v2935 = vld [vmem:[%s2920 + $0x70] sm:$0xf]
    %v2936 = vld [vmem:[%s2920 + $0x78] sm:$0xf]
    %v2937 = vld [vmem:[%s2920 + $0x80] sm:$0xf]
    %v2938 = vld [vmem:[%s2920 + $0x88] sm:$0xf]
    %v2939 = vld [vmem:[%s2920 + $0x90] sm:$0xf]
    %v2940 = vld [vmem:[%s2920 + $0x98] sm:$0xf]
    %v2941 = vld [vmem:[%s2920 + $0xa0] sm:$0xf]
    %v2942 = vld [vmem:[%s2920 + $0xa8] sm:$0xf]
    %v2943 = vld [vmem:[%s2920 + $0xb0] sm:$0xf]
    %v2944 = vld [vmem:[%s2920 + $0xb8] sm:$0xf]
    %v2945 = vld [vmem:[%s2920] sm:$0x1e]
    %v2946 = vld [vmem:[%s2920 + $0x8] sm:$0x1e]
    %v2947 = vld [vmem:[%s2920 + $0x10] sm:$0x1e]
    %v2948 = vld [vmem:[%s2920 + $0x18] sm:$0x1e]
    %v2949 = vld [vmem:[%s2920 + $0x20] sm:$0x1e]
    %v2950 = vld [vmem:[%s2920 + $0x28] sm:$0x1e]
    %v2951 = vld [vmem:[%s2920 + $0x30] sm:$0x1e]
    %v2952 = vld [vmem:[%s2920 + $0x38] sm:$0x1e]
    %v2953 = vld [vmem:[%s2920 + $0x40] sm:$0x1e]
    %v2954 = vld [vmem:[%s2920 + $0x48] sm:$0x1e]
    %v2955 = vld [vmem:[%s2920 + $0x50] sm:$0x1e]
    %v2956 = vld [vmem:[%s2920 + $0x58] sm:$0x1e]
    %v2957 = vld [vmem:[%s2920 + $0x60] sm:$0x1e]
    %v2958 = vld [vmem:[%s2920 + $0x68] sm:$0x1e]
    %v2959 = vld [vmem:[%s2920 + $0x70] sm:$0x1e]
    %v2960 = vld [vmem:[%s2920 + $0x78] sm:$0x1e]
    %v2961 = vld [vmem:[%s2920 + $0x80] sm:$0x1e]
    %v2962 = vld [vmem:[%s2920 + $0x88] sm:$0x1e]
    %v2963 = vld [vmem:[%s2920 + $0x90] sm:$0x1e]
    %v2964 = vld [vmem:[%s2920 + $0x98] sm:$0x1e]
    %v2965 = vld [vmem:[%s2920 + $0xa0] sm:$0x1e]
    %v2966 = vld [vmem:[%s2920 + $0xa8] sm:$0x1e]
    %v2967 = vld [vmem:[%s2920 + $0xb0] sm:$0x1e]
    %v2968 = vld [vmem:[%s2920 + $0xb8] sm:$0x1e]
    %v2993 = vrot.slane %v2945, 1
    %v2994 = vrot.slane %v2946, 1
    %v2995 = vrot.slane %v2947, 1
    %v2996 = vrot.slane %v2948, 1
    %v2997 = vrot.slane %v2949, 1
    %v2998 = vrot.slane %v2950, 1
    %v2999 = vrot.slane %v2951, 1
    %v3000 = vrot.slane %v2952, 1
    %v3001 = vrot.slane %v2953, 1
    %v3002 = vrot.slane %v2954, 1
    %v3003 = vrot.slane %v2955, 1
    %v3004 = vrot.slane %v2956, 1
    %v3005 = vrot.slane %v2957, 1
    %v3006 = vrot.slane %v2958, 1
    %v3007 = vrot.slane %v2959, 1
    %v3008 = vrot.slane %v2960, 1
    %v3009 = vrot.slane %v2961, 1
    %v3010 = vrot.slane %v2962, 1
    %v3011 = vrot.slane %v2963, 1
    %v3012 = vrot.slane %v2964, 1
    %v3013 = vrot.slane %v2965, 1
    %v3014 = vrot.slane %v2966, 1
    %v3015 = vrot.slane %v2967, 1
    %v3016 = vrot.slane %v2968, 1
    %3041 = vmatprep.subr.mxu0 0.0
    %3042 = vmatpush1.xpose.msra.mxu0 0.0
    %3043 = vmatprep.subr.mxu0 0.0
    %3044 = vmatpush1.xpose.msra.mxu0 0.0
    %3045 = vmatprep.subr.mxu0 0.0
    %3046 = vmatpush1.xpose.msra.mxu0 0.0
    %3047 = vmatprep.subr.mxu0 0.0
    %3048 = vmatpush1.xpose.msra.mxu0 0.0
    %3049 = vmatprep.subr.mxu0 0.0
    %3050 = vmatpush1.xpose.msra.mxu0 0.0
    %3051 = vmatprep.subr.mxu0 0.0
    %3052 = vmatpush1.xpose.msra.mxu0 0.0
    %3053 = vmatprep.subr.mxu0 0.0
    %3054 = vmatpush1.xpose.msra.mxu0 0.0
    %3055 = vmatprep.subr.mxu0 0.0
    %3056 = vmatpush1.xpose.msra.mxu0 0.0
    %3057 = vmatprep.subr.mxu0 0.0
    %3058 = vmatpush1.xpose.msra.mxu0 0.0
    %3059 = vmatprep.subr.mxu0 0.0
    %3060 = vmatpush1.xpose.msra.mxu0 0.0
    %3061 = vmatprep.subr.mxu0 0.0
    %3062 = vmatpush1.xpose.msra.mxu0 0.0
    %3063 = vmatprep.subr.mxu0 0.0
    %3064 = vmatpush1.xpose.msra.mxu0 0.0
    %3065 = vmatprep.subr.mxu0 0.0
    %3066 = vmatpush1.xpose.msra.mxu0 0.0
    %3067 = vmatprep.subr.mxu0 0.0
    %3068 = vmatpush1.xpose.msra.mxu0 0.0
    %3069 = vmatprep.subr.mxu0 0.0
    %3070 = vmatpush1.xpose.msra.mxu0 0.0
    %3071 = vmatprep.subr.mxu0 %v192
    %3072 = vmatpush1.xpose.msra.mxu0 %v96
    %3073 = vmatprep.subr.mxu0 0.0
    %3074 = vmatpush2.xpose.msra.mxu0 0.0
    %3075 = vmatprep.subr.mxu0 0.0
    %3076 = vmatpush2.xpose.msra.mxu0 0.0
    %3077 = vmatprep.subr.mxu0 0.0
    %3078 = vmatpush2.xpose.msra.mxu0 0.0
    %3079 = vmatprep.subr.mxu0 0.0
    %3080 = vmatpush2.xpose.msra.mxu0 0.0
    %3081 = vmatprep.subr.mxu0 0.0
    %3082 = vmatpush2.xpose.msra.mxu0 0.0
    %3083 = vmatprep.subr.mxu0 0.0
    %3084 = vmatpush2.xpose.msra.mxu0 0.0
    %3085 = vmatprep.subr.mxu0 0.0
    %3086 = vmatpush2.xpose.msra.mxu0 0.0
    %3087 = vmatprep.subr.mxu0 0.0
    %3088 = vmatpush2.xpose.msra.mxu0 0.0
    %3089 = vmatprep.subr.mxu0 0.0
    %3090 = vmatpush2.xpose.msra.mxu0 0.0
    %3091 = vmatprep.subr.mxu0 0.0
    %3092 = vmatpush2.xpose.msra.mxu0 0.0
    %3093 = vmatprep.subr.mxu0 0.0
    %3094 = vmatpush2.xpose.msra.mxu0 0.0
    %3095 = vmatprep.subr.mxu0 0.0
    %3096 = vmatpush2.xpose.msra.mxu0 0.0
    %3097 = vmatprep.subr.mxu0 0.0
    %3098 = vmatpush2.xpose.msra.mxu0 0.0
    %3099 = vmatprep.subr.mxu0 0.0
    %3100 = vmatpush2.xpose.msra.mxu0 0.0
    %3101 = vmatprep.subr.mxu0 0.0
    %3102 = vmatpush2.xpose.msra.mxu0 0.0
    %3103 = vmatprep.subr.mxu0 0.0
    %3104 = vmatpush2.xpose.msra.mxu0 0.0
    %3105 = vmatprep.mubr.f32.mxu0 %v2994
    %3106 = vmatmul.mubr.f32.gmra.mxu0 %v2993
    %v3107 = vpop.f32.mrf.mxu0
    %v3108 = vadd.f32 0.0, %v3107
    %v3109 = vpop.f32.mrf.mxu0
    %3110 = vdwg.mxu0
    %3111 = vmatprep.subr.mxu0 0.0
    %3112 = vmatpush1.xpose.msra.mxu0 0.0
    %3113 = vmatprep.subr.mxu0 0.0
    %3114 = vmatpush1.xpose.msra.mxu0 0.0
    %3115 = vmatprep.subr.mxu0 0.0
    %3116 = vmatpush1.xpose.msra.mxu0 0.0
    %3117 = vmatprep.subr.mxu0 0.0
    %3118 = vmatpush1.xpose.msra.mxu0 0.0
    %3119 = vmatprep.subr.mxu0 0.0
    %3120 = vmatpush1.xpose.msra.mxu0 0.0
    %3121 = vmatprep.subr.mxu0 0.0
    %3122 = vmatpush1.xpose.msra.mxu0 0.0
    %3123 = vmatprep.subr.mxu0 0.0
    %3124 = vmatpush1.xpose.msra.mxu0 0.0
    %3125 = vmatprep.subr.mxu0 0.0
    %3126 = vmatpush1.xpose.msra.mxu0 0.0
    %3127 = vmatprep.subr.mxu0 0.0
    %3128 = vmatpush1.xpose.msra.mxu0 0.0
    %3129 = vmatprep.subr.mxu0 0.0
    %3130 = vmatpush1.xpose.msra.mxu0 0.0
    %3131 = vmatprep.subr.mxu0 0.0
    %3132 = vmatpush1.xpose.msra.mxu0 0.0
    %3133 = vmatprep.subr.mxu0 0.0
    %3134 = vmatpush1.xpose.msra.mxu0 0.0
    %3135 = vmatprep.subr.mxu0 0.0
    %3136 = vmatpush1.xpose.msra.mxu0 0.0
    %3137 = vmatprep.subr.mxu0 0.0
    %3138 = vmatpush1.xpose.msra.mxu0 0.0
    %3139 = vmatprep.subr.mxu0 0.0
    %3140 = vmatpush1.xpose.msra.mxu0 0.0
    %3141 = vmatprep.subr.mxu0 %v193
    %3142 = vmatpush1.xpose.msra.mxu0 %v97
    %3143 = vmatprep.subr.mxu0 0.0
    %3144 = vmatpush2.xpose.msra.mxu0 0.0
    %3145 = vmatprep.subr.mxu0 0.0
    %3146 = vmatpush2.xpose.msra.mxu0 0.0
    %3147 = vmatprep.subr.mxu0 0.0
    %3148 = vmatpush2.xpose.msra.mxu0 0.0
    %3149 = vmatprep.subr.mxu0 0.0
    %3150 = vmatpush2.xpose.msra.mxu0 0.0
    %3151 = vmatprep.subr.mxu0 0.0
    %3152 = vmatpush2.xpose.msra.mxu0 0.0
    %3153 = vmatprep.subr.mxu0 0.0
    %3154 = vmatpush2.xpose.msra.mxu0 0.0
    %3155 = vmatprep.subr.mxu0 0.0
    %3156 = vmatpush2.xpose.msra.mxu0 0.0
    %3157 = vmatprep.subr.mxu0 0.0
    %3158 = vmatpush2.xpose.msra.mxu0 0.0
    %3159 = vmatprep.subr.mxu0 0.0
    %3160 = vmatpush2.xpose.msra.mxu0 0.0
    %3161 = vmatprep.subr.mxu0 0.0
    %3162 = vmatpush2.xpose.msra.mxu0 0.0
    %3163 = vmatprep.subr.mxu0 0.0
    %3164 = vmatpush2.xpose.msra.mxu0 0.0
    %3165 = vmatprep.subr.mxu0 0.0
    %3166 = vmatpush2.xpose.msra.mxu0 0.0
    %3167 = vmatprep.subr.mxu0 0.0
    %3168 = vmatpush2.xpose.msra.mxu0 0.0
    %3169 = vmatprep.subr.mxu0 0.0
    %3170 = vmatpush2.xpose.msra.mxu0 0.0
    %3171 = vmatprep.subr.mxu0 0.0
    %3172 = vmatpush2.xpose.msra.mxu0 0.0
    %3173 = vmatprep.subr.mxu0 0.0
    %3174 = vmatpush2.xpose.msra.mxu0 0.0
    %3175 = vmatprep.mubr.f32.mxu0 %v2996
    %3176 = vmatmul.mubr.f32.gmra.mxu0 %v2995
    %v3177 = vpop.f32.mrf.mxu0
    %v3178 = vadd.f32 %v3108, %v3177
    %v3179 = vpop.f32.mrf.mxu0
    %3180 = vdwg.mxu0
    %3181 = vmatprep.subr.mxu0 0.0
    %3182 = vmatpush1.xpose.msra.mxu0 0.0
    %3183 = vmatprep.subr.mxu0 0.0
    %3184 = vmatpush1.xpose.msra.mxu0 0.0
    %3185 = vmatprep.subr.mxu0 0.0
    %3186 = vmatpush1.xpose.msra.mxu0 0.0
    %3187 = vmatprep.subr.mxu0 0.0
    %3188 = vmatpush1.xpose.msra.mxu0 0.0
    %3189 = vmatprep.subr.mxu0 0.0
    %3190 = vmatpush1.xpose.msra.mxu0 0.0
    %3191 = vmatprep.subr.mxu0 0.0
    %3192 = vmatpush1.xpose.msra.mxu0 0.0
    %3193 = vmatprep.subr.mxu0 0.0
    %3194 = vmatpush1.xpose.msra.mxu0 0.0
    %3195 = vmatprep.subr.mxu0 0.0
    %3196 = vmatpush1.xpose.msra.mxu0 0.0
    %3197 = vmatprep.subr.mxu0 0.0
    %3198 = vmatpush1.xpose.msra.mxu0 0.0
    %3199 = vmatprep.subr.mxu0 0.0
    %3200 = vmatpush1.xpose.msra.mxu0 0.0
    %3201 = vmatprep.subr.mxu0 0.0
    %3202 = vmatpush1.xpose.msra.mxu0 0.0
    %3203 = vmatprep.subr.mxu0 0.0
    %3204 = vmatpush1.xpose.msra.mxu0 0.0
    %3205 = vmatprep.subr.mxu0 0.0
    %3206 = vmatpush1.xpose.msra.mxu0 0.0
    %3207 = vmatprep.subr.mxu0 0.0
    %3208 = vmatpush1.xpose.msra.mxu0 0.0
    %3209 = vmatprep.subr.mxu0 0.0
    %3210 = vmatpush1.xpose.msra.mxu0 0.0
    %3211 = vmatprep.subr.mxu0 %v194
    %3212 = vmatpush1.xpose.msra.mxu0 %v98
    %3213 = vmatprep.subr.mxu0 0.0
    %3214 = vmatpush2.xpose.msra.mxu0 0.0
    %3215 = vmatprep.subr.mxu0 0.0
    %3216 = vmatpush2.xpose.msra.mxu0 0.0
    %3217 = vmatprep.subr.mxu0 0.0
    %3218 = vmatpush2.xpose.msra.mxu0 0.0
    %3219 = vmatprep.subr.mxu0 0.0
    %3220 = vmatpush2.xpose.msra.mxu0 0.0
    %3221 = vmatprep.subr.mxu0 0.0
    %3222 = vmatpush2.xpose.msra.mxu0 0.0
    %3223 = vmatprep.subr.mxu0 0.0
    %3224 = vmatpush2.xpose.msra.mxu0 0.0
    %3225 = vmatprep.subr.mxu0 0.0
    %3226 = vmatpush2.xpose.msra.mxu0 0.0
    %3227 = vmatprep.subr.mxu0 0.0
    %3228 = vmatpush2.xpose.msra.mxu0 0.0
    %3229 = vmatprep.subr.mxu0 0.0
    %3230 = vmatpush2.xpose.msra.mxu0 0.0
    %3231 = vmatprep.subr.mxu0 0.0
    %3232 = vmatpush2.xpose.msra.mxu0 0.0
    %3233 = vmatprep.subr.mxu0 0.0
    %3234 = vmatpush2.xpose.msra.mxu0 0.0
    %3235 = vmatprep.subr.mxu0 0.0
    %3236 = vmatpush2.xpose.msra.mxu0 0.0
    %3237 = vmatprep.subr.mxu0 0.0
    %3238 = vmatpush2.xpose.msra.mxu0 0.0
    %3239 = vmatprep.subr.mxu0 0.0
    %3240 = vmatpush2.xpose.msra.mxu0 0.0
    %3241 = vmatprep.subr.mxu0 0.0
    %3242 = vmatpush2.xpose.msra.mxu0 0.0
    %3243 = vmatprep.subr.mxu0 0.0
    %3244 = vmatpush2.xpose.msra.mxu0 0.0
    %3245 = vmatprep.mubr.f32.mxu0 %v2998
    %3246 = vmatmul.mubr.f32.gmra.mxu0 %v2997
    %v3247 = vpop.f32.mrf.mxu0
    %v3248 = vadd.f32 %v3178, %v3247
    %v3249 = vpop.f32.mrf.mxu0
    %3250 = vdwg.mxu0
    %3251 = vmatprep.subr.mxu0 0.0
    %3252 = vmatpush1.xpose.msra.mxu0 0.0
    %3253 = vmatprep.subr.mxu0 0.0
    %3254 = vmatpush1.xpose.msra.mxu0 0.0
    %3255 = vmatprep.subr.mxu0 0.0
    %3256 = vmatpush1.xpose.msra.mxu0 0.0
    %3257 = vmatprep.subr.mxu0 0.0
    %3258 = vmatpush1.xpose.msra.mxu0 0.0
    %3259 = vmatprep.subr.mxu0 0.0
    %3260 = vmatpush1.xpose.msra.mxu0 0.0
    %3261 = vmatprep.subr.mxu0 0.0
    %3262 = vmatpush1.xpose.msra.mxu0 0.0
    %3263 = vmatprep.subr.mxu0 0.0
    %3264 = vmatpush1.xpose.msra.mxu0 0.0
    %3265 = vmatprep.subr.mxu0 0.0
    %3266 = vmatpush1.xpose.msra.mxu0 0.0
    %3267 = vmatprep.subr.mxu0 0.0
    %3268 = vmatpush1.xpose.msra.mxu0 0.0
    %3269 = vmatprep.subr.mxu0 0.0
    %3270 = vmatpush1.xpose.msra.mxu0 0.0
    %3271 = vmatprep.subr.mxu0 0.0
    %3272 = vmatpush1.xpose.msra.mxu0 0.0
    %3273 = vmatprep.subr.mxu0 0.0
    %3274 = vmatpush1.xpose.msra.mxu0 0.0
    %3275 = vmatprep.subr.mxu0 0.0
    %3276 = vmatpush1.xpose.msra.mxu0 0.0
    %3277 = vmatprep.subr.mxu0 0.0
    %3278 = vmatpush1.xpose.msra.mxu0 0.0
    %3279 = vmatprep.subr.mxu0 0.0
    %3280 = vmatpush1.xpose.msra.mxu0 0.0
    %3281 = vmatprep.subr.mxu0 %v195
    %3282 = vmatpush1.xpose.msra.mxu0 %v99
    %3283 = vmatprep.subr.mxu0 0.0
    %3284 = vmatpush2.xpose.msra.mxu0 0.0
    %3285 = vmatprep.subr.mxu0 0.0
    %3286 = vmatpush2.xpose.msra.mxu0 0.0
    %3287 = vmatprep.subr.mxu0 0.0
    %3288 = vmatpush2.xpose.msra.mxu0 0.0
    %3289 = vmatprep.subr.mxu0 0.0
    %3290 = vmatpush2.xpose.msra.mxu0 0.0
    %3291 = vmatprep.subr.mxu0 0.0
    %3292 = vmatpush2.xpose.msra.mxu0 0.0
    %3293 = vmatprep.subr.mxu0 0.0
    %3294 = vmatpush2.xpose.msra.mxu0 0.0
    %3295 = vmatprep.subr.mxu0 0.0
    %3296 = vmatpush2.xpose.msra.mxu0 0.0
    %3297 = vmatprep.subr.mxu0 0.0
    %3298 = vmatpush2.xpose.msra.mxu0 0.0
    %3299 = vmatprep.subr.mxu0 0.0
    %3300 = vmatpush2.xpose.msra.mxu0 0.0
    %3301 = vmatprep.subr.mxu0 0.0
    %3302 = vmatpush2.xpose.msra.mxu0 0.0
    %3303 = vmatprep.subr.mxu0 0.0
    %3304 = vmatpush2.xpose.msra.mxu0 0.0
    %3305 = vmatprep.subr.mxu0 0.0
    %3306 = vmatpush2.xpose.msra.mxu0 0.0
    %3307 = vmatprep.subr.mxu0 0.0
    %3308 = vmatpush2.xpose.msra.mxu0 0.0
    %3309 = vmatprep.subr.mxu0 0.0
    %3310 = vmatpush2.xpose.msra.mxu0 0.0
    %3311 = vmatprep.subr.mxu0 0.0
    %3312 = vmatpush2.xpose.msra.mxu0 0.0
    %3313 = vmatprep.subr.mxu0 0.0
    %3314 = vmatpush2.xpose.msra.mxu0 0.0
    %3315 = vmatprep.mubr.f32.mxu0 %v3000
    %3316 = vmatmul.mubr.f32.gmra.mxu0 %v2999
    %v3317 = vpop.f32.mrf.mxu0
    %v3318 = vadd.f32 %v3248, %v3317
    %v3319 = vpop.f32.mrf.mxu0
    %3320 = vdwg.mxu0
    %3321 = vmatprep.subr.mxu0 0.0
    %3322 = vmatpush1.xpose.msra.mxu0 0.0
    %3323 = vmatprep.subr.mxu0 0.0
    %3324 = vmatpush1.xpose.msra.mxu0 0.0
    %3325 = vmatprep.subr.mxu0 0.0
    %3326 = vmatpush1.xpose.msra.mxu0 0.0
    %3327 = vmatprep.subr.mxu0 0.0
    %3328 = vmatpush1.xpose.msra.mxu0 0.0
    %3329 = vmatprep.subr.mxu0 0.0
    %3330 = vmatpush1.xpose.msra.mxu0 0.0
    %3331 = vmatprep.subr.mxu0 0.0
    %3332 = vmatpush1.xpose.msra.mxu0 0.0
    %3333 = vmatprep.subr.mxu0 0.0
    %3334 = vmatpush1.xpose.msra.mxu0 0.0
    %3335 = vmatprep.subr.mxu0 0.0
    %3336 = vmatpush1.xpose.msra.mxu0 0.0
    %3337 = vmatprep.subr.mxu0 0.0
    %3338 = vmatpush1.xpose.msra.mxu0 0.0
    %3339 = vmatprep.subr.mxu0 0.0
    %3340 = vmatpush1.xpose.msra.mxu0 0.0
    %3341 = vmatprep.subr.mxu0 0.0
    %3342 = vmatpush1.xpose.msra.mxu0 0.0
    %3343 = vmatprep.subr.mxu0 0.0
    %3344 = vmatpush1.xpose.msra.mxu0 0.0
    %3345 = vmatprep.subr.mxu0 0.0
    %3346 = vmatpush1.xpose.msra.mxu0 0.0
    %3347 = vmatprep.subr.mxu0 0.0
    %3348 = vmatpush1.xpose.msra.mxu0 0.0
    %3349 = vmatprep.subr.mxu0 0.0
    %3350 = vmatpush1.xpose.msra.mxu0 0.0
    %3351 = vmatprep.subr.mxu0 %v196
    %3352 = vmatpush1.xpose.msra.mxu0 %v100
    %3353 = vmatprep.subr.mxu0 0.0
    %3354 = vmatpush2.xpose.msra.mxu0 0.0
    %3355 = vmatprep.subr.mxu0 0.0
    %3356 = vmatpush2.xpose.msra.mxu0 0.0
    %3357 = vmatprep.subr.mxu0 0.0
    %3358 = vmatpush2.xpose.msra.mxu0 0.0
    %3359 = vmatprep.subr.mxu0 0.0
    %3360 = vmatpush2.xpose.msra.mxu0 0.0
    %3361 = vmatprep.subr.mxu0 0.0
    %3362 = vmatpush2.xpose.msra.mxu0 0.0
    %3363 = vmatprep.subr.mxu0 0.0
    %3364 = vmatpush2.xpose.msra.mxu0 0.0
    %3365 = vmatprep.subr.mxu0 0.0
    %3366 = vmatpush2.xpose.msra.mxu0 0.0
    %3367 = vmatprep.subr.mxu0 0.0
    %3368 = vmatpush2.xpose.msra.mxu0 0.0
    %3369 = vmatprep.subr.mxu0 0.0
    %3370 = vmatpush2.xpose.msra.mxu0 0.0
    %3371 = vmatprep.subr.mxu0 0.0
    %3372 = vmatpush2.xpose.msra.mxu0 0.0
    %3373 = vmatprep.subr.mxu0 0.0
    %3374 = vmatpush2.xpose.msra.mxu0 0.0
    %3375 = vmatprep.subr.mxu0 0.0
    %3376 = vmatpush2.xpose.msra.mxu0 0.0
    %3377 = vmatprep.subr.mxu0 0.0
    %3378 = vmatpush2.xpose.msra.mxu0 0.0
    %3379 = vmatprep.subr.mxu0 0.0
    %3380 = vmatpush2.xpose.msra.mxu0 0.0
    %3381 = vmatprep.subr.mxu0 0.0
    %3382 = vmatpush2.xpose.msra.mxu0 0.0
    %3383 = vmatprep.subr.mxu0 0.0
    %3384 = vmatpush2.xpose.msra.mxu0 0.0
    %3385 = vmatprep.mubr.f32.mxu0 %v3002
    %3386 = vmatmul.mubr.f32.gmra.mxu0 %v3001
    %v3387 = vpop.f32.mrf.mxu0
    %v3388 = vadd.f32 %v3318, %v3387
    %v3389 = vpop.f32.mrf.mxu0
    %3390 = vdwg.mxu0
    %3391 = vmatprep.subr.mxu0 0.0
    %3392 = vmatpush1.xpose.msra.mxu0 0.0
    %3393 = vmatprep.subr.mxu0 0.0
    %3394 = vmatpush1.xpose.msra.mxu0 0.0
    %3395 = vmatprep.subr.mxu0 0.0
    %3396 = vmatpush1.xpose.msra.mxu0 0.0
    %3397 = vmatprep.subr.mxu0 0.0
    %3398 = vmatpush1.xpose.msra.mxu0 0.0
    %3399 = vmatprep.subr.mxu0 0.0
    %3400 = vmatpush1.xpose.msra.mxu0 0.0
    %3401 = vmatprep.subr.mxu0 0.0
    %3402 = vmatpush1.xpose.msra.mxu0 0.0
    %3403 = vmatprep.subr.mxu0 0.0
    %3404 = vmatpush1.xpose.msra.mxu0 0.0
    %3405 = vmatprep.subr.mxu0 0.0
    %3406 = vmatpush1.xpose.msra.mxu0 0.0
    %3407 = vmatprep.subr.mxu0 0.0
    %3408 = vmatpush1.xpose.msra.mxu0 0.0
    %3409 = vmatprep.subr.mxu0 0.0
    %3410 = vmatpush1.xpose.msra.mxu0 0.0
    %3411 = vmatprep.subr.mxu0 0.0
    %3412 = vmatpush1.xpose.msra.mxu0 0.0
    %3413 = vmatprep.subr.mxu0 0.0
    %3414 = vmatpush1.xpose.msra.mxu0 0.0
    %3415 = vmatprep.subr.mxu0 0.0
    %3416 = vmatpush1.xpose.msra.mxu0 0.0
    %3417 = vmatprep.subr.mxu0 0.0
    %3418 = vmatpush1.xpose.msra.mxu0 0.0
    %3419 = vmatprep.subr.mxu0 0.0
    %3420 = vmatpush1.xpose.msra.mxu0 0.0
    %3421 = vmatprep.subr.mxu0 %v197
    %3422 = vmatpush1.xpose.msra.mxu0 %v101
    %3423 = vmatprep.subr.mxu0 0.0
    %3424 = vmatpush2.xpose.msra.mxu0 0.0
    %3425 = vmatprep.subr.mxu0 0.0
    %3426 = vmatpush2.xpose.msra.mxu0 0.0
    %3427 = vmatprep.subr.mxu0 0.0
    %3428 = vmatpush2.xpose.msra.mxu0 0.0
    %3429 = vmatprep.subr.mxu0 0.0
    %3430 = vmatpush2.xpose.msra.mxu0 0.0
    %3431 = vmatprep.subr.mxu0 0.0
    %3432 = vmatpush2.xpose.msra.mxu0 0.0
    %3433 = vmatprep.subr.mxu0 0.0
    %3434 = vmatpush2.xpose.msra.mxu0 0.0
    %3435 = vmatprep.subr.mxu0 0.0
    %3436 = vmatpush2.xpose.msra.mxu0 0.0
    %3437 = vmatprep.subr.mxu0 0.0
    %3438 = vmatpush2.xpose.msra.mxu0 0.0
    %3439 = vmatprep.subr.mxu0 0.0
    %3440 = vmatpush2.xpose.msra.mxu0 0.0
    %3441 = vmatprep.subr.mxu0 0.0
    %3442 = vmatpush2.xpose.msra.mxu0 0.0
    %3443 = vmatprep.subr.mxu0 0.0
    %3444 = vmatpush2.xpose.msra.mxu0 0.0
    %3445 = vmatprep.subr.mxu0 0.0
    %3446 = vmatpush2.xpose.msra.mxu0 0.0
    %3447 = vmatprep.subr.mxu0 0.0
    %3448 = vmatpush2.xpose.msra.mxu0 0.0
    %3449 = vmatprep.subr.mxu0 0.0
    %3450 = vmatpush2.xpose.msra.mxu0 0.0
    %3451 = vmatprep.subr.mxu0 0.0
    %3452 = vmatpush2.xpose.msra.mxu0 0.0
    %3453 = vmatprep.subr.mxu0 0.0
    %3454 = vmatpush2.xpose.msra.mxu0 0.0
    %3455 = vmatprep.mubr.f32.mxu0 %v3004
    %3456 = vmatmul.mubr.f32.gmra.mxu0 %v3003
    %v3457 = vpop.f32.mrf.mxu0
    %v3458 = vadd.f32 %v3388, %v3457
    %v3459 = vpop.f32.mrf.mxu0
    %3460 = vdwg.mxu0
    %3461 = vmatprep.subr.mxu0 0.0
    %3462 = vmatpush1.xpose.msra.mxu0 0.0
    %3463 = vmatprep.subr.mxu0 0.0
    %3464 = vmatpush1.xpose.msra.mxu0 0.0
    %3465 = vmatprep.subr.mxu0 0.0
    %3466 = vmatpush1.xpose.msra.mxu0 0.0
    %3467 = vmatprep.subr.mxu0 0.0
    %3468 = vmatpush1.xpose.msra.mxu0 0.0
    %3469 = vmatprep.subr.mxu0 0.0
    %3470 = vmatpush1.xpose.msra.mxu0 0.0
    %3471 = vmatprep.subr.mxu0 0.0
    %3472 = vmatpush1.xpose.msra.mxu0 0.0
    %3473 = vmatprep.subr.mxu0 0.0
    %3474 = vmatpush1.xpose.msra.mxu0 0.0
    %3475 = vmatprep.subr.mxu0 0.0
    %3476 = vmatpush1.xpose.msra.mxu0 0.0
    %3477 = vmatprep.subr.mxu0 0.0
    %3478 = vmatpush1.xpose.msra.mxu0 0.0
    %3479 = vmatprep.subr.mxu0 0.0
    %3480 = vmatpush1.xpose.msra.mxu0 0.0
    %3481 = vmatprep.subr.mxu0 0.0
    %3482 = vmatpush1.xpose.msra.mxu0 0.0
    %3483 = vmatprep.subr.mxu0 0.0
    %3484 = vmatpush1.xpose.msra.mxu0 0.0
    %3485 = vmatprep.subr.mxu0 0.0
    %3486 = vmatpush1.xpose.msra.mxu0 0.0
    %3487 = vmatprep.subr.mxu0 0.0
    %3488 = vmatpush1.xpose.msra.mxu0 0.0
    %3489 = vmatprep.subr.mxu0 0.0
    %3490 = vmatpush1.xpose.msra.mxu0 0.0
    %3491 = vmatprep.subr.mxu0 %v198
    %3492 = vmatpush1.xpose.msra.mxu0 %v102
    %3493 = vmatprep.subr.mxu0 0.0
    %3494 = vmatpush2.xpose.msra.mxu0 0.0
    %3495 = vmatprep.subr.mxu0 0.0
    %3496 = vmatpush2.xpose.msra.mxu0 0.0
    %3497 = vmatprep.subr.mxu0 0.0
    %3498 = vmatpush2.xpose.msra.mxu0 0.0
    %3499 = vmatprep.subr.mxu0 0.0
    %3500 = vmatpush2.xpose.msra.mxu0 0.0
    %3501 = vmatprep.subr.mxu0 0.0
    %3502 = vmatpush2.xpose.msra.mxu0 0.0
    %3503 = vmatprep.subr.mxu0 0.0
    %3504 = vmatpush2.xpose.msra.mxu0 0.0
    %3505 = vmatprep.subr.mxu0 0.0
    %3506 = vmatpush2.xpose.msra.mxu0 0.0
    %3507 = vmatprep.subr.mxu0 0.0
    %3508 = vmatpush2.xpose.msra.mxu0 0.0
    %3509 = vmatprep.subr.mxu0 0.0
    %3510 = vmatpush2.xpose.msra.mxu0 0.0
    %3511 = vmatprep.subr.mxu0 0.0
    %3512 = vmatpush2.xpose.msra.mxu0 0.0
    %3513 = vmatprep.subr.mxu0 0.0
    %3514 = vmatpush2.xpose.msra.mxu0 0.0
    %3515 = vmatprep.subr.mxu0 0.0
    %3516 = vmatpush2.xpose.msra.mxu0 0.0
    %3517 = vmatprep.subr.mxu0 0.0
    %3518 = vmatpush2.xpose.msra.mxu0 0.0
    %3519 = vmatprep.subr.mxu0 0.0
    %3520 = vmatpush2.xpose.msra.mxu0 0.0
    %3521 = vmatprep.subr.mxu0 0.0
    %3522 = vmatpush2.xpose.msra.mxu0 0.0
    %3523 = vmatprep.subr.mxu0 0.0
    %3524 = vmatpush2.xpose.msra.mxu0 0.0
    %3525 = vmatprep.mubr.f32.mxu0 %v3006
    %3526 = vmatmul.mubr.f32.gmra.mxu0 %v3005
    %v3527 = vpop.f32.mrf.mxu0
    %v3528 = vadd.f32 %v3458, %v3527
    %v3529 = vpop.f32.mrf.mxu0
    %3530 = vdwg.mxu0
    %3531 = vmatprep.subr.mxu0 0.0
    %3532 = vmatpush1.xpose.msra.mxu0 0.0
    %3533 = vmatprep.subr.mxu0 0.0
    %3534 = vmatpush1.xpose.msra.mxu0 0.0
    %3535 = vmatprep.subr.mxu0 0.0
    %3536 = vmatpush1.xpose.msra.mxu0 0.0
    %3537 = vmatprep.subr.mxu0 0.0
    %3538 = vmatpush1.xpose.msra.mxu0 0.0
    %3539 = vmatprep.subr.mxu0 0.0
    %3540 = vmatpush1.xpose.msra.mxu0 0.0
    %3541 = vmatprep.subr.mxu0 0.0
    %3542 = vmatpush1.xpose.msra.mxu0 0.0
    %3543 = vmatprep.subr.mxu0 0.0
    %3544 = vmatpush1.xpose.msra.mxu0 0.0
    %3545 = vmatprep.subr.mxu0 0.0
    %3546 = vmatpush1.xpose.msra.mxu0 0.0
    %3547 = vmatprep.subr.mxu0 0.0
    %3548 = vmatpush1.xpose.msra.mxu0 0.0
    %3549 = vmatprep.subr.mxu0 0.0
    %3550 = vmatpush1.xpose.msra.mxu0 0.0
    %3551 = vmatprep.subr.mxu0 0.0
    %3552 = vmatpush1.xpose.msra.mxu0 0.0
    %3553 = vmatprep.subr.mxu0 0.0
    %3554 = vmatpush1.xpose.msra.mxu0 0.0
    %3555 = vmatprep.subr.mxu0 0.0
    %3556 = vmatpush1.xpose.msra.mxu0 0.0
    %3557 = vmatprep.subr.mxu0 0.0
    %3558 = vmatpush1.xpose.msra.mxu0 0.0
    %3559 = vmatprep.subr.mxu0 0.0
    %3560 = vmatpush1.xpose.msra.mxu0 0.0
    %3561 = vmatprep.subr.mxu0 %v199
    %3562 = vmatpush1.xpose.msra.mxu0 %v103
    %3563 = vmatprep.subr.mxu0 0.0
    %3564 = vmatpush2.xpose.msra.mxu0 0.0
    %3565 = vmatprep.subr.mxu0 0.0
    %3566 = vmatpush2.xpose.msra.mxu0 0.0
    %3567 = vmatprep.subr.mxu0 0.0
    %3568 = vmatpush2.xpose.msra.mxu0 0.0
    %3569 = vmatprep.subr.mxu0 0.0
    %3570 = vmatpush2.xpose.msra.mxu0 0.0
    %3571 = vmatprep.subr.mxu0 0.0
    %3572 = vmatpush2.xpose.msra.mxu0 0.0
    %3573 = vmatprep.subr.mxu0 0.0
    %3574 = vmatpush2.xpose.msra.mxu0 0.0
    %3575 = vmatprep.subr.mxu0 0.0
    %3576 = vmatpush2.xpose.msra.mxu0 0.0
    %3577 = vmatprep.subr.mxu0 0.0
    %3578 = vmatpush2.xpose.msra.mxu0 0.0
    %3579 = vmatprep.subr.mxu0 0.0
    %3580 = vmatpush2.xpose.msra.mxu0 0.0
    %3581 = vmatprep.subr.mxu0 0.0
    %3582 = vmatpush2.xpose.msra.mxu0 0.0
    %3583 = vmatprep.subr.mxu0 0.0
    %3584 = vmatpush2.xpose.msra.mxu0 0.0
    %3585 = vmatprep.subr.mxu0 0.0
    %3586 = vmatpush2.xpose.msra.mxu0 0.0
    %3587 = vmatprep.subr.mxu0 0.0
    %3588 = vmatpush2.xpose.msra.mxu0 0.0
    %3589 = vmatprep.subr.mxu0 0.0
    %3590 = vmatpush2.xpose.msra.mxu0 0.0
    %3591 = vmatprep.subr.mxu0 0.0
    %3592 = vmatpush2.xpose.msra.mxu0 0.0
    %3593 = vmatprep.subr.mxu0 0.0
    %3594 = vmatpush2.xpose.msra.mxu0 0.0
    %3595 = vmatprep.mubr.f32.mxu0 %v3008
    %3596 = vmatmul.mubr.f32.gmra.mxu0 %v3007
    %v3597 = vpop.f32.mrf.mxu0
    %v3598 = vadd.f32 %v3528, %v3597
    %v3599 = vpop.f32.mrf.mxu0
    %3600 = vdwg.mxu0
    %3601 = vmatprep.subr.mxu0 0.0
    %3602 = vmatpush1.xpose.msra.mxu0 0.0
    %3603 = vmatprep.subr.mxu0 0.0
    %3604 = vmatpush1.xpose.msra.mxu0 0.0
    %3605 = vmatprep.subr.mxu0 0.0
    %3606 = vmatpush1.xpose.msra.mxu0 0.0
    %3607 = vmatprep.subr.mxu0 0.0
    %3608 = vmatpush1.xpose.msra.mxu0 0.0
    %3609 = vmatprep.subr.mxu0 0.0
    %3610 = vmatpush1.xpose.msra.mxu0 0.0
    %3611 = vmatprep.subr.mxu0 0.0
    %3612 = vmatpush1.xpose.msra.mxu0 0.0
    %3613 = vmatprep.subr.mxu0 0.0
    %3614 = vmatpush1.xpose.msra.mxu0 0.0
    %3615 = vmatprep.subr.mxu0 0.0
    %3616 = vmatpush1.xpose.msra.mxu0 0.0
    %3617 = vmatprep.subr.mxu0 0.0
    %3618 = vmatpush1.xpose.msra.mxu0 0.0
    %3619 = vmatprep.subr.mxu0 0.0
    %3620 = vmatpush1.xpose.msra.mxu0 0.0
    %3621 = vmatprep.subr.mxu0 0.0
    %3622 = vmatpush1.xpose.msra.mxu0 0.0
    %3623 = vmatprep.subr.mxu0 0.0
    %3624 = vmatpush1.xpose.msra.mxu0 0.0
    %3625 = vmatprep.subr.mxu0 0.0
    %3626 = vmatpush1.xpose.msra.mxu0 0.0
    %3627 = vmatprep.subr.mxu0 0.0
    %3628 = vmatpush1.xpose.msra.mxu0 0.0
    %3629 = vmatprep.subr.mxu0 0.0
    %3630 = vmatpush1.xpose.msra.mxu0 0.0
    %3631 = vmatprep.subr.mxu0 %v200
    %3632 = vmatpush1.xpose.msra.mxu0 %v104
    %3633 = vmatprep.subr.mxu0 0.0
    %3634 = vmatpush2.xpose.msra.mxu0 0.0
    %3635 = vmatprep.subr.mxu0 0.0
    %3636 = vmatpush2.xpose.msra.mxu0 0.0
    %3637 = vmatprep.subr.mxu0 0.0
    %3638 = vmatpush2.xpose.msra.mxu0 0.0
    %3639 = vmatprep.subr.mxu0 0.0
    %3640 = vmatpush2.xpose.msra.mxu0 0.0
    %3641 = vmatprep.subr.mxu0 0.0
    %3642 = vmatpush2.xpose.msra.mxu0 0.0
    %3643 = vmatprep.subr.mxu0 0.0
    %3644 = vmatpush2.xpose.msra.mxu0 0.0
    %3645 = vmatprep.subr.mxu0 0.0
    %3646 = vmatpush2.xpose.msra.mxu0 0.0
    %3647 = vmatprep.subr.mxu0 0.0
    %3648 = vmatpush2.xpose.msra.mxu0 0.0
    %3649 = vmatprep.subr.mxu0 0.0
    %3650 = vmatpush2.xpose.msra.mxu0 0.0
    %3651 = vmatprep.subr.mxu0 0.0
    %3652 = vmatpush2.xpose.msra.mxu0 0.0
    %3653 = vmatprep.subr.mxu0 0.0
    %3654 = vmatpush2.xpose.msra.mxu0 0.0
    %3655 = vmatprep.subr.mxu0 0.0
    %3656 = vmatpush2.xpose.msra.mxu0 0.0
    %3657 = vmatprep.subr.mxu0 0.0
    %3658 = vmatpush2.xpose.msra.mxu0 0.0
    %3659 = vmatprep.subr.mxu0 0.0
    %3660 = vmatpush2.xpose.msra.mxu0 0.0
    %3661 = vmatprep.subr.mxu0 0.0
    %3662 = vmatpush2.xpose.msra.mxu0 0.0
    %3663 = vmatprep.subr.mxu0 0.0
    %3664 = vmatpush2.xpose.msra.mxu0 0.0
    %3665 = vmatprep.mubr.f32.mxu0 %v3010
    %3666 = vmatmul.mubr.f32.gmra.mxu0 %v3009
    %v3667 = vpop.f32.mrf.mxu0
    %v3668 = vadd.f32 %v3598, %v3667
    %v3669 = vpop.f32.mrf.mxu0
    %3670 = vdwg.mxu0
    %3671 = vmatprep.subr.mxu0 0.0
    %3672 = vmatpush1.xpose.msra.mxu0 0.0
    %3673 = vmatprep.subr.mxu0 0.0
    %3674 = vmatpush1.xpose.msra.mxu0 0.0
    %3675 = vmatprep.subr.mxu0 0.0
    %3676 = vmatpush1.xpose.msra.mxu0 0.0
    %3677 = vmatprep.subr.mxu0 0.0
    %3678 = vmatpush1.xpose.msra.mxu0 0.0
    %3679 = vmatprep.subr.mxu0 0.0
    %3680 = vmatpush1.xpose.msra.mxu0 0.0
    %3681 = vmatprep.subr.mxu0 0.0
    %3682 = vmatpush1.xpose.msra.mxu0 0.0
    %3683 = vmatprep.subr.mxu0 0.0
    %3684 = vmatpush1.xpose.msra.mxu0 0.0
    %3685 = vmatprep.subr.mxu0 0.0
    %3686 = vmatpush1.xpose.msra.mxu0 0.0
    %3687 = vmatprep.subr.mxu0 0.0
    %3688 = vmatpush1.xpose.msra.mxu0 0.0
    %3689 = vmatprep.subr.mxu0 0.0
    %3690 = vmatpush1.xpose.msra.mxu0 0.0
    %3691 = vmatprep.subr.mxu0 0.0
    %3692 = vmatpush1.xpose.msra.mxu0 0.0
    %3693 = vmatprep.subr.mxu0 0.0
    %3694 = vmatpush1.xpose.msra.mxu0 0.0
    %3695 = vmatprep.subr.mxu0 0.0
    %3696 = vmatpush1.xpose.msra.mxu0 0.0
    %3697 = vmatprep.subr.mxu0 0.0
    %3698 = vmatpush1.xpose.msra.mxu0 0.0
    %3699 = vmatprep.subr.mxu0 0.0
    %3700 = vmatpush1.xpose.msra.mxu0 0.0
    %3701 = vmatprep.subr.mxu0 %v201
    %3702 = vmatpush1.xpose.msra.mxu0 %v105
    %3703 = vmatprep.subr.mxu0 0.0
    %3704 = vmatpush2.xpose.msra.mxu0 0.0
    %3705 = vmatprep.subr.mxu0 0.0
    %3706 = vmatpush2.xpose.msra.mxu0 0.0
    %3707 = vmatprep.subr.mxu0 0.0
    %3708 = vmatpush2.xpose.msra.mxu0 0.0
    %3709 = vmatprep.subr.mxu0 0.0
    %3710 = vmatpush2.xpose.msra.mxu0 0.0
    %3711 = vmatprep.subr.mxu0 0.0
    %3712 = vmatpush2.xpose.msra.mxu0 0.0
    %3713 = vmatprep.subr.mxu0 0.0
    %3714 = vmatpush2.xpose.msra.mxu0 0.0
    %3715 = vmatprep.subr.mxu0 0.0
    %3716 = vmatpush2.xpose.msra.mxu0 0.0
    %3717 = vmatprep.subr.mxu0 0.0
    %3718 = vmatpush2.xpose.msra.mxu0 0.0
    %3719 = vmatprep.subr.mxu0 0.0
    %3720 = vmatpush2.xpose.msra.mxu0 0.0
    %3721 = vmatprep.subr.mxu0 0.0
    %3722 = vmatpush2.xpose.msra.mxu0 0.0
    %3723 = vmatprep.subr.mxu0 0.0
    %3724 = vmatpush2.xpose.msra.mxu0 0.0
    %3725 = vmatprep.subr.mxu0 0.0
    %3726 = vmatpush2.xpose.msra.mxu0 0.0
    %3727 = vmatprep.subr.mxu0 0.0
    %3728 = vmatpush2.xpose.msra.mxu0 0.0
    %3729 = vmatprep.subr.mxu0 0.0
    %3730 = vmatpush2.xpose.msra.mxu0 0.0
    %3731 = vmatprep.subr.mxu0 0.0
    %3732 = vmatpush2.xpose.msra.mxu0 0.0
    %3733 = vmatprep.subr.mxu0 0.0
    %3734 = vmatpush2.xpose.msra.mxu0 0.0
    %3735 = vmatprep.mubr.f32.mxu0 %v3012
    %3736 = vmatmul.mubr.f32.gmra.mxu0 %v3011
    %v3737 = vpop.f32.mrf.mxu0
    %v3738 = vadd.f32 %v3668, %v3737
    %v3739 = vpop.f32.mrf.mxu0
    %3740 = vdwg.mxu0
    %3741 = vmatprep.subr.mxu0 0.0
    %3742 = vmatpush1.xpose.msra.mxu0 0.0
    %3743 = vmatprep.subr.mxu0 0.0
    %3744 = vmatpush1.xpose.msra.mxu0 0.0
    %3745 = vmatprep.subr.mxu0 0.0
    %3746 = vmatpush1.xpose.msra.mxu0 0.0
    %3747 = vmatprep.subr.mxu0 0.0
    %3748 = vmatpush1.xpose.msra.mxu0 0.0
    %3749 = vmatprep.subr.mxu0 0.0
    %3750 = vmatpush1.xpose.msra.mxu0 0.0
    %3751 = vmatprep.subr.mxu0 0.0
    %3752 = vmatpush1.xpose.msra.mxu0 0.0
    %3753 = vmatprep.subr.mxu0 0.0
    %3754 = vmatpush1.xpose.msra.mxu0 0.0
    %3755 = vmatprep.subr.mxu0 0.0
    %3756 = vmatpush1.xpose.msra.mxu0 0.0
    %3757 = vmatprep.subr.mxu0 0.0
    %3758 = vmatpush1.xpose.msra.mxu0 0.0
    %3759 = vmatprep.subr.mxu0 0.0
    %3760 = vmatpush1.xpose.msra.mxu0 0.0
    %3761 = vmatprep.subr.mxu0 0.0
    %3762 = vmatpush1.xpose.msra.mxu0 0.0
    %3763 = vmatprep.subr.mxu0 0.0
    %3764 = vmatpush1.xpose.msra.mxu0 0.0
    %3765 = vmatprep.subr.mxu0 0.0
    %3766 = vmatpush1.xpose.msra.mxu0 0.0
    %3767 = vmatprep.subr.mxu0 0.0
    %3768 = vmatpush1.xpose.msra.mxu0 0.0
    %3769 = vmatprep.subr.mxu0 0.0
    %3770 = vmatpush1.xpose.msra.mxu0 0.0
    %3771 = vmatprep.subr.mxu0 %v202
    %3772 = vmatpush1.xpose.msra.mxu0 %v106
    %3773 = vmatprep.subr.mxu0 0.0
    %3774 = vmatpush2.xpose.msra.mxu0 0.0
    %3775 = vmatprep.subr.mxu0 0.0
    %3776 = vmatpush2.xpose.msra.mxu0 0.0
    %3777 = vmatprep.subr.mxu0 0.0
    %3778 = vmatpush2.xpose.msra.mxu0 0.0
    %3779 = vmatprep.subr.mxu0 0.0
    %3780 = vmatpush2.xpose.msra.mxu0 0.0
    %3781 = vmatprep.subr.mxu0 0.0
    %3782 = vmatpush2.xpose.msra.mxu0 0.0
    %3783 = vmatprep.subr.mxu0 0.0
    %3784 = vmatpush2.xpose.msra.mxu0 0.0
    %3785 = vmatprep.subr.mxu0 0.0
    %3786 = vmatpush2.xpose.msra.mxu0 0.0
    %3787 = vmatprep.subr.mxu0 0.0
    %3788 = vmatpush2.xpose.msra.mxu0 0.0
    %3789 = vmatprep.subr.mxu0 0.0
    %3790 = vmatpush2.xpose.msra.mxu0 0.0
    %3791 = vmatprep.subr.mxu0 0.0
    %3792 = vmatpush2.xpose.msra.mxu0 0.0
    %3793 = vmatprep.subr.mxu0 0.0
    %3794 = vmatpush2.xpose.msra.mxu0 0.0
    %3795 = vmatprep.subr.mxu0 0.0
    %3796 = vmatpush2.xpose.msra.mxu0 0.0
    %3797 = vmatprep.subr.mxu0 0.0
    %3798 = vmatpush2.xpose.msra.mxu0 0.0
    %3799 = vmatprep.subr.mxu0 0.0
    %3800 = vmatpush2.xpose.msra.mxu0 0.0
    %3801 = vmatprep.subr.mxu0 0.0
    %3802 = vmatpush2.xpose.msra.mxu0 0.0
    %3803 = vmatprep.subr.mxu0 0.0
    %3804 = vmatpush2.xpose.msra.mxu0 0.0
    %3805 = vmatprep.mubr.f32.mxu0 %v3014
    %3806 = vmatmul.mubr.f32.gmra.mxu0 %v3013
    %v3807 = vpop.f32.mrf.mxu0
    %v3808 = vadd.f32 %v3738, %v3807
    %v3809 = vpop.f32.mrf.mxu0
    %3810 = vdwg.mxu0
    %3811 = vmatprep.subr.mxu0 0.0
    %3812 = vmatpush1.xpose.msra.mxu0 0.0
    %3813 = vmatprep.subr.mxu0 0.0
    %3814 = vmatpush1.xpose.msra.mxu0 0.0
    %3815 = vmatprep.subr.mxu0 0.0
    %3816 = vmatpush1.xpose.msra.mxu0 0.0
    %3817 = vmatprep.subr.mxu0 0.0
    %3818 = vmatpush1.xpose.msra.mxu0 0.0
    %3819 = vmatprep.subr.mxu0 0.0
    %3820 = vmatpush1.xpose.msra.mxu0 0.0
    %3821 = vmatprep.subr.mxu0 0.0
    %3822 = vmatpush1.xpose.msra.mxu0 0.0
    %3823 = vmatprep.subr.mxu0 0.0
    %3824 = vmatpush1.xpose.msra.mxu0 0.0
    %3825 = vmatprep.subr.mxu0 0.0
    %3826 = vmatpush1.xpose.msra.mxu0 0.0
    %3827 = vmatprep.subr.mxu0 0.0
    %3828 = vmatpush1.xpose.msra.mxu0 0.0
    %3829 = vmatprep.subr.mxu0 0.0
    %3830 = vmatpush1.xpose.msra.mxu0 0.0
    %3831 = vmatprep.subr.mxu0 0.0
    %3832 = vmatpush1.xpose.msra.mxu0 0.0
    %3833 = vmatprep.subr.mxu0 0.0
    %3834 = vmatpush1.xpose.msra.mxu0 0.0
    %3835 = vmatprep.subr.mxu0 0.0
    %3836 = vmatpush1.xpose.msra.mxu0 0.0
    %3837 = vmatprep.subr.mxu0 0.0
    %3838 = vmatpush1.xpose.msra.mxu0 0.0
    %3839 = vmatprep.subr.mxu0 0.0
    %3840 = vmatpush1.xpose.msra.mxu0 0.0
    %3841 = vmatprep.subr.mxu0 %v203
    %3842 = vmatpush1.xpose.msra.mxu0 %v107
    %3843 = vmatprep.subr.mxu0 0.0
    %3844 = vmatpush2.xpose.msra.mxu0 0.0
    %3845 = vmatprep.subr.mxu0 0.0
    %3846 = vmatpush2.xpose.msra.mxu0 0.0
    %3847 = vmatprep.subr.mxu0 0.0
    %3848 = vmatpush2.xpose.msra.mxu0 0.0
    %3849 = vmatprep.subr.mxu0 0.0
    %3850 = vmatpush2.xpose.msra.mxu0 0.0
    %3851 = vmatprep.subr.mxu0 0.0
    %3852 = vmatpush2.xpose.msra.mxu0 0.0
    %3853 = vmatprep.subr.mxu0 0.0
    %3854 = vmatpush2.xpose.msra.mxu0 0.0
    %3855 = vmatprep.subr.mxu0 0.0
    %3856 = vmatpush2.xpose.msra.mxu0 0.0
    %3857 = vmatprep.subr.mxu0 0.0
    %3858 = vmatpush2.xpose.msra.mxu0 0.0
    %3859 = vmatprep.subr.mxu0 0.0
    %3860 = vmatpush2.xpose.msra.mxu0 0.0
    %3861 = vmatprep.subr.mxu0 0.0
    %3862 = vmatpush2.xpose.msra.mxu0 0.0
    %3863 = vmatprep.subr.mxu0 0.0
    %3864 = vmatpush2.xpose.msra.mxu0 0.0
    %3865 = vmatprep.subr.mxu0 0.0
    %3866 = vmatpush2.xpose.msra.mxu0 0.0
    %3867 = vmatprep.subr.mxu0 0.0
    %3868 = vmatpush2.xpose.msra.mxu0 0.0
    %3869 = vmatprep.subr.mxu0 0.0
    %3870 = vmatpush2.xpose.msra.mxu0 0.0
    %3871 = vmatprep.subr.mxu0 0.0
    %3872 = vmatpush2.xpose.msra.mxu0 0.0
    %3873 = vmatprep.subr.mxu0 0.0
    %3874 = vmatpush2.xpose.msra.mxu0 0.0
    %3875 = vmatprep.mubr.f32.mxu0 %v3016
    %3876 = vmatmul.mubr.f32.gmra.mxu0 %v3015
    %v3877 = vpop.f32.mrf.mxu0
    %v3878 = vadd.f32 %v3808, %v3877
    %v3879 = vpop.f32.mrf.mxu0
    %3880 = vdwg.mxu0
    %3881 = vmatprep.subr.mxu0 0.0
    %3882 = vmatpush1.xpose.msra.mxu0 0.0
    %3883 = vmatprep.subr.mxu0 0.0
    %3884 = vmatpush1.xpose.msra.mxu0 0.0
    %3885 = vmatprep.subr.mxu0 0.0
    %3886 = vmatpush1.xpose.msra.mxu0 0.0
    %3887 = vmatprep.subr.mxu0 0.0
    %3888 = vmatpush1.xpose.msra.mxu0 0.0
    %3889 = vmatprep.subr.mxu0 0.0
    %3890 = vmatpush1.xpose.msra.mxu0 0.0
    %3891 = vmatprep.subr.mxu0 0.0
    %3892 = vmatpush1.xpose.msra.mxu0 0.0
    %3893 = vmatprep.subr.mxu0 0.0
    %3894 = vmatpush1.xpose.msra.mxu0 0.0
    %3895 = vmatprep.subr.mxu0 0.0
    %3896 = vmatpush1.xpose.msra.mxu0 0.0
    %3897 = vmatprep.subr.mxu0 0.0
    %3898 = vmatpush1.xpose.msra.mxu0 0.0
    %3899 = vmatprep.subr.mxu0 0.0
    %3900 = vmatpush1.xpose.msra.mxu0 0.0
    %3901 = vmatprep.subr.mxu0 0.0
    %3902 = vmatpush1.xpose.msra.mxu0 0.0
    %3903 = vmatprep.subr.mxu0 0.0
    %3904 = vmatpush1.xpose.msra.mxu0 0.0
    %3905 = vmatprep.subr.mxu0 0.0
    %3906 = vmatpush1.xpose.msra.mxu0 0.0
    %3907 = vmatprep.subr.mxu0 0.0
    %3908 = vmatpush1.xpose.msra.mxu0 0.0
    %3909 = vmatprep.subr.mxu0 0.0
    %3910 = vmatpush1.xpose.msra.mxu0 0.0
    %3911 = vmatprep.subr.mxu0 %v1068
    %3912 = vmatpush1.xpose.msra.mxu0 %v59
    %3913 = vmatprep.subr.mxu0 0.0
    %3914 = vmatpush2.xpose.msra.mxu0 0.0
    %3915 = vmatprep.subr.mxu0 0.0
    %3916 = vmatpush2.xpose.msra.mxu0 0.0
    %3917 = vmatprep.subr.mxu0 0.0
    %3918 = vmatpush2.xpose.msra.mxu0 0.0
    %3919 = vmatprep.subr.mxu0 0.0
    %3920 = vmatpush2.xpose.msra.mxu0 0.0
    %3921 = vmatprep.subr.mxu0 0.0
    %3922 = vmatpush2.xpose.msra.mxu0 0.0
    %3923 = vmatprep.subr.mxu0 0.0
    %3924 = vmatpush2.xpose.msra.mxu0 0.0
    %3925 = vmatprep.subr.mxu0 0.0
    %3926 = vmatpush2.xpose.msra.mxu0 0.0
    %3927 = vmatprep.subr.mxu0 0.0
    %3928 = vmatpush2.xpose.msra.mxu0 0.0
    %3929 = vmatprep.subr.mxu0 0.0
    %3930 = vmatpush2.xpose.msra.mxu0 0.0
    %3931 = vmatprep.subr.mxu0 0.0
    %3932 = vmatpush2.xpose.msra.mxu0 0.0
    %3933 = vmatprep.subr.mxu0 0.0
    %3934 = vmatpush2.xpose.msra.mxu0 0.0
    %3935 = vmatprep.subr.mxu0 0.0
    %3936 = vmatpush2.xpose.msra.mxu0 0.0
    %3937 = vmatprep.subr.mxu0 0.0
    %3938 = vmatpush2.xpose.msra.mxu0 0.0
    %3939 = vmatprep.subr.mxu0 0.0
    %3940 = vmatpush2.xpose.msra.mxu0 0.0
    %3941 = vmatprep.subr.mxu0 0.0
    %3942 = vmatpush2.xpose.msra.mxu0 0.0
    %3943 = vmatprep.subr.mxu0 0.0
    %3944 = vmatpush2.xpose.msra.mxu0 0.0
    %3945 = vmatprep.mubr.f32.mxu0 %v2922
    %3946 = vmatmul.mubr.f32.gmra.mxu0 %v2921
    %v3947 = vpop.f32.mrf.mxu0
    %v3948 = vadd.f32 %v3878, %v3947
    %v3949 = vpop.f32.mrf.mxu0
    %3950 = vdwg.mxu0
    %3951 = vmatprep.subr.mxu0 0.0
    %3952 = vmatpush1.xpose.msra.mxu0 0.0
    %3953 = vmatprep.subr.mxu0 0.0
    %3954 = vmatpush1.xpose.msra.mxu0 0.0
    %3955 = vmatprep.subr.mxu0 0.0
    %3956 = vmatpush1.xpose.msra.mxu0 0.0
    %3957 = vmatprep.subr.mxu0 0.0
    %3958 = vmatpush1.xpose.msra.mxu0 0.0
    %3959 = vmatprep.subr.mxu0 0.0
    %3960 = vmatpush1.xpose.msra.mxu0 0.0
    %3961 = vmatprep.subr.mxu0 0.0
    %3962 = vmatpush1.xpose.msra.mxu0 0.0
    %3963 = vmatprep.subr.mxu0 0.0
    %3964 = vmatpush1.xpose.msra.mxu0 0.0
    %3965 = vmatprep.subr.mxu0 0.0
    %3966 = vmatpush1.xpose.msra.mxu0 0.0
    %3967 = vmatprep.subr.mxu0 0.0
    %3968 = vmatpush1.xpose.msra.mxu0 0.0
    %3969 = vmatprep.subr.mxu0 0.0
    %3970 = vmatpush1.xpose.msra.mxu0 0.0
    %3971 = vmatprep.subr.mxu0 0.0
    %3972 = vmatpush1.xpose.msra.mxu0 0.0
    %3973 = vmatprep.subr.mxu0 0.0
    %3974 = vmatpush1.xpose.msra.mxu0 0.0
    %3975 = vmatprep.subr.mxu0 0.0
    %3976 = vmatpush1.xpose.msra.mxu0 0.0
    %3977 = vmatprep.subr.mxu0 0.0
    %3978 = vmatpush1.xpose.msra.mxu0 0.0
    %3979 = vmatprep.subr.mxu0 0.0
    %3980 = vmatpush1.xpose.msra.mxu0 0.0
    %3981 = vmatprep.subr.mxu0 %v1069
    %3982 = vmatpush1.xpose.msra.mxu0 %v60
    %3983 = vmatprep.subr.mxu0 0.0
    %3984 = vmatpush2.xpose.msra.mxu0 0.0
    %3985 = vmatprep.subr.mxu0 0.0
    %3986 = vmatpush2.xpose.msra.mxu0 0.0
    %3987 = vmatprep.subr.mxu0 0.0
    %3988 = vmatpush2.xpose.msra.mxu0 0.0
    %3989 = vmatprep.subr.mxu0 0.0
    %3990 = vmatpush2.xpose.msra.mxu0 0.0
    %3991 = vmatprep.subr.mxu0 0.0
    %3992 = vmatpush2.xpose.msra.mxu0 0.0
    %3993 = vmatprep.subr.mxu0 0.0
    %3994 = vmatpush2.xpose.msra.mxu0 0.0
    %3995 = vmatprep.subr.mxu0 0.0
    %3996 = vmatpush2.xpose.msra.mxu0 0.0
    %3997 = vmatprep.subr.mxu0 0.0
    %3998 = vmatpush2.xpose.msra.mxu0 0.0
    %3999 = vmatprep.subr.mxu0 0.0
    %4000 = vmatpush2.xpose.msra.mxu0 0.0
    %4001 = vmatprep.subr.mxu0 0.0
    %4002 = vmatpush2.xpose.msra.mxu0 0.0
    %4003 = vmatprep.subr.mxu0 0.0
    %4004 = vmatpush2.xpose.msra.mxu0 0.0
    %4005 = vmatprep.subr.mxu0 0.0
    %4006 = vmatpush2.xpose.msra.mxu0 0.0
    %4007 = vmatprep.subr.mxu0 0.0
    %4008 = vmatpush2.xpose.msra.mxu0 0.0
    %4009 = vmatprep.subr.mxu0 0.0
    %4010 = vmatpush2.xpose.msra.mxu0 0.0
    %4011 = vmatprep.subr.mxu0 0.0
    %4012 = vmatpush2.xpose.msra.mxu0 0.0
    %4013 = vmatprep.subr.mxu0 0.0
    %4014 = vmatpush2.xpose.msra.mxu0 0.0
    %4015 = vmatprep.mubr.f32.mxu0 %v2924
    %4016 = vmatmul.mubr.f32.gmra.mxu0 %v2923
    %v4017 = vpop.f32.mrf.mxu0
    %v4018 = vadd.f32 %v3948, %v4017
    %v4019 = vpop.f32.mrf.mxu0
    %4020 = vdwg.mxu0
    %4021 = vmatprep.subr.mxu0 0.0
    %4022 = vmatpush1.xpose.msra.mxu0 0.0
    %4023 = vmatprep.subr.mxu0 0.0
    %4024 = vmatpush1.xpose.msra.mxu0 0.0
    %4025 = vmatprep.subr.mxu0 0.0
    %4026 = vmatpush1.xpose.msra.mxu0 0.0
    %4027 = vmatprep.subr.mxu0 0.0
    %4028 = vmatpush1.xpose.msra.mxu0 0.0
    %4029 = vmatprep.subr.mxu0 0.0
    %4030 = vmatpush1.xpose.msra.mxu0 0.0
    %4031 = vmatprep.subr.mxu0 0.0
    %4032 = vmatpush1.xpose.msra.mxu0 0.0
    %4033 = vmatprep.subr.mxu0 0.0
    %4034 = vmatpush1.xpose.msra.mxu0 0.0
    %4035 = vmatprep.subr.mxu0 0.0
    %4036 = vmatpush1.xpose.msra.mxu0 0.0
    %4037 = vmatprep.subr.mxu0 0.0
    %4038 = vmatpush1.xpose.msra.mxu0 0.0
    %4039 = vmatprep.subr.mxu0 0.0
    %4040 = vmatpush1.xpose.msra.mxu0 0.0
    %4041 = vmatprep.subr.mxu0 0.0
    %4042 = vmatpush1.xpose.msra.mxu0 0.0
    %4043 = vmatprep.subr.mxu0 0.0
    %4044 = vmatpush1.xpose.msra.mxu0 0.0
    %4045 = vmatprep.subr.mxu0 0.0
    %4046 = vmatpush1.xpose.msra.mxu0 0.0
    %4047 = vmatprep.subr.mxu0 0.0
    %4048 = vmatpush1.xpose.msra.mxu0 0.0
    %4049 = vmatprep.subr.mxu0 0.0
    %4050 = vmatpush1.xpose.msra.mxu0 0.0
    %4051 = vmatprep.subr.mxu0 %v1070
    %4052 = vmatpush1.xpose.msra.mxu0 %v61
    %4053 = vmatprep.subr.mxu0 0.0
    %4054 = vmatpush2.xpose.msra.mxu0 0.0
    %4055 = vmatprep.subr.mxu0 0.0
    %4056 = vmatpush2.xpose.msra.mxu0 0.0
    %4057 = vmatprep.subr.mxu0 0.0
    %4058 = vmatpush2.xpose.msra.mxu0 0.0
    %4059 = vmatprep.subr.mxu0 0.0
    %4060 = vmatpush2.xpose.msra.mxu0 0.0
    %4061 = vmatprep.subr.mxu0 0.0
    %4062 = vmatpush2.xpose.msra.mxu0 0.0
    %4063 = vmatprep.subr.mxu0 0.0
    %4064 = vmatpush2.xpose.msra.mxu0 0.0
    %4065 = vmatprep.subr.mxu0 0.0
    %4066 = vmatpush2.xpose.msra.mxu0 0.0
    %4067 = vmatprep.subr.mxu0 0.0
    %4068 = vmatpush2.xpose.msra.mxu0 0.0
    %4069 = vmatprep.subr.mxu0 0.0
    %4070 = vmatpush2.xpose.msra.mxu0 0.0
    %4071 = vmatprep.subr.mxu0 0.0
    %4072 = vmatpush2.xpose.msra.mxu0 0.0
    %4073 = vmatprep.subr.mxu0 0.0
    %4074 = vmatpush2.xpose.msra.mxu0 0.0
    %4075 = vmatprep.subr.mxu0 0.0
    %4076 = vmatpush2.xpose.msra.mxu0 0.0
    %4077 = vmatprep.subr.mxu0 0.0
    %4078 = vmatpush2.xpose.msra.mxu0 0.0
    %4079 = vmatprep.subr.mxu0 0.0
    %4080 = vmatpush2.xpose.msra.mxu0 0.0
    %4081 = vmatprep.subr.mxu0 0.0
    %4082 = vmatpush2.xpose.msra.mxu0 0.0
    %4083 = vmatprep.subr.mxu0 0.0
    %4084 = vmatpush2.xpose.msra.mxu0 0.0
    %4085 = vmatprep.mubr.f32.mxu0 %v2926
    %4086 = vmatmul.mubr.f32.gmra.mxu0 %v2925
    %v4087 = vpop.f32.mrf.mxu0
    %v4088 = vadd.f32 %v4018, %v4087
    %v4089 = vpop.f32.mrf.mxu0
    %4090 = vdwg.mxu0
    %4091 = vmatprep.subr.mxu0 0.0
    %4092 = vmatpush1.xpose.msra.mxu0 0.0
    %4093 = vmatprep.subr.mxu0 0.0
    %4094 = vmatpush1.xpose.msra.mxu0 0.0
    %4095 = vmatprep.subr.mxu0 0.0
    %4096 = vmatpush1.xpose.msra.mxu0 0.0
    %4097 = vmatprep.subr.mxu0 0.0
    %4098 = vmatpush1.xpose.msra.mxu0 0.0
    %4099 = vmatprep.subr.mxu0 0.0
    %4100 = vmatpush1.xpose.msra.mxu0 0.0
    %4101 = vmatprep.subr.mxu0 0.0
    %4102 = vmatpush1.xpose.msra.mxu0 0.0
    %4103 = vmatprep.subr.mxu0 0.0
    %4104 = vmatpush1.xpose.msra.mxu0 0.0
    %4105 = vmatprep.subr.mxu0 0.0
    %4106 = vmatpush1.xpose.msra.mxu0 0.0
    %4107 = vmatprep.subr.mxu0 0.0
    %4108 = vmatpush1.xpose.msra.mxu0 0.0
    %4109 = vmatprep.subr.mxu0 0.0
    %4110 = vmatpush1.xpose.msra.mxu0 0.0
    %4111 = vmatprep.subr.mxu0 0.0
    %4112 = vmatpush1.xpose.msra.mxu0 0.0
    %4113 = vmatprep.subr.mxu0 0.0
    %4114 = vmatpush1.xpose.msra.mxu0 0.0
    %4115 = vmatprep.subr.mxu0 0.0
    %4116 = vmatpush1.xpose.msra.mxu0 0.0
    %4117 = vmatprep.subr.mxu0 0.0
    %4118 = vmatpush1.xpose.msra.mxu0 0.0
    %4119 = vmatprep.subr.mxu0 0.0
    %4120 = vmatpush1.xpose.msra.mxu0 0.0
    %4121 = vmatprep.subr.mxu0 %v1071
    %4122 = vmatpush1.xpose.msra.mxu0 %v62
    %4123 = vmatprep.subr.mxu0 0.0
    %4124 = vmatpush2.xpose.msra.mxu0 0.0
    %4125 = vmatprep.subr.mxu0 0.0
    %4126 = vmatpush2.xpose.msra.mxu0 0.0
    %4127 = vmatprep.subr.mxu0 0.0
    %4128 = vmatpush2.xpose.msra.mxu0 0.0
    %4129 = vmatprep.subr.mxu0 0.0
    %4130 = vmatpush2.xpose.msra.mxu0 0.0
    %4131 = vmatprep.subr.mxu0 0.0
    %4132 = vmatpush2.xpose.msra.mxu0 0.0
    %4133 = vmatprep.subr.mxu0 0.0
    %4134 = vmatpush2.xpose.msra.mxu0 0.0
    %4135 = vmatprep.subr.mxu0 0.0
    %4136 = vmatpush2.xpose.msra.mxu0 0.0
    %4137 = vmatprep.subr.mxu0 0.0
    %4138 = vmatpush2.xpose.msra.mxu0 0.0
    %4139 = vmatprep.subr.mxu0 0.0
    %4140 = vmatpush2.xpose.msra.mxu0 0.0
    %4141 = vmatprep.subr.mxu0 0.0
    %4142 = vmatpush2.xpose.msra.mxu0 0.0
    %4143 = vmatprep.subr.mxu0 0.0
    %4144 = vmatpush2.xpose.msra.mxu0 0.0
    %4145 = vmatprep.subr.mxu0 0.0
    %4146 = vmatpush2.xpose.msra.mxu0 0.0
    %4147 = vmatprep.subr.mxu0 0.0
    %4148 = vmatpush2.xpose.msra.mxu0 0.0
    %4149 = vmatprep.subr.mxu0 0.0
    %4150 = vmatpush2.xpose.msra.mxu0 0.0
    %4151 = vmatprep.subr.mxu0 0.0
    %4152 = vmatpush2.xpose.msra.mxu0 0.0
    %4153 = vmatprep.subr.mxu0 0.0
    %4154 = vmatpush2.xpose.msra.mxu0 0.0
    %4155 = vmatprep.mubr.f32.mxu0 %v2928
    %4156 = vmatmul.mubr.f32.gmra.mxu0 %v2927
    %v4157 = vpop.f32.mrf.mxu0
    %v4158 = vadd.f32 %v4088, %v4157
    %v4159 = vpop.f32.mrf.mxu0
    %4160 = vdwg.mxu0
    %4161 = vmatprep.subr.mxu0 0.0
    %4162 = vmatpush1.xpose.msra.mxu0 0.0
    %4163 = vmatprep.subr.mxu0 0.0
    %4164 = vmatpush1.xpose.msra.mxu0 0.0
    %4165 = vmatprep.subr.mxu0 0.0
    %4166 = vmatpush1.xpose.msra.mxu0 0.0
    %4167 = vmatprep.subr.mxu0 0.0
    %4168 = vmatpush1.xpose.msra.mxu0 0.0
    %4169 = vmatprep.subr.mxu0 0.0
    %4170 = vmatpush1.xpose.msra.mxu0 0.0
    %4171 = vmatprep.subr.mxu0 0.0
    %4172 = vmatpush1.xpose.msra.mxu0 0.0
    %4173 = vmatprep.subr.mxu0 0.0
    %4174 = vmatpush1.xpose.msra.mxu0 0.0
    %4175 = vmatprep.subr.mxu0 0.0
    %4176 = vmatpush1.xpose.msra.mxu0 0.0
    %4177 = vmatprep.subr.mxu0 0.0
    %4178 = vmatpush1.xpose.msra.mxu0 0.0
    %4179 = vmatprep.subr.mxu0 0.0
    %4180 = vmatpush1.xpose.msra.mxu0 0.0
    %4181 = vmatprep.subr.mxu0 0.0
    %4182 = vmatpush1.xpose.msra.mxu0 0.0
    %4183 = vmatprep.subr.mxu0 0.0
    %4184 = vmatpush1.xpose.msra.mxu0 0.0
    %4185 = vmatprep.subr.mxu0 0.0
    %4186 = vmatpush1.xpose.msra.mxu0 0.0
    %4187 = vmatprep.subr.mxu0 0.0
    %4188 = vmatpush1.xpose.msra.mxu0 0.0
    %4189 = vmatprep.subr.mxu0 0.0
    %4190 = vmatpush1.xpose.msra.mxu0 0.0
    %4191 = vmatprep.subr.mxu0 %v1072
    %4192 = vmatpush1.xpose.msra.mxu0 %v63
    %4193 = vmatprep.subr.mxu0 0.0
    %4194 = vmatpush2.xpose.msra.mxu0 0.0
    %4195 = vmatprep.subr.mxu0 0.0
    %4196 = vmatpush2.xpose.msra.mxu0 0.0
    %4197 = vmatprep.subr.mxu0 0.0
    %4198 = vmatpush2.xpose.msra.mxu0 0.0
    %4199 = vmatprep.subr.mxu0 0.0
    %4200 = vmatpush2.xpose.msra.mxu0 0.0
    %4201 = vmatprep.subr.mxu0 0.0
    %4202 = vmatpush2.xpose.msra.mxu0 0.0
    %4203 = vmatprep.subr.mxu0 0.0
    %4204 = vmatpush2.xpose.msra.mxu0 0.0
    %4205 = vmatprep.subr.mxu0 0.0
    %4206 = vmatpush2.xpose.msra.mxu0 0.0
    %4207 = vmatprep.subr.mxu0 0.0
    %4208 = vmatpush2.xpose.msra.mxu0 0.0
    %4209 = vmatprep.subr.mxu0 0.0
    %4210 = vmatpush2.xpose.msra.mxu0 0.0
    %4211 = vmatprep.subr.mxu0 0.0
    %4212 = vmatpush2.xpose.msra.mxu0 0.0
    %4213 = vmatprep.subr.mxu0 0.0
    %4214 = vmatpush2.xpose.msra.mxu0 0.0
    %4215 = vmatprep.subr.mxu0 0.0
    %4216 = vmatpush2.xpose.msra.mxu0 0.0
    %4217 = vmatprep.subr.mxu0 0.0
    %4218 = vmatpush2.xpose.msra.mxu0 0.0
    %4219 = vmatprep.subr.mxu0 0.0
    %4220 = vmatpush2.xpose.msra.mxu0 0.0
    %4221 = vmatprep.subr.mxu0 0.0
    %4222 = vmatpush2.xpose.msra.mxu0 0.0
    %4223 = vmatprep.subr.mxu0 0.0
    %4224 = vmatpush2.xpose.msra.mxu0 0.0
    %4225 = vmatprep.mubr.f32.mxu0 %v2930
    %4226 = vmatmul.mubr.f32.gmra.mxu0 %v2929
    %v4227 = vpop.f32.mrf.mxu0
    %v4228 = vadd.f32 %v4158, %v4227
    %v4229 = vpop.f32.mrf.mxu0
    %4230 = vdwg.mxu0
    %4231 = vmatprep.subr.mxu0 0.0
    %4232 = vmatpush1.xpose.msra.mxu0 0.0
    %4233 = vmatprep.subr.mxu0 0.0
    %4234 = vmatpush1.xpose.msra.mxu0 0.0
    %4235 = vmatprep.subr.mxu0 0.0
    %4236 = vmatpush1.xpose.msra.mxu0 0.0
    %4237 = vmatprep.subr.mxu0 0.0
    %4238 = vmatpush1.xpose.msra.mxu0 0.0
    %4239 = vmatprep.subr.mxu0 0.0
    %4240 = vmatpush1.xpose.msra.mxu0 0.0
    %4241 = vmatprep.subr.mxu0 0.0
    %4242 = vmatpush1.xpose.msra.mxu0 0.0
    %4243 = vmatprep.subr.mxu0 0.0
    %4244 = vmatpush1.xpose.msra.mxu0 0.0
    %4245 = vmatprep.subr.mxu0 0.0
    %4246 = vmatpush1.xpose.msra.mxu0 0.0
    %4247 = vmatprep.subr.mxu0 0.0
    %4248 = vmatpush1.xpose.msra.mxu0 0.0
    %4249 = vmatprep.subr.mxu0 0.0
    %4250 = vmatpush1.xpose.msra.mxu0 0.0
    %4251 = vmatprep.subr.mxu0 0.0
    %4252 = vmatpush1.xpose.msra.mxu0 0.0
    %4253 = vmatprep.subr.mxu0 0.0
    %4254 = vmatpush1.xpose.msra.mxu0 0.0
    %4255 = vmatprep.subr.mxu0 0.0
    %4256 = vmatpush1.xpose.msra.mxu0 0.0
    %4257 = vmatprep.subr.mxu0 0.0
    %4258 = vmatpush1.xpose.msra.mxu0 0.0
    %4259 = vmatprep.subr.mxu0 0.0
    %4260 = vmatpush1.xpose.msra.mxu0 0.0
    %4261 = vmatprep.subr.mxu0 %v1073
    %4262 = vmatpush1.xpose.msra.mxu0 %v64
    %4263 = vmatprep.subr.mxu0 0.0
    %4264 = vmatpush2.xpose.msra.mxu0 0.0
    %4265 = vmatprep.subr.mxu0 0.0
    %4266 = vmatpush2.xpose.msra.mxu0 0.0
    %4267 = vmatprep.subr.mxu0 0.0
    %4268 = vmatpush2.xpose.msra.mxu0 0.0
    %4269 = vmatprep.subr.mxu0 0.0
    %4270 = vmatpush2.xpose.msra.mxu0 0.0
    %4271 = vmatprep.subr.mxu0 0.0
    %4272 = vmatpush2.xpose.msra.mxu0 0.0
    %4273 = vmatprep.subr.mxu0 0.0
    %4274 = vmatpush2.xpose.msra.mxu0 0.0
    %4275 = vmatprep.subr.mxu0 0.0
    %4276 = vmatpush2.xpose.msra.mxu0 0.0
    %4277 = vmatprep.subr.mxu0 0.0
    %4278 = vmatpush2.xpose.msra.mxu0 0.0
    %4279 = vmatprep.subr.mxu0 0.0
    %4280 = vmatpush2.xpose.msra.mxu0 0.0
    %4281 = vmatprep.subr.mxu0 0.0
    %4282 = vmatpush2.xpose.msra.mxu0 0.0
    %4283 = vmatprep.subr.mxu0 0.0
    %4284 = vmatpush2.xpose.msra.mxu0 0.0
    %4285 = vmatprep.subr.mxu0 0.0
    %4286 = vmatpush2.xpose.msra.mxu0 0.0
    %4287 = vmatprep.subr.mxu0 0.0
    %4288 = vmatpush2.xpose.msra.mxu0 0.0
    %4289 = vmatprep.subr.mxu0 0.0
    %4290 = vmatpush2.xpose.msra.mxu0 0.0
    %4291 = vmatprep.subr.mxu0 0.0
    %4292 = vmatpush2.xpose.msra.mxu0 0.0
    %4293 = vmatprep.subr.mxu0 0.0
    %4294 = vmatpush2.xpose.msra.mxu0 0.0
    %4295 = vmatprep.mubr.f32.mxu0 %v2932
    %4296 = vmatmul.mubr.f32.gmra.mxu0 %v2931
    %v4297 = vpop.f32.mrf.mxu0
    %v4298 = vadd.f32 %v4228, %v4297
    %v4299 = vpop.f32.mrf.mxu0
    %4300 = vdwg.mxu0
    %4301 = vmatprep.subr.mxu0 0.0
    %4302 = vmatpush1.xpose.msra.mxu0 0.0
    %4303 = vmatprep.subr.mxu0 0.0
    %4304 = vmatpush1.xpose.msra.mxu0 0.0
    %4305 = vmatprep.subr.mxu0 0.0
    %4306 = vmatpush1.xpose.msra.mxu0 0.0
    %4307 = vmatprep.subr.mxu0 0.0
    %4308 = vmatpush1.xpose.msra.mxu0 0.0
    %4309 = vmatprep.subr.mxu0 0.0
    %4310 = vmatpush1.xpose.msra.mxu0 0.0
    %4311 = vmatprep.subr.mxu0 0.0
    %4312 = vmatpush1.xpose.msra.mxu0 0.0
    %4313 = vmatprep.subr.mxu0 0.0
    %4314 = vmatpush1.xpose.msra.mxu0 0.0
    %4315 = vmatprep.subr.mxu0 0.0
    %4316 = vmatpush1.xpose.msra.mxu0 0.0
    %4317 = vmatprep.subr.mxu0 0.0
    %4318 = vmatpush1.xpose.msra.mxu0 0.0
    %4319 = vmatprep.subr.mxu0 0.0
    %4320 = vmatpush1.xpose.msra.mxu0 0.0
    %4321 = vmatprep.subr.mxu0 0.0
    %4322 = vmatpush1.xpose.msra.mxu0 0.0
    %4323 = vmatprep.subr.mxu0 0.0
    %4324 = vmatpush1.xpose.msra.mxu0 0.0
    %4325 = vmatprep.subr.mxu0 0.0
    %4326 = vmatpush1.xpose.msra.mxu0 0.0
    %4327 = vmatprep.subr.mxu0 0.0
    %4328 = vmatpush1.xpose.msra.mxu0 0.0
    %4329 = vmatprep.subr.mxu0 0.0
    %4330 = vmatpush1.xpose.msra.mxu0 0.0
    %4331 = vmatprep.subr.mxu0 %v1074
    %4332 = vmatpush1.xpose.msra.mxu0 %v65
    %4333 = vmatprep.subr.mxu0 0.0
    %4334 = vmatpush2.xpose.msra.mxu0 0.0
    %4335 = vmatprep.subr.mxu0 0.0
    %4336 = vmatpush2.xpose.msra.mxu0 0.0
    %4337 = vmatprep.subr.mxu0 0.0
    %4338 = vmatpush2.xpose.msra.mxu0 0.0
    %4339 = vmatprep.subr.mxu0 0.0
    %4340 = vmatpush2.xpose.msra.mxu0 0.0
    %4341 = vmatprep.subr.mxu0 0.0
    %4342 = vmatpush2.xpose.msra.mxu0 0.0
    %4343 = vmatprep.subr.mxu0 0.0
    %4344 = vmatpush2.xpose.msra.mxu0 0.0
    %4345 = vmatprep.subr.mxu0 0.0
    %4346 = vmatpush2.xpose.msra.mxu0 0.0
    %4347 = vmatprep.subr.mxu0 0.0
    %4348 = vmatpush2.xpose.msra.mxu0 0.0
    %4349 = vmatprep.subr.mxu0 0.0
    %4350 = vmatpush2.xpose.msra.mxu0 0.0
    %4351 = vmatprep.subr.mxu0 0.0
    %4352 = vmatpush2.xpose.msra.mxu0 0.0
    %4353 = vmatprep.subr.mxu0 0.0
    %4354 = vmatpush2.xpose.msra.mxu0 0.0
    %4355 = vmatprep.subr.mxu0 0.0
    %4356 = vmatpush2.xpose.msra.mxu0 0.0
    %4357 = vmatprep.subr.mxu0 0.0
    %4358 = vmatpush2.xpose.msra.mxu0 0.0
    %4359 = vmatprep.subr.mxu0 0.0
    %4360 = vmatpush2.xpose.msra.mxu0 0.0
    %4361 = vmatprep.subr.mxu0 0.0
    %4362 = vmatpush2.xpose.msra.mxu0 0.0
    %4363 = vmatprep.subr.mxu0 0.0
    %4364 = vmatpush2.xpose.msra.mxu0 0.0
    %4365 = vmatprep.mubr.f32.mxu0 %v2934
    %4366 = vmatmul.mubr.f32.gmra.mxu0 %v2933
    %v4367 = vpop.f32.mrf.mxu0
    %v4368 = vadd.f32 %v4298, %v4367
    %v4369 = vpop.f32.mrf.mxu0
    %4370 = vdwg.mxu0
    %4371 = vmatprep.subr.mxu0 0.0
    %4372 = vmatpush1.xpose.msra.mxu0 0.0
    %4373 = vmatprep.subr.mxu0 0.0
    %4374 = vmatpush1.xpose.msra.mxu0 0.0
    %4375 = vmatprep.subr.mxu0 0.0
    %4376 = vmatpush1.xpose.msra.mxu0 0.0
    %4377 = vmatprep.subr.mxu0 0.0
    %4378 = vmatpush1.xpose.msra.mxu0 0.0
    %4379 = vmatprep.subr.mxu0 0.0
    %4380 = vmatpush1.xpose.msra.mxu0 0.0
    %4381 = vmatprep.subr.mxu0 0.0
    %4382 = vmatpush1.xpose.msra.mxu0 0.0
    %4383 = vmatprep.subr.mxu0 0.0
    %4384 = vmatpush1.xpose.msra.mxu0 0.0
    %4385 = vmatprep.subr.mxu0 0.0
    %4386 = vmatpush1.xpose.msra.mxu0 0.0
    %4387 = vmatprep.subr.mxu0 0.0
    %4388 = vmatpush1.xpose.msra.mxu0 0.0
    %4389 = vmatprep.subr.mxu0 0.0
    %4390 = vmatpush1.xpose.msra.mxu0 0.0
    %4391 = vmatprep.subr.mxu0 0.0
    %4392 = vmatpush1.xpose.msra.mxu0 0.0
    %4393 = vmatprep.subr.mxu0 0.0
    %4394 = vmatpush1.xpose.msra.mxu0 0.0
    %4395 = vmatprep.subr.mxu0 0.0
    %4396 = vmatpush1.xpose.msra.mxu0 0.0
    %4397 = vmatprep.subr.mxu0 0.0
    %4398 = vmatpush1.xpose.msra.mxu0 0.0
    %4399 = vmatprep.subr.mxu0 0.0
    %4400 = vmatpush1.xpose.msra.mxu0 0.0
    %4401 = vmatprep.subr.mxu0 %v1075
    %4402 = vmatpush1.xpose.msra.mxu0 %v66
    %4403 = vmatprep.subr.mxu0 0.0
    %4404 = vmatpush2.xpose.msra.mxu0 0.0
    %4405 = vmatprep.subr.mxu0 0.0
    %4406 = vmatpush2.xpose.msra.mxu0 0.0
    %4407 = vmatprep.subr.mxu0 0.0
    %4408 = vmatpush2.xpose.msra.mxu0 0.0
    %4409 = vmatprep.subr.mxu0 0.0
    %4410 = vmatpush2.xpose.msra.mxu0 0.0
    %4411 = vmatprep.subr.mxu0 0.0
    %4412 = vmatpush2.xpose.msra.mxu0 0.0
    %4413 = vmatprep.subr.mxu0 0.0
    %4414 = vmatpush2.xpose.msra.mxu0 0.0
    %4415 = vmatprep.subr.mxu0 0.0
    %4416 = vmatpush2.xpose.msra.mxu0 0.0
    %4417 = vmatprep.subr.mxu0 0.0
    %4418 = vmatpush2.xpose.msra.mxu0 0.0
    %4419 = vmatprep.subr.mxu0 0.0
    %4420 = vmatpush2.xpose.msra.mxu0 0.0
    %4421 = vmatprep.subr.mxu0 0.0
    %4422 = vmatpush2.xpose.msra.mxu0 0.0
    %4423 = vmatprep.subr.mxu0 0.0
    %4424 = vmatpush2.xpose.msra.mxu0 0.0
    %4425 = vmatprep.subr.mxu0 0.0
    %4426 = vmatpush2.xpose.msra.mxu0 0.0
    %4427 = vmatprep.subr.mxu0 0.0
    %4428 = vmatpush2.xpose.msra.mxu0 0.0
    %4429 = vmatprep.subr.mxu0 0.0
    %4430 = vmatpush2.xpose.msra.mxu0 0.0
    %4431 = vmatprep.subr.mxu0 0.0
    %4432 = vmatpush2.xpose.msra.mxu0 0.0
    %4433 = vmatprep.subr.mxu0 0.0
    %4434 = vmatpush2.xpose.msra.mxu0 0.0
    %4435 = vmatprep.mubr.f32.mxu0 %v2936
    %4436 = vmatmul.mubr.f32.gmra.mxu0 %v2935
    %v4437 = vpop.f32.mrf.mxu0
    %v4438 = vadd.f32 %v4368, %v4437
    %v4439 = vpop.f32.mrf.mxu0
    %4440 = vdwg.mxu0
    %4441 = vmatprep.subr.mxu0 0.0
    %4442 = vmatpush1.xpose.msra.mxu0 0.0
    %4443 = vmatprep.subr.mxu0 0.0
    %4444 = vmatpush1.xpose.msra.mxu0 0.0
    %4445 = vmatprep.subr.mxu0 0.0
    %4446 = vmatpush1.xpose.msra.mxu0 0.0
    %4447 = vmatprep.subr.mxu0 0.0
    %4448 = vmatpush1.xpose.msra.mxu0 0.0
    %4449 = vmatprep.subr.mxu0 0.0
    %4450 = vmatpush1.xpose.msra.mxu0 0.0
    %4451 = vmatprep.subr.mxu0 0.0
    %4452 = vmatpush1.xpose.msra.mxu0 0.0
    %4453 = vmatprep.subr.mxu0 0.0
    %4454 = vmatpush1.xpose.msra.mxu0 0.0
    %4455 = vmatprep.subr.mxu0 0.0
    %4456 = vmatpush1.xpose.msra.mxu0 0.0
    %4457 = vmatprep.subr.mxu0 0.0
    %4458 = vmatpush1.xpose.msra.mxu0 0.0
    %4459 = vmatprep.subr.mxu0 0.0
    %4460 = vmatpush1.xpose.msra.mxu0 0.0
    %4461 = vmatprep.subr.mxu0 0.0
    %4462 = vmatpush1.xpose.msra.mxu0 0.0
    %4463 = vmatprep.subr.mxu0 0.0
    %4464 = vmatpush1.xpose.msra.mxu0 0.0
    %4465 = vmatprep.subr.mxu0 0.0
    %4466 = vmatpush1.xpose.msra.mxu0 0.0
    %4467 = vmatprep.subr.mxu0 0.0
    %4468 = vmatpush1.xpose.msra.mxu0 0.0
    %4469 = vmatprep.subr.mxu0 0.0
    %4470 = vmatpush1.xpose.msra.mxu0 0.0
    %4471 = vmatprep.subr.mxu0 %v1076
    %4472 = vmatpush1.xpose.msra.mxu0 %v67
    %4473 = vmatprep.subr.mxu0 0.0
    %4474 = vmatpush2.xpose.msra.mxu0 0.0
    %4475 = vmatprep.subr.mxu0 0.0
    %4476 = vmatpush2.xpose.msra.mxu0 0.0
    %4477 = vmatprep.subr.mxu0 0.0
    %4478 = vmatpush2.xpose.msra.mxu0 0.0
    %4479 = vmatprep.subr.mxu0 0.0
    %4480 = vmatpush2.xpose.msra.mxu0 0.0
    %4481 = vmatprep.subr.mxu0 0.0
    %4482 = vmatpush2.xpose.msra.mxu0 0.0
    %4483 = vmatprep.subr.mxu0 0.0
    %4484 = vmatpush2.xpose.msra.mxu0 0.0
    %4485 = vmatprep.subr.mxu0 0.0
    %4486 = vmatpush2.xpose.msra.mxu0 0.0
    %4487 = vmatprep.subr.mxu0 0.0
    %4488 = vmatpush2.xpose.msra.mxu0 0.0
    %4489 = vmatprep.subr.mxu0 0.0
    %4490 = vmatpush2.xpose.msra.mxu0 0.0
    %4491 = vmatprep.subr.mxu0 0.0
    %4492 = vmatpush2.xpose.msra.mxu0 0.0
    %4493 = vmatprep.subr.mxu0 0.0
    %4494 = vmatpush2.xpose.msra.mxu0 0.0
    %4495 = vmatprep.subr.mxu0 0.0
    %4496 = vmatpush2.xpose.msra.mxu0 0.0
    %4497 = vmatprep.subr.mxu0 0.0
    %4498 = vmatpush2.xpose.msra.mxu0 0.0
    %4499 = vmatprep.subr.mxu0 0.0
    %4500 = vmatpush2.xpose.msra.mxu0 0.0
    %4501 = vmatprep.subr.mxu0 0.0
    %4502 = vmatpush2.xpose.msra.mxu0 0.0
    %4503 = vmatprep.subr.mxu0 0.0
    %4504 = vmatpush2.xpose.msra.mxu0 0.0
    %4505 = vmatprep.mubr.f32.mxu0 %v2938
    %4506 = vmatmul.mubr.f32.gmra.mxu0 %v2937
    %v4507 = vpop.f32.mrf.mxu0
    %v4508 = vadd.f32 %v4438, %v4507
    %v4509 = vpop.f32.mrf.mxu0
    %4510 = vdwg.mxu0
    %4511 = vmatprep.subr.mxu0 0.0
    %4512 = vmatpush1.xpose.msra.mxu0 0.0
    %4513 = vmatprep.subr.mxu0 0.0
    %4514 = vmatpush1.xpose.msra.mxu0 0.0
    %4515 = vmatprep.subr.mxu0 0.0
    %4516 = vmatpush1.xpose.msra.mxu0 0.0
    %4517 = vmatprep.subr.mxu0 0.0
    %4518 = vmatpush1.xpose.msra.mxu0 0.0
    %4519 = vmatprep.subr.mxu0 0.0
    %4520 = vmatpush1.xpose.msra.mxu0 0.0
    %4521 = vmatprep.subr.mxu0 0.0
    %4522 = vmatpush1.xpose.msra.mxu0 0.0
    %4523 = vmatprep.subr.mxu0 0.0
    %4524 = vmatpush1.xpose.msra.mxu0 0.0
    %4525 = vmatprep.subr.mxu0 0.0
    %4526 = vmatpush1.xpose.msra.mxu0 0.0
    %4527 = vmatprep.subr.mxu0 0.0
    %4528 = vmatpush1.xpose.msra.mxu0 0.0
    %4529 = vmatprep.subr.mxu0 0.0
    %4530 = vmatpush1.xpose.msra.mxu0 0.0
    %4531 = vmatprep.subr.mxu0 0.0
    %4532 = vmatpush1.xpose.msra.mxu0 0.0
    %4533 = vmatprep.subr.mxu0 0.0
    %4534 = vmatpush1.xpose.msra.mxu0 0.0
    %4535 = vmatprep.subr.mxu0 0.0
    %4536 = vmatpush1.xpose.msra.mxu0 0.0
    %4537 = vmatprep.subr.mxu0 0.0
    %4538 = vmatpush1.xpose.msra.mxu0 0.0
    %4539 = vmatprep.subr.mxu0 0.0
    %4540 = vmatpush1.xpose.msra.mxu0 0.0
    %4541 = vmatprep.subr.mxu0 %v1077
    %4542 = vmatpush1.xpose.msra.mxu0 %v68
    %4543 = vmatprep.subr.mxu0 0.0
    %4544 = vmatpush2.xpose.msra.mxu0 0.0
    %4545 = vmatprep.subr.mxu0 0.0
    %4546 = vmatpush2.xpose.msra.mxu0 0.0
    %4547 = vmatprep.subr.mxu0 0.0
    %4548 = vmatpush2.xpose.msra.mxu0 0.0
    %4549 = vmatprep.subr.mxu0 0.0
    %4550 = vmatpush2.xpose.msra.mxu0 0.0
    %4551 = vmatprep.subr.mxu0 0.0
    %4552 = vmatpush2.xpose.msra.mxu0 0.0
    %4553 = vmatprep.subr.mxu0 0.0
    %4554 = vmatpush2.xpose.msra.mxu0 0.0
    %4555 = vmatprep.subr.mxu0 0.0
    %4556 = vmatpush2.xpose.msra.mxu0 0.0
    %4557 = vmatprep.subr.mxu0 0.0
    %4558 = vmatpush2.xpose.msra.mxu0 0.0
    %4559 = vmatprep.subr.mxu0 0.0
    %4560 = vmatpush2.xpose.msra.mxu0 0.0
    %4561 = vmatprep.subr.mxu0 0.0
    %4562 = vmatpush2.xpose.msra.mxu0 0.0
    %4563 = vmatprep.subr.mxu0 0.0
    %4564 = vmatpush2.xpose.msra.mxu0 0.0
    %4565 = vmatprep.subr.mxu0 0.0
    %4566 = vmatpush2.xpose.msra.mxu0 0.0
    %4567 = vmatprep.subr.mxu0 0.0
    %4568 = vmatpush2.xpose.msra.mxu0 0.0
    %4569 = vmatprep.subr.mxu0 0.0
    %4570 = vmatpush2.xpose.msra.mxu0 0.0
    %4571 = vmatprep.subr.mxu0 0.0
    %4572 = vmatpush2.xpose.msra.mxu0 0.0
    %4573 = vmatprep.subr.mxu0 0.0
    %4574 = vmatpush2.xpose.msra.mxu0 0.0
    %4575 = vmatprep.mubr.f32.mxu0 %v2940
    %4576 = vmatmul.mubr.f32.gmra.mxu0 %v2939
    %v4577 = vpop.f32.mrf.mxu0
    %v4578 = vadd.f32 %v4508, %v4577
    %v4579 = vpop.f32.mrf.mxu0
    %4580 = vdwg.mxu0
    %4581 = vmatprep.subr.mxu0 0.0
    %4582 = vmatpush1.xpose.msra.mxu0 0.0
    %4583 = vmatprep.subr.mxu0 0.0
    %4584 = vmatpush1.xpose.msra.mxu0 0.0
    %4585 = vmatprep.subr.mxu0 0.0
    %4586 = vmatpush1.xpose.msra.mxu0 0.0
    %4587 = vmatprep.subr.mxu0 0.0
    %4588 = vmatpush1.xpose.msra.mxu0 0.0
    %4589 = vmatprep.subr.mxu0 0.0
    %4590 = vmatpush1.xpose.msra.mxu0 0.0
    %4591 = vmatprep.subr.mxu0 0.0
    %4592 = vmatpush1.xpose.msra.mxu0 0.0
    %4593 = vmatprep.subr.mxu0 0.0
    %4594 = vmatpush1.xpose.msra.mxu0 0.0
    %4595 = vmatprep.subr.mxu0 0.0
    %4596 = vmatpush1.xpose.msra.mxu0 0.0
    %4597 = vmatprep.subr.mxu0 0.0
    %4598 = vmatpush1.xpose.msra.mxu0 0.0
    %4599 = vmatprep.subr.mxu0 0.0
    %4600 = vmatpush1.xpose.msra.mxu0 0.0
    %4601 = vmatprep.subr.mxu0 0.0
    %4602 = vmatpush1.xpose.msra.mxu0 0.0
    %4603 = vmatprep.subr.mxu0 0.0
    %4604 = vmatpush1.xpose.msra.mxu0 0.0
    %4605 = vmatprep.subr.mxu0 0.0
    %4606 = vmatpush1.xpose.msra.mxu0 0.0
    %4607 = vmatprep.subr.mxu0 0.0
    %4608 = vmatpush1.xpose.msra.mxu0 0.0
    %4609 = vmatprep.subr.mxu0 0.0
    %4610 = vmatpush1.xpose.msra.mxu0 0.0
    %4611 = vmatprep.subr.mxu0 %v1078
    %4612 = vmatpush1.xpose.msra.mxu0 %v69
    %4613 = vmatprep.subr.mxu0 0.0
    %4614 = vmatpush2.xpose.msra.mxu0 0.0
    %4615 = vmatprep.subr.mxu0 0.0
    %4616 = vmatpush2.xpose.msra.mxu0 0.0
    %4617 = vmatprep.subr.mxu0 0.0
    %4618 = vmatpush2.xpose.msra.mxu0 0.0
    %4619 = vmatprep.subr.mxu0 0.0
    %4620 = vmatpush2.xpose.msra.mxu0 0.0
    %4621 = vmatprep.subr.mxu0 0.0
    %4622 = vmatpush2.xpose.msra.mxu0 0.0
    %4623 = vmatprep.subr.mxu0 0.0
    %4624 = vmatpush2.xpose.msra.mxu0 0.0
    %4625 = vmatprep.subr.mxu0 0.0
    %4626 = vmatpush2.xpose.msra.mxu0 0.0
    %4627 = vmatprep.subr.mxu0 0.0
    %4628 = vmatpush2.xpose.msra.mxu0 0.0
    %4629 = vmatprep.subr.mxu0 0.0
    %4630 = vmatpush2.xpose.msra.mxu0 0.0
    %4631 = vmatprep.subr.mxu0 0.0
    %4632 = vmatpush2.xpose.msra.mxu0 0.0
    %4633 = vmatprep.subr.mxu0 0.0
    %4634 = vmatpush2.xpose.msra.mxu0 0.0
    %4635 = vmatprep.subr.mxu0 0.0
    %4636 = vmatpush2.xpose.msra.mxu0 0.0
    %4637 = vmatprep.subr.mxu0 0.0
    %4638 = vmatpush2.xpose.msra.mxu0 0.0
    %4639 = vmatprep.subr.mxu0 0.0
    %4640 = vmatpush2.xpose.msra.mxu0 0.0
    %4641 = vmatprep.subr.mxu0 0.0
    %4642 = vmatpush2.xpose.msra.mxu0 0.0
    %4643 = vmatprep.subr.mxu0 0.0
    %4644 = vmatpush2.xpose.msra.mxu0 0.0
    %4645 = vmatprep.mubr.f32.mxu0 %v2942
    %4646 = vmatmul.mubr.f32.gmra.mxu0 %v2941
    %v4647 = vpop.f32.mrf.mxu0
    %v4648 = vadd.f32 %v4578, %v4647
    %v4649 = vpop.f32.mrf.mxu0
    %4650 = vdwg.mxu0
    %4651 = vmatprep.subr.mxu0 0.0
    %4652 = vmatpush1.xpose.msra.mxu0 0.0
    %4653 = vmatprep.subr.mxu0 0.0
    %4654 = vmatpush1.xpose.msra.mxu0 0.0
    %4655 = vmatprep.subr.mxu0 0.0
    %4656 = vmatpush1.xpose.msra.mxu0 0.0
    %4657 = vmatprep.subr.mxu0 0.0
    %4658 = vmatpush1.xpose.msra.mxu0 0.0
    %4659 = vmatprep.subr.mxu0 0.0
    %4660 = vmatpush1.xpose.msra.mxu0 0.0
    %4661 = vmatprep.subr.mxu0 0.0
    %4662 = vmatpush1.xpose.msra.mxu0 0.0
    %4663 = vmatprep.subr.mxu0 0.0
    %4664 = vmatpush1.xpose.msra.mxu0 0.0
    %4665 = vmatprep.subr.mxu0 0.0
    %4666 = vmatpush1.xpose.msra.mxu0 0.0
    %4667 = vmatprep.subr.mxu0 0.0
    %4668 = vmatpush1.xpose.msra.mxu0 0.0
    %4669 = vmatprep.subr.mxu0 0.0
    %4670 = vmatpush1.xpose.msra.mxu0 0.0
    %4671 = vmatprep.subr.mxu0 0.0
    %4672 = vmatpush1.xpose.msra.mxu0 0.0
    %4673 = vmatprep.subr.mxu0 0.0
    %4674 = vmatpush1.xpose.msra.mxu0 0.0
    %4675 = vmatprep.subr.mxu0 0.0
    %4676 = vmatpush1.xpose.msra.mxu0 0.0
    %4677 = vmatprep.subr.mxu0 0.0
    %4678 = vmatpush1.xpose.msra.mxu0 0.0
    %4679 = vmatprep.subr.mxu0 0.0
    %4680 = vmatpush1.xpose.msra.mxu0 0.0
    %4681 = vmatprep.subr.mxu0 %v1079
    %4682 = vmatpush1.xpose.msra.mxu0 %v70
    %4683 = vmatprep.subr.mxu0 0.0
    %4684 = vmatpush2.xpose.msra.mxu0 0.0
    %4685 = vmatprep.subr.mxu0 0.0
    %4686 = vmatpush2.xpose.msra.mxu0 0.0
    %4687 = vmatprep.subr.mxu0 0.0
    %4688 = vmatpush2.xpose.msra.mxu0 0.0
    %4689 = vmatprep.subr.mxu0 0.0
    %4690 = vmatpush2.xpose.msra.mxu0 0.0
    %4691 = vmatprep.subr.mxu0 0.0
    %4692 = vmatpush2.xpose.msra.mxu0 0.0
    %4693 = vmatprep.subr.mxu0 0.0
    %4694 = vmatpush2.xpose.msra.mxu0 0.0
    %4695 = vmatprep.subr.mxu0 0.0
    %4696 = vmatpush2.xpose.msra.mxu0 0.0
    %4697 = vmatprep.subr.mxu0 0.0
    %4698 = vmatpush2.xpose.msra.mxu0 0.0
    %4699 = vmatprep.subr.mxu0 0.0
    %4700 = vmatpush2.xpose.msra.mxu0 0.0
    %4701 = vmatprep.subr.mxu0 0.0
    %4702 = vmatpush2.xpose.msra.mxu0 0.0
    %4703 = vmatprep.subr.mxu0 0.0
    %4704 = vmatpush2.xpose.msra.mxu0 0.0
    %4705 = vmatprep.subr.mxu0 0.0
    %4706 = vmatpush2.xpose.msra.mxu0 0.0
    %4707 = vmatprep.subr.mxu0 0.0
    %4708 = vmatpush2.xpose.msra.mxu0 0.0
    %4709 = vmatprep.subr.mxu0 0.0
    %4710 = vmatpush2.xpose.msra.mxu0 0.0
    %4711 = vmatprep.subr.mxu0 0.0
    %4712 = vmatpush2.xpose.msra.mxu0 0.0
    %4713 = vmatprep.subr.mxu0 0.0
    %4714 = vmatpush2.xpose.msra.mxu0 0.0
    %4715 = vmatprep.mubr.f32.mxu0 %v2944
    %4716 = vmatmul.mubr.f32.gmra.mxu0 %v2943
    %v4717 = vpop.f32.mrf.mxu0
    %v4718 = vadd.f32 %v4648, %v4717
    %v4719 = vpop.f32.mrf.mxu0
    %4720 = vdwg.mxu0
    %v4721 = vld [vmem:[%s2920] sm:$0x3c]
    %v4722 = vld [vmem:[%s2920 + $0x8] sm:$0x3c]
    %v4723 = vld [vmem:[%s2920 + $0x10] sm:$0x3c]
    %v4724 = vld [vmem:[%s2920 + $0x18] sm:$0x3c]
    %v4725 = vld [vmem:[%s2920 + $0x20] sm:$0x3c]
    %v4726 = vld [vmem:[%s2920 + $0x28] sm:$0x3c]
    %v4727 = vld [vmem:[%s2920 + $0x30] sm:$0x3c]
    %v4728 = vld [vmem:[%s2920 + $0x38] sm:$0x3c]
    %v4729 = vld [vmem:[%s2920 + $0x40] sm:$0x3c]
    %v4730 = vld [vmem:[%s2920 + $0x48] sm:$0x3c]
    %v4731 = vld [vmem:[%s2920 + $0x50] sm:$0x3c]
    %v4732 = vld [vmem:[%s2920 + $0x58] sm:$0x3c]
    %v4733 = vld [vmem:[%s2920 + $0x60] sm:$0x3c]
    %v4734 = vld [vmem:[%s2920 + $0x68] sm:$0x3c]
    %v4735 = vld [vmem:[%s2920 + $0x70] sm:$0x3c]
    %v4736 = vld [vmem:[%s2920 + $0x78] sm:$0x3c]
    %v4737 = vld [vmem:[%s2920 + $0x80] sm:$0x3c]
    %v4738 = vld [vmem:[%s2920 + $0x88] sm:$0x3c]
    %v4739 = vld [vmem:[%s2920 + $0x90] sm:$0x3c]
    %v4740 = vld [vmem:[%s2920 + $0x98] sm:$0x3c]
    %v4741 = vld [vmem:[%s2920 + $0xa0] sm:$0x3c]
    %v4742 = vld [vmem:[%s2920 + $0xa8] sm:$0x3c]
    %v4743 = vld [vmem:[%s2920 + $0xb0] sm:$0x3c]
    %v4744 = vld [vmem:[%s2920 + $0xb8] sm:$0x3c]
    %v4769 = vrot.slane %v4721, 2
    %v4770 = vrot.slane %v4722, 2
    %v4771 = vrot.slane %v4723, 2
    %v4772 = vrot.slane %v4724, 2
    %v4773 = vrot.slane %v4725, 2
    %v4774 = vrot.slane %v4726, 2
    %v4775 = vrot.slane %v4727, 2
    %v4776 = vrot.slane %v4728, 2
    %v4777 = vrot.slane %v4729, 2
    %v4778 = vrot.slane %v4730, 2
    %v4779 = vrot.slane %v4731, 2
    %v4780 = vrot.slane %v4732, 2
    %v4781 = vrot.slane %v4733, 2
    %v4782 = vrot.slane %v4734, 2
    %v4783 = vrot.slane %v4735, 2
    %v4784 = vrot.slane %v4736, 2
    %v4785 = vrot.slane %v4737, 2
    %v4786 = vrot.slane %v4738, 2
    %v4787 = vrot.slane %v4739, 2
    %v4788 = vrot.slane %v4740, 2
    %v4789 = vrot.slane %v4741, 2
    %v4790 = vrot.slane %v4742, 2
    %v4791 = vrot.slane %v4743, 2
    %v4792 = vrot.slane %v4744, 2
    %4817 = vmatprep.subr.mxu0 0.0
    %4818 = vmatpush1.xpose.msra.mxu0 0.0
    %4819 = vmatprep.subr.mxu0 0.0
    %4820 = vmatpush1.xpose.msra.mxu0 0.0
    %4821 = vmatprep.subr.mxu0 0.0
    %4822 = vmatpush1.xpose.msra.mxu0 0.0
    %4823 = vmatprep.subr.mxu0 0.0
    %4824 = vmatpush1.xpose.msra.mxu0 0.0
    %4825 = vmatprep.subr.mxu0 0.0
    %4826 = vmatpush1.xpose.msra.mxu0 0.0
    %4827 = vmatprep.subr.mxu0 0.0
    %4828 = vmatpush1.xpose.msra.mxu0 0.0
    %4829 = vmatprep.subr.mxu0 0.0
    %4830 = vmatpush1.xpose.msra.mxu0 0.0
    %4831 = vmatprep.subr.mxu0 0.0
    %4832 = vmatpush1.xpose.msra.mxu0 0.0
    %4833 = vmatprep.subr.mxu0 0.0
    %4834 = vmatpush1.xpose.msra.mxu0 0.0
    %4835 = vmatprep.subr.mxu0 0.0
    %4836 = vmatpush1.xpose.msra.mxu0 0.0
    %4837 = vmatprep.subr.mxu0 0.0
    %4838 = vmatpush1.xpose.msra.mxu0 0.0
    %4839 = vmatprep.subr.mxu0 0.0
    %4840 = vmatpush1.xpose.msra.mxu0 0.0
    %4841 = vmatprep.subr.mxu0 0.0
    %4842 = vmatpush1.xpose.msra.mxu0 0.0
    %4843 = vmatprep.subr.mxu0 0.0
    %4844 = vmatpush1.xpose.msra.mxu0 0.0
    %4845 = vmatprep.subr.mxu0 0.0
    %4846 = vmatpush1.xpose.msra.mxu0 0.0
    %4847 = vmatprep.subr.mxu0 %v2053
    %4848 = vmatpush1.xpose.msra.mxu0 %v1957
    %4849 = vmatprep.subr.mxu0 0.0
    %4850 = vmatpush2.xpose.msra.mxu0 0.0
    %4851 = vmatprep.subr.mxu0 0.0
    %4852 = vmatpush2.xpose.msra.mxu0 0.0
    %4853 = vmatprep.subr.mxu0 0.0
    %4854 = vmatpush2.xpose.msra.mxu0 0.0
    %4855 = vmatprep.subr.mxu0 0.0
    %4856 = vmatpush2.xpose.msra.mxu0 0.0
    %4857 = vmatprep.subr.mxu0 0.0
    %4858 = vmatpush2.xpose.msra.mxu0 0.0
    %4859 = vmatprep.subr.mxu0 0.0
    %4860 = vmatpush2.xpose.msra.mxu0 0.0
    %4861 = vmatprep.subr.mxu0 0.0
    %4862 = vmatpush2.xpose.msra.mxu0 0.0
    %4863 = vmatprep.subr.mxu0 0.0
    %4864 = vmatpush2.xpose.msra.mxu0 0.0
    %4865 = vmatprep.subr.mxu0 0.0
    %4866 = vmatpush2.xpose.msra.mxu0 0.0
    %4867 = vmatprep.subr.mxu0 0.0
    %4868 = vmatpush2.xpose.msra.mxu0 0.0
    %4869 = vmatprep.subr.mxu0 0.0
    %4870 = vmatpush2.xpose.msra.mxu0 0.0
    %4871 = vmatprep.subr.mxu0 0.0
    %4872 = vmatpush2.xpose.msra.mxu0 0.0
    %4873 = vmatprep.subr.mxu0 0.0
    %4874 = vmatpush2.xpose.msra.mxu0 0.0
    %4875 = vmatprep.subr.mxu0 0.0
    %4876 = vmatpush2.xpose.msra.mxu0 0.0
    %4877 = vmatprep.subr.mxu0 0.0
    %4878 = vmatpush2.xpose.msra.mxu0 0.0
    %4879 = vmatprep.subr.mxu0 0.0
    %4880 = vmatpush2.xpose.msra.mxu0 0.0
    %4881 = vmatprep.mubr.f32.mxu0 %v4770
    %4882 = vmatmul.mubr.f32.gmra.mxu0 %v4769
    %v4883 = vpop.f32.mrf.mxu0
    %v4884 = vadd.f32 0.0, %v4883
    %v4885 = vpop.f32.mrf.mxu0
    %4886 = vdwg.mxu0
    %4887 = vmatprep.subr.mxu0 0.0
    %4888 = vmatpush1.xpose.msra.mxu0 0.0
    %4889 = vmatprep.subr.mxu0 0.0
    %4890 = vmatpush1.xpose.msra.mxu0 0.0
    %4891 = vmatprep.subr.mxu0 0.0
    %4892 = vmatpush1.xpose.msra.mxu0 0.0
    %4893 = vmatprep.subr.mxu0 0.0
    %4894 = vmatpush1.xpose.msra.mxu0 0.0
    %4895 = vmatprep.subr.mxu0 0.0
    %4896 = vmatpush1.xpose.msra.mxu0 0.0
    %4897 = vmatprep.subr.mxu0 0.0
    %4898 = vmatpush1.xpose.msra.mxu0 0.0
    %4899 = vmatprep.subr.mxu0 0.0
    %4900 = vmatpush1.xpose.msra.mxu0 0.0
    %4901 = vmatprep.subr.mxu0 0.0
    %4902 = vmatpush1.xpose.msra.mxu0 0.0
    %4903 = vmatprep.subr.mxu0 0.0
    %4904 = vmatpush1.xpose.msra.mxu0 0.0
    %4905 = vmatprep.subr.mxu0 0.0
    %4906 = vmatpush1.xpose.msra.mxu0 0.0
    %4907 = vmatprep.subr.mxu0 0.0
    %4908 = vmatpush1.xpose.msra.mxu0 0.0
    %4909 = vmatprep.subr.mxu0 0.0
    %4910 = vmatpush1.xpose.msra.mxu0 0.0
    %4911 = vmatprep.subr.mxu0 0.0
    %4912 = vmatpush1.xpose.msra.mxu0 0.0
    %4913 = vmatprep.subr.mxu0 0.0
    %4914 = vmatpush1.xpose.msra.mxu0 0.0
    %4915 = vmatprep.subr.mxu0 0.0
    %4916 = vmatpush1.xpose.msra.mxu0 0.0
    %4917 = vmatprep.subr.mxu0 %v2054
    %4918 = vmatpush1.xpose.msra.mxu0 %v1958
    %4919 = vmatprep.subr.mxu0 0.0
    %4920 = vmatpush2.xpose.msra.mxu0 0.0
    %4921 = vmatprep.subr.mxu0 0.0
    %4922 = vmatpush2.xpose.msra.mxu0 0.0
    %4923 = vmatprep.subr.mxu0 0.0
    %4924 = vmatpush2.xpose.msra.mxu0 0.0
    %4925 = vmatprep.subr.mxu0 0.0
    %4926 = vmatpush2.xpose.msra.mxu0 0.0
    %4927 = vmatprep.subr.mxu0 0.0
    %4928 = vmatpush2.xpose.msra.mxu0 0.0
    %4929 = vmatprep.subr.mxu0 0.0
    %4930 = vmatpush2.xpose.msra.mxu0 0.0
    %4931 = vmatprep.subr.mxu0 0.0
    %4932 = vmatpush2.xpose.msra.mxu0 0.0
    %4933 = vmatprep.subr.mxu0 0.0
    %4934 = vmatpush2.xpose.msra.mxu0 0.0
    %4935 = vmatprep.subr.mxu0 0.0
    %4936 = vmatpush2.xpose.msra.mxu0 0.0
    %4937 = vmatprep.subr.mxu0 0.0
    %4938 = vmatpush2.xpose.msra.mxu0 0.0
    %4939 = vmatprep.subr.mxu0 0.0
    %4940 = vmatpush2.xpose.msra.mxu0 0.0
    %4941 = vmatprep.subr.mxu0 0.0
    %4942 = vmatpush2.xpose.msra.mxu0 0.0
    %4943 = vmatprep.subr.mxu0 0.0
    %4944 = vmatpush2.xpose.msra.mxu0 0.0
    %4945 = vmatprep.subr.mxu0 0.0
    %4946 = vmatpush2.xpose.msra.mxu0 0.0
    %4947 = vmatprep.subr.mxu0 0.0
    %4948 = vmatpush2.xpose.msra.mxu0 0.0
    %4949 = vmatprep.subr.mxu0 0.0
    %4950 = vmatpush2.xpose.msra.mxu0 0.0
    %4951 = vmatprep.mubr.f32.mxu0 %v4772
    %4952 = vmatmul.mubr.f32.gmra.mxu0 %v4771
    %v4953 = vpop.f32.mrf.mxu0
    %v4954 = vadd.f32 %v4884, %v4953
    %v4955 = vpop.f32.mrf.mxu0
    %4956 = vdwg.mxu0
    %4957 = vmatprep.subr.mxu0 0.0
    %4958 = vmatpush1.xpose.msra.mxu0 0.0
    %4959 = vmatprep.subr.mxu0 0.0
    %4960 = vmatpush1.xpose.msra.mxu0 0.0
    %4961 = vmatprep.subr.mxu0 0.0
    %4962 = vmatpush1.xpose.msra.mxu0 0.0
    %4963 = vmatprep.subr.mxu0 0.0
    %4964 = vmatpush1.xpose.msra.mxu0 0.0
    %4965 = vmatprep.subr.mxu0 0.0
    %4966 = vmatpush1.xpose.msra.mxu0 0.0
    %4967 = vmatprep.subr.mxu0 0.0
    %4968 = vmatpush1.xpose.msra.mxu0 0.0
    %4969 = vmatprep.subr.mxu0 0.0
    %4970 = vmatpush1.xpose.msra.mxu0 0.0
    %4971 = vmatprep.subr.mxu0 0.0
    %4972 = vmatpush1.xpose.msra.mxu0 0.0
    %4973 = vmatprep.subr.mxu0 0.0
    %4974 = vmatpush1.xpose.msra.mxu0 0.0
    %4975 = vmatprep.subr.mxu0 0.0
    %4976 = vmatpush1.xpose.msra.mxu0 0.0
    %4977 = vmatprep.subr.mxu0 0.0
    %4978 = vmatpush1.xpose.msra.mxu0 0.0
    %4979 = vmatprep.subr.mxu0 0.0
    %4980 = vmatpush1.xpose.msra.mxu0 0.0
    %4981 = vmatprep.subr.mxu0 0.0
    %4982 = vmatpush1.xpose.msra.mxu0 0.0
    %4983 = vmatprep.subr.mxu0 0.0
    %4984 = vmatpush1.xpose.msra.mxu0 0.0
    %4985 = vmatprep.subr.mxu0 0.0
    %4986 = vmatpush1.xpose.msra.mxu0 0.0
    %4987 = vmatprep.subr.mxu0 %v2055
    %4988 = vmatpush1.xpose.msra.mxu0 %v1959
    %4989 = vmatprep.subr.mxu0 0.0
    %4990 = vmatpush2.xpose.msra.mxu0 0.0
    %4991 = vmatprep.subr.mxu0 0.0
    %4992 = vmatpush2.xpose.msra.mxu0 0.0
    %4993 = vmatprep.subr.mxu0 0.0
    %4994 = vmatpush2.xpose.msra.mxu0 0.0
    %4995 = vmatprep.subr.mxu0 0.0
    %4996 = vmatpush2.xpose.msra.mxu0 0.0
    %4997 = vmatprep.subr.mxu0 0.0
    %4998 = vmatpush2.xpose.msra.mxu0 0.0
    %4999 = vmatprep.subr.mxu0 0.0
    %5000 = vmatpush2.xpose.msra.mxu0 0.0
    %5001 = vmatprep.subr.mxu0 0.0
    %5002 = vmatpush2.xpose.msra.mxu0 0.0
    %5003 = vmatprep.subr.mxu0 0.0
    %5004 = vmatpush2.xpose.msra.mxu0 0.0
    %5005 = vmatprep.subr.mxu0 0.0
    %5006 = vmatpush2.xpose.msra.mxu0 0.0
    %5007 = vmatprep.subr.mxu0 0.0
    %5008 = vmatpush2.xpose.msra.mxu0 0.0
    %5009 = vmatprep.subr.mxu0 0.0
    %5010 = vmatpush2.xpose.msra.mxu0 0.0
    %5011 = vmatprep.subr.mxu0 0.0
    %5012 = vmatpush2.xpose.msra.mxu0 0.0
    %5013 = vmatprep.subr.mxu0 0.0
    %5014 = vmatpush2.xpose.msra.mxu0 0.0
    %5015 = vmatprep.subr.mxu0 0.0
    %5016 = vmatpush2.xpose.msra.mxu0 0.0
    %5017 = vmatprep.subr.mxu0 0.0
    %5018 = vmatpush2.xpose.msra.mxu0 0.0
    %5019 = vmatprep.subr.mxu0 0.0
    %5020 = vmatpush2.xpose.msra.mxu0 0.0
    %5021 = vmatprep.mubr.f32.mxu0 %v4774
    %5022 = vmatmul.mubr.f32.gmra.mxu0 %v4773
    %v5023 = vpop.f32.mrf.mxu0
    %v5024 = vadd.f32 %v4954, %v5023
    %v5025 = vpop.f32.mrf.mxu0
    %5026 = vdwg.mxu0
    %5027 = vmatprep.subr.mxu0 0.0
    %5028 = vmatpush1.xpose.msra.mxu0 0.0
    %5029 = vmatprep.subr.mxu0 0.0
    %5030 = vmatpush1.xpose.msra.mxu0 0.0
    %5031 = vmatprep.subr.mxu0 0.0
    %5032 = vmatpush1.xpose.msra.mxu0 0.0
    %5033 = vmatprep.subr.mxu0 0.0
    %5034 = vmatpush1.xpose.msra.mxu0 0.0
    %5035 = vmatprep.subr.mxu0 0.0
    %5036 = vmatpush1.xpose.msra.mxu0 0.0
    %5037 = vmatprep.subr.mxu0 0.0
    %5038 = vmatpush1.xpose.msra.mxu0 0.0
    %5039 = vmatprep.subr.mxu0 0.0
    %5040 = vmatpush1.xpose.msra.mxu0 0.0
    %5041 = vmatprep.subr.mxu0 0.0
    %5042 = vmatpush1.xpose.msra.mxu0 0.0
    %5043 = vmatprep.subr.mxu0 0.0
    %5044 = vmatpush1.xpose.msra.mxu0 0.0
    %5045 = vmatprep.subr.mxu0 0.0
    %5046 = vmatpush1.xpose.msra.mxu0 0.0
    %5047 = vmatprep.subr.mxu0 0.0
    %5048 = vmatpush1.xpose.msra.mxu0 0.0
    %5049 = vmatprep.subr.mxu0 0.0
    %5050 = vmatpush1.xpose.msra.mxu0 0.0
    %5051 = vmatprep.subr.mxu0 0.0
    %5052 = vmatpush1.xpose.msra.mxu0 0.0
    %5053 = vmatprep.subr.mxu0 0.0
    %5054 = vmatpush1.xpose.msra.mxu0 0.0
    %5055 = vmatprep.subr.mxu0 0.0
    %5056 = vmatpush1.xpose.msra.mxu0 0.0
    %5057 = vmatprep.subr.mxu0 %v2056
    %5058 = vmatpush1.xpose.msra.mxu0 %v1960
    %5059 = vmatprep.subr.mxu0 0.0
    %5060 = vmatpush2.xpose.msra.mxu0 0.0
    %5061 = vmatprep.subr.mxu0 0.0
    %5062 = vmatpush2.xpose.msra.mxu0 0.0
    %5063 = vmatprep.subr.mxu0 0.0
    %5064 = vmatpush2.xpose.msra.mxu0 0.0
    %5065 = vmatprep.subr.mxu0 0.0
    %5066 = vmatpush2.xpose.msra.mxu0 0.0
    %5067 = vmatprep.subr.mxu0 0.0
    %5068 = vmatpush2.xpose.msra.mxu0 0.0
    %5069 = vmatprep.subr.mxu0 0.0
    %5070 = vmatpush2.xpose.msra.mxu0 0.0
    %5071 = vmatprep.subr.mxu0 0.0
    %5072 = vmatpush2.xpose.msra.mxu0 0.0
    %5073 = vmatprep.subr.mxu0 0.0
    %5074 = vmatpush2.xpose.msra.mxu0 0.0
    %5075 = vmatprep.subr.mxu0 0.0
    %5076 = vmatpush2.xpose.msra.mxu0 0.0
    %5077 = vmatprep.subr.mxu0 0.0
    %5078 = vmatpush2.xpose.msra.mxu0 0.0
    %5079 = vmatprep.subr.mxu0 0.0
    %5080 = vmatpush2.xpose.msra.mxu0 0.0
    %5081 = vmatprep.subr.mxu0 0.0
    %5082 = vmatpush2.xpose.msra.mxu0 0.0
    %5083 = vmatprep.subr.mxu0 0.0
    %5084 = vmatpush2.xpose.msra.mxu0 0.0
    %5085 = vmatprep.subr.mxu0 0.0
    %5086 = vmatpush2.xpose.msra.mxu0 0.0
    %5087 = vmatprep.subr.mxu0 0.0
    %5088 = vmatpush2.xpose.msra.mxu0 0.0
    %5089 = vmatprep.subr.mxu0 0.0
    %5090 = vmatpush2.xpose.msra.mxu0 0.0
    %5091 = vmatprep.mubr.f32.mxu0 %v4776
    %5092 = vmatmul.mubr.f32.gmra.mxu0 %v4775
    %v5093 = vpop.f32.mrf.mxu0
    %v5094 = vadd.f32 %v5024, %v5093
    %v5095 = vpop.f32.mrf.mxu0
    %5096 = vdwg.mxu0
    %5097 = vmatprep.subr.mxu0 0.0
    %5098 = vmatpush1.xpose.msra.mxu0 0.0
    %5099 = vmatprep.subr.mxu0 0.0
    %5100 = vmatpush1.xpose.msra.mxu0 0.0
    %5101 = vmatprep.subr.mxu0 0.0
    %5102 = vmatpush1.xpose.msra.mxu0 0.0
    %5103 = vmatprep.subr.mxu0 0.0
    %5104 = vmatpush1.xpose.msra.mxu0 0.0
    %5105 = vmatprep.subr.mxu0 0.0
    %5106 = vmatpush1.xpose.msra.mxu0 0.0
    %5107 = vmatprep.subr.mxu0 0.0
    %5108 = vmatpush1.xpose.msra.mxu0 0.0
    %5109 = vmatprep.subr.mxu0 0.0
    %5110 = vmatpush1.xpose.msra.mxu0 0.0
    %5111 = vmatprep.subr.mxu0 0.0
    %5112 = vmatpush1.xpose.msra.mxu0 0.0
    %5113 = vmatprep.subr.mxu0 0.0
    %5114 = vmatpush1.xpose.msra.mxu0 0.0
    %5115 = vmatprep.subr.mxu0 0.0
    %5116 = vmatpush1.xpose.msra.mxu0 0.0
    %5117 = vmatprep.subr.mxu0 0.0
    %5118 = vmatpush1.xpose.msra.mxu0 0.0
    %5119 = vmatprep.subr.mxu0 0.0
    %5120 = vmatpush1.xpose.msra.mxu0 0.0
    %5121 = vmatprep.subr.mxu0 0.0
    %5122 = vmatpush1.xpose.msra.mxu0 0.0
    %5123 = vmatprep.subr.mxu0 0.0
    %5124 = vmatpush1.xpose.msra.mxu0 0.0
    %5125 = vmatprep.subr.mxu0 0.0
    %5126 = vmatpush1.xpose.msra.mxu0 0.0
    %5127 = vmatprep.subr.mxu0 %v2057
    %5128 = vmatpush1.xpose.msra.mxu0 %v1961
    %5129 = vmatprep.subr.mxu0 0.0
    %5130 = vmatpush2.xpose.msra.mxu0 0.0
    %5131 = vmatprep.subr.mxu0 0.0
    %5132 = vmatpush2.xpose.msra.mxu0 0.0
    %5133 = vmatprep.subr.mxu0 0.0
    %5134 = vmatpush2.xpose.msra.mxu0 0.0
    %5135 = vmatprep.subr.mxu0 0.0
    %5136 = vmatpush2.xpose.msra.mxu0 0.0
    %5137 = vmatprep.subr.mxu0 0.0
    %5138 = vmatpush2.xpose.msra.mxu0 0.0
    %5139 = vmatprep.subr.mxu0 0.0
    %5140 = vmatpush2.xpose.msra.mxu0 0.0
    %5141 = vmatprep.subr.mxu0 0.0
    %5142 = vmatpush2.xpose.msra.mxu0 0.0
    %5143 = vmatprep.subr.mxu0 0.0
    %5144 = vmatpush2.xpose.msra.mxu0 0.0
    %5145 = vmatprep.subr.mxu0 0.0
    %5146 = vmatpush2.xpose.msra.mxu0 0.0
    %5147 = vmatprep.subr.mxu0 0.0
    %5148 = vmatpush2.xpose.msra.mxu0 0.0
    %5149 = vmatprep.subr.mxu0 0.0
    %5150 = vmatpush2.xpose.msra.mxu0 0.0
    %5151 = vmatprep.subr.mxu0 0.0
    %5152 = vmatpush2.xpose.msra.mxu0 0.0
    %5153 = vmatprep.subr.mxu0 0.0
    %5154 = vmatpush2.xpose.msra.mxu0 0.0
    %5155 = vmatprep.subr.mxu0 0.0
    %5156 = vmatpush2.xpose.msra.mxu0 0.0
    %5157 = vmatprep.subr.mxu0 0.0
    %5158 = vmatpush2.xpose.msra.mxu0 0.0
    %5159 = vmatprep.subr.mxu0 0.0
    %5160 = vmatpush2.xpose.msra.mxu0 0.0
    %5161 = vmatprep.mubr.f32.mxu0 %v4778
    %5162 = vmatmul.mubr.f32.gmra.mxu0 %v4777
    %v5163 = vpop.f32.mrf.mxu0
    %v5164 = vadd.f32 %v5094, %v5163
    %v5165 = vpop.f32.mrf.mxu0
    %5166 = vdwg.mxu0
    %5167 = vmatprep.subr.mxu0 0.0
    %5168 = vmatpush1.xpose.msra.mxu0 0.0
    %5169 = vmatprep.subr.mxu0 0.0
    %5170 = vmatpush1.xpose.msra.mxu0 0.0
    %5171 = vmatprep.subr.mxu0 0.0
    %5172 = vmatpush1.xpose.msra.mxu0 0.0
    %5173 = vmatprep.subr.mxu0 0.0
    %5174 = vmatpush1.xpose.msra.mxu0 0.0
    %5175 = vmatprep.subr.mxu0 0.0
    %5176 = vmatpush1.xpose.msra.mxu0 0.0
    %5177 = vmatprep.subr.mxu0 0.0
    %5178 = vmatpush1.xpose.msra.mxu0 0.0
    %5179 = vmatprep.subr.mxu0 0.0
    %5180 = vmatpush1.xpose.msra.mxu0 0.0
    %5181 = vmatprep.subr.mxu0 0.0
    %5182 = vmatpush1.xpose.msra.mxu0 0.0
    %5183 = vmatprep.subr.mxu0 0.0
    %5184 = vmatpush1.xpose.msra.mxu0 0.0
    %5185 = vmatprep.subr.mxu0 0.0
    %5186 = vmatpush1.xpose.msra.mxu0 0.0
    %5187 = vmatprep.subr.mxu0 0.0
    %5188 = vmatpush1.xpose.msra.mxu0 0.0
    %5189 = vmatprep.subr.mxu0 0.0
    %5190 = vmatpush1.xpose.msra.mxu0 0.0
    %5191 = vmatprep.subr.mxu0 0.0
    %5192 = vmatpush1.xpose.msra.mxu0 0.0
    %5193 = vmatprep.subr.mxu0 0.0
    %5194 = vmatpush1.xpose.msra.mxu0 0.0
    %5195 = vmatprep.subr.mxu0 0.0
    %5196 = vmatpush1.xpose.msra.mxu0 0.0
    %5197 = vmatprep.subr.mxu0 %v2058
    %5198 = vmatpush1.xpose.msra.mxu0 %v1962
    %5199 = vmatprep.subr.mxu0 0.0
    %5200 = vmatpush2.xpose.msra.mxu0 0.0
    %5201 = vmatprep.subr.mxu0 0.0
    %5202 = vmatpush2.xpose.msra.mxu0 0.0
    %5203 = vmatprep.subr.mxu0 0.0
    %5204 = vmatpush2.xpose.msra.mxu0 0.0
    %5205 = vmatprep.subr.mxu0 0.0
    %5206 = vmatpush2.xpose.msra.mxu0 0.0
    %5207 = vmatprep.subr.mxu0 0.0
    %5208 = vmatpush2.xpose.msra.mxu0 0.0
    %5209 = vmatprep.subr.mxu0 0.0
    %5210 = vmatpush2.xpose.msra.mxu0 0.0
    %5211 = vmatprep.subr.mxu0 0.0
    %5212 = vmatpush2.xpose.msra.mxu0 0.0
    %5213 = vmatprep.subr.mxu0 0.0
    %5214 = vmatpush2.xpose.msra.mxu0 0.0
    %5215 = vmatprep.subr.mxu0 0.0
    %5216 = vmatpush2.xpose.msra.mxu0 0.0
    %5217 = vmatprep.subr.mxu0 0.0
    %5218 = vmatpush2.xpose.msra.mxu0 0.0
    %5219 = vmatprep.subr.mxu0 0.0
    %5220 = vmatpush2.xpose.msra.mxu0 0.0
    %5221 = vmatprep.subr.mxu0 0.0
    %5222 = vmatpush2.xpose.msra.mxu0 0.0
    %5223 = vmatprep.subr.mxu0 0.0
    %5224 = vmatpush2.xpose.msra.mxu0 0.0
    %5225 = vmatprep.subr.mxu0 0.0
    %5226 = vmatpush2.xpose.msra.mxu0 0.0
    %5227 = vmatprep.subr.mxu0 0.0
    %5228 = vmatpush2.xpose.msra.mxu0 0.0
    %5229 = vmatprep.subr.mxu0 0.0
    %5230 = vmatpush2.xpose.msra.mxu0 0.0
    %5231 = vmatprep.mubr.f32.mxu0 %v4780
    %5232 = vmatmul.mubr.f32.gmra.mxu0 %v4779
    %v5233 = vpop.f32.mrf.mxu0
    %v5234 = vadd.f32 %v5164, %v5233
    %v5235 = vpop.f32.mrf.mxu0
    %5236 = vdwg.mxu0
    %5237 = vmatprep.subr.mxu0 0.0
    %5238 = vmatpush1.xpose.msra.mxu0 0.0
    %5239 = vmatprep.subr.mxu0 0.0
    %5240 = vmatpush1.xpose.msra.mxu0 0.0
    %5241 = vmatprep.subr.mxu0 0.0
    %5242 = vmatpush1.xpose.msra.mxu0 0.0
    %5243 = vmatprep.subr.mxu0 0.0
    %5244 = vmatpush1.xpose.msra.mxu0 0.0
    %5245 = vmatprep.subr.mxu0 0.0
    %5246 = vmatpush1.xpose.msra.mxu0 0.0
    %5247 = vmatprep.subr.mxu0 0.0
    %5248 = vmatpush1.xpose.msra.mxu0 0.0
    %5249 = vmatprep.subr.mxu0 0.0
    %5250 = vmatpush1.xpose.msra.mxu0 0.0
    %5251 = vmatprep.subr.mxu0 0.0
    %5252 = vmatpush1.xpose.msra.mxu0 0.0
    %5253 = vmatprep.subr.mxu0 0.0
    %5254 = vmatpush1.xpose.msra.mxu0 0.0
    %5255 = vmatprep.subr.mxu0 0.0
    %5256 = vmatpush1.xpose.msra.mxu0 0.0
    %5257 = vmatprep.subr.mxu0 0.0
    %5258 = vmatpush1.xpose.msra.mxu0 0.0
    %5259 = vmatprep.subr.mxu0 0.0
    %5260 = vmatpush1.xpose.msra.mxu0 0.0
    %5261 = vmatprep.subr.mxu0 0.0
    %5262 = vmatpush1.xpose.msra.mxu0 0.0
    %5263 = vmatprep.subr.mxu0 0.0
    %5264 = vmatpush1.xpose.msra.mxu0 0.0
    %5265 = vmatprep.subr.mxu0 0.0
    %5266 = vmatpush1.xpose.msra.mxu0 0.0
    %5267 = vmatprep.subr.mxu0 %v2059
    %5268 = vmatpush1.xpose.msra.mxu0 %v1963
    %5269 = vmatprep.subr.mxu0 0.0
    %5270 = vmatpush2.xpose.msra.mxu0 0.0
    %5271 = vmatprep.subr.mxu0 0.0
    %5272 = vmatpush2.xpose.msra.mxu0 0.0
    %5273 = vmatprep.subr.mxu0 0.0
    %5274 = vmatpush2.xpose.msra.mxu0 0.0
    %5275 = vmatprep.subr.mxu0 0.0
    %5276 = vmatpush2.xpose.msra.mxu0 0.0
    %5277 = vmatprep.subr.mxu0 0.0
    %5278 = vmatpush2.xpose.msra.mxu0 0.0
    %5279 = vmatprep.subr.mxu0 0.0
    %5280 = vmatpush2.xpose.msra.mxu0 0.0
    %5281 = vmatprep.subr.mxu0 0.0
    %5282 = vmatpush2.xpose.msra.mxu0 0.0
    %5283 = vmatprep.subr.mxu0 0.0
    %5284 = vmatpush2.xpose.msra.mxu0 0.0
    %5285 = vmatprep.subr.mxu0 0.0
    %5286 = vmatpush2.xpose.msra.mxu0 0.0
    %5287 = vmatprep.subr.mxu0 0.0
    %5288 = vmatpush2.xpose.msra.mxu0 0.0
    %5289 = vmatprep.subr.mxu0 0.0
    %5290 = vmatpush2.xpose.msra.mxu0 0.0
    %5291 = vmatprep.subr.mxu0 0.0
    %5292 = vmatpush2.xpose.msra.mxu0 0.0
    %5293 = vmatprep.subr.mxu0 0.0
    %5294 = vmatpush2.xpose.msra.mxu0 0.0
    %5295 = vmatprep.subr.mxu0 0.0
    %5296 = vmatpush2.xpose.msra.mxu0 0.0
    %5297 = vmatprep.subr.mxu0 0.0
    %5298 = vmatpush2.xpose.msra.mxu0 0.0
    %5299 = vmatprep.subr.mxu0 0.0
    %5300 = vmatpush2.xpose.msra.mxu0 0.0
    %5301 = vmatprep.mubr.f32.mxu0 %v4782
    %5302 = vmatmul.mubr.f32.gmra.mxu0 %v4781
    %v5303 = vpop.f32.mrf.mxu0
    %v5304 = vadd.f32 %v5234, %v5303
    %v5305 = vpop.f32.mrf.mxu0
    %5306 = vdwg.mxu0
    %5307 = vmatprep.subr.mxu0 0.0
    %5308 = vmatpush1.xpose.msra.mxu0 0.0
    %5309 = vmatprep.subr.mxu0 0.0
    %5310 = vmatpush1.xpose.msra.mxu0 0.0
    %5311 = vmatprep.subr.mxu0 0.0
    %5312 = vmatpush1.xpose.msra.mxu0 0.0
    %5313 = vmatprep.subr.mxu0 0.0
    %5314 = vmatpush1.xpose.msra.mxu0 0.0
    %5315 = vmatprep.subr.mxu0 0.0
    %5316 = vmatpush1.xpose.msra.mxu0 0.0
    %5317 = vmatprep.subr.mxu0 0.0
    %5318 = vmatpush1.xpose.msra.mxu0 0.0
    %5319 = vmatprep.subr.mxu0 0.0
    %5320 = vmatpush1.xpose.msra.mxu0 0.0
    %5321 = vmatprep.subr.mxu0 0.0
    %5322 = vmatpush1.xpose.msra.mxu0 0.0
    %5323 = vmatprep.subr.mxu0 0.0
    %5324 = vmatpush1.xpose.msra.mxu0 0.0
    %5325 = vmatprep.subr.mxu0 0.0
    %5326 = vmatpush1.xpose.msra.mxu0 0.0
    %5327 = vmatprep.subr.mxu0 0.0
    %5328 = vmatpush1.xpose.msra.mxu0 0.0
    %5329 = vmatprep.subr.mxu0 0.0
    %5330 = vmatpush1.xpose.msra.mxu0 0.0
    %5331 = vmatprep.subr.mxu0 0.0
    %5332 = vmatpush1.xpose.msra.mxu0 0.0
    %5333 = vmatprep.subr.mxu0 0.0
    %5334 = vmatpush1.xpose.msra.mxu0 0.0
    %5335 = vmatprep.subr.mxu0 0.0
    %5336 = vmatpush1.xpose.msra.mxu0 0.0
    %5337 = vmatprep.subr.mxu0 %v2060
    %5338 = vmatpush1.xpose.msra.mxu0 %v1964
    %5339 = vmatprep.subr.mxu0 0.0
    %5340 = vmatpush2.xpose.msra.mxu0 0.0
    %5341 = vmatprep.subr.mxu0 0.0
    %5342 = vmatpush2.xpose.msra.mxu0 0.0
    %5343 = vmatprep.subr.mxu0 0.0
    %5344 = vmatpush2.xpose.msra.mxu0 0.0
    %5345 = vmatprep.subr.mxu0 0.0
    %5346 = vmatpush2.xpose.msra.mxu0 0.0
    %5347 = vmatprep.subr.mxu0 0.0
    %5348 = vmatpush2.xpose.msra.mxu0 0.0
    %5349 = vmatprep.subr.mxu0 0.0
    %5350 = vmatpush2.xpose.msra.mxu0 0.0
    %5351 = vmatprep.subr.mxu0 0.0
    %5352 = vmatpush2.xpose.msra.mxu0 0.0
    %5353 = vmatprep.subr.mxu0 0.0
    %5354 = vmatpush2.xpose.msra.mxu0 0.0
    %5355 = vmatprep.subr.mxu0 0.0
    %5356 = vmatpush2.xpose.msra.mxu0 0.0
    %5357 = vmatprep.subr.mxu0 0.0
    %5358 = vmatpush2.xpose.msra.mxu0 0.0
    %5359 = vmatprep.subr.mxu0 0.0
    %5360 = vmatpush2.xpose.msra.mxu0 0.0
    %5361 = vmatprep.subr.mxu0 0.0
    %5362 = vmatpush2.xpose.msra.mxu0 0.0
    %5363 = vmatprep.subr.mxu0 0.0
    %5364 = vmatpush2.xpose.msra.mxu0 0.0
    %5365 = vmatprep.subr.mxu0 0.0
    %5366 = vmatpush2.xpose.msra.mxu0 0.0
    %5367 = vmatprep.subr.mxu0 0.0
    %5368 = vmatpush2.xpose.msra.mxu0 0.0
    %5369 = vmatprep.subr.mxu0 0.0
    %5370 = vmatpush2.xpose.msra.mxu0 0.0
    %5371 = vmatprep.mubr.f32.mxu0 %v4784
    %5372 = vmatmul.mubr.f32.gmra.mxu0 %v4783
    %v5373 = vpop.f32.mrf.mxu0
    %v5374 = vadd.f32 %v5304, %v5373
    %v5375 = vpop.f32.mrf.mxu0
    %5376 = vdwg.mxu0
    %5377 = vmatprep.subr.mxu0 0.0
    %5378 = vmatpush1.xpose.msra.mxu0 0.0
    %5379 = vmatprep.subr.mxu0 0.0
    %5380 = vmatpush1.xpose.msra.mxu0 0.0
    %5381 = vmatprep.subr.mxu0 0.0
    %5382 = vmatpush1.xpose.msra.mxu0 0.0
    %5383 = vmatprep.subr.mxu0 0.0
    %5384 = vmatpush1.xpose.msra.mxu0 0.0
    %5385 = vmatprep.subr.mxu0 0.0
    %5386 = vmatpush1.xpose.msra.mxu0 0.0
    %5387 = vmatprep.subr.mxu0 0.0
    %5388 = vmatpush1.xpose.msra.mxu0 0.0
    %5389 = vmatprep.subr.mxu0 0.0
    %5390 = vmatpush1.xpose.msra.mxu0 0.0
    %5391 = vmatprep.subr.mxu0 0.0
    %5392 = vmatpush1.xpose.msra.mxu0 0.0
    %5393 = vmatprep.subr.mxu0 0.0
    %5394 = vmatpush1.xpose.msra.mxu0 0.0
    %5395 = vmatprep.subr.mxu0 0.0
    %5396 = vmatpush1.xpose.msra.mxu0 0.0
    %5397 = vmatprep.subr.mxu0 0.0
    %5398 = vmatpush1.xpose.msra.mxu0 0.0
    %5399 = vmatprep.subr.mxu0 0.0
    %5400 = vmatpush1.xpose.msra.mxu0 0.0
    %5401 = vmatprep.subr.mxu0 0.0
    %5402 = vmatpush1.xpose.msra.mxu0 0.0
    %5403 = vmatprep.subr.mxu0 0.0
    %5404 = vmatpush1.xpose.msra.mxu0 0.0
    %5405 = vmatprep.subr.mxu0 0.0
    %5406 = vmatpush1.xpose.msra.mxu0 0.0
    %5407 = vmatprep.subr.mxu0 %v2061
    %5408 = vmatpush1.xpose.msra.mxu0 %v1965
    %5409 = vmatprep.subr.mxu0 0.0
    %5410 = vmatpush2.xpose.msra.mxu0 0.0
    %5411 = vmatprep.subr.mxu0 0.0
    %5412 = vmatpush2.xpose.msra.mxu0 0.0
    %5413 = vmatprep.subr.mxu0 0.0
    %5414 = vmatpush2.xpose.msra.mxu0 0.0
    %5415 = vmatprep.subr.mxu0 0.0
    %5416 = vmatpush2.xpose.msra.mxu0 0.0
    %5417 = vmatprep.subr.mxu0 0.0
    %5418 = vmatpush2.xpose.msra.mxu0 0.0
    %5419 = vmatprep.subr.mxu0 0.0
    %5420 = vmatpush2.xpose.msra.mxu0 0.0
    %5421 = vmatprep.subr.mxu0 0.0
    %5422 = vmatpush2.xpose.msra.mxu0 0.0
    %5423 = vmatprep.subr.mxu0 0.0
    %5424 = vmatpush2.xpose.msra.mxu0 0.0
    %5425 = vmatprep.subr.mxu0 0.0
    %5426 = vmatpush2.xpose.msra.mxu0 0.0
    %5427 = vmatprep.subr.mxu0 0.0
    %5428 = vmatpush2.xpose.msra.mxu0 0.0
    %5429 = vmatprep.subr.mxu0 0.0
    %5430 = vmatpush2.xpose.msra.mxu0 0.0
    %5431 = vmatprep.subr.mxu0 0.0
    %5432 = vmatpush2.xpose.msra.mxu0 0.0
    %5433 = vmatprep.subr.mxu0 0.0
    %5434 = vmatpush2.xpose.msra.mxu0 0.0
    %5435 = vmatprep.subr.mxu0 0.0
    %5436 = vmatpush2.xpose.msra.mxu0 0.0
    %5437 = vmatprep.subr.mxu0 0.0
    %5438 = vmatpush2.xpose.msra.mxu0 0.0
    %5439 = vmatprep.subr.mxu0 0.0
    %5440 = vmatpush2.xpose.msra.mxu0 0.0
    %5441 = vmatprep.mubr.f32.mxu0 %v4786
    %5442 = vmatmul.mubr.f32.gmra.mxu0 %v4785
    %v5443 = vpop.f32.mrf.mxu0
    %v5444 = vadd.f32 %v5374, %v5443
    %v5445 = vpop.f32.mrf.mxu0
    %5446 = vdwg.mxu0
    %5447 = vmatprep.subr.mxu0 0.0
    %5448 = vmatpush1.xpose.msra.mxu0 0.0
    %5449 = vmatprep.subr.mxu0 0.0
    %5450 = vmatpush1.xpose.msra.mxu0 0.0
    %5451 = vmatprep.subr.mxu0 0.0
    %5452 = vmatpush1.xpose.msra.mxu0 0.0
    %5453 = vmatprep.subr.mxu0 0.0
    %5454 = vmatpush1.xpose.msra.mxu0 0.0
    %5455 = vmatprep.subr.mxu0 0.0
    %5456 = vmatpush1.xpose.msra.mxu0 0.0
    %5457 = vmatprep.subr.mxu0 0.0
    %5458 = vmatpush1.xpose.msra.mxu0 0.0
    %5459 = vmatprep.subr.mxu0 0.0
    %5460 = vmatpush1.xpose.msra.mxu0 0.0
    %5461 = vmatprep.subr.mxu0 0.0
    %5462 = vmatpush1.xpose.msra.mxu0 0.0
    %5463 = vmatprep.subr.mxu0 0.0
    %5464 = vmatpush1.xpose.msra.mxu0 0.0
    %5465 = vmatprep.subr.mxu0 0.0
    %5466 = vmatpush1.xpose.msra.mxu0 0.0
    %5467 = vmatprep.subr.mxu0 0.0
    %5468 = vmatpush1.xpose.msra.mxu0 0.0
    %5469 = vmatprep.subr.mxu0 0.0
    %5470 = vmatpush1.xpose.msra.mxu0 0.0
    %5471 = vmatprep.subr.mxu0 0.0
    %5472 = vmatpush1.xpose.msra.mxu0 0.0
    %5473 = vmatprep.subr.mxu0 0.0
    %5474 = vmatpush1.xpose.msra.mxu0 0.0
    %5475 = vmatprep.subr.mxu0 0.0
    %5476 = vmatpush1.xpose.msra.mxu0 0.0
    %5477 = vmatprep.subr.mxu0 %v2062
    %5478 = vmatpush1.xpose.msra.mxu0 %v1966
    %5479 = vmatprep.subr.mxu0 0.0
    %5480 = vmatpush2.xpose.msra.mxu0 0.0
    %5481 = vmatprep.subr.mxu0 0.0
    %5482 = vmatpush2.xpose.msra.mxu0 0.0
    %5483 = vmatprep.subr.mxu0 0.0
    %5484 = vmatpush2.xpose.msra.mxu0 0.0
    %5485 = vmatprep.subr.mxu0 0.0
    %5486 = vmatpush2.xpose.msra.mxu0 0.0
    %5487 = vmatprep.subr.mxu0 0.0
    %5488 = vmatpush2.xpose.msra.mxu0 0.0
    %5489 = vmatprep.subr.mxu0 0.0
    %5490 = vmatpush2.xpose.msra.mxu0 0.0
    %5491 = vmatprep.subr.mxu0 0.0
    %5492 = vmatpush2.xpose.msra.mxu0 0.0
    %5493 = vmatprep.subr.mxu0 0.0
    %5494 = vmatpush2.xpose.msra.mxu0 0.0
    %5495 = vmatprep.subr.mxu0 0.0
    %5496 = vmatpush2.xpose.msra.mxu0 0.0
    %5497 = vmatprep.subr.mxu0 0.0
    %5498 = vmatpush2.xpose.msra.mxu0 0.0
    %5499 = vmatprep.subr.mxu0 0.0
    %5500 = vmatpush2.xpose.msra.mxu0 0.0
    %5501 = vmatprep.subr.mxu0 0.0
    %5502 = vmatpush2.xpose.msra.mxu0 0.0
    %5503 = vmatprep.subr.mxu0 0.0
    %5504 = vmatpush2.xpose.msra.mxu0 0.0
    %5505 = vmatprep.subr.mxu0 0.0
    %5506 = vmatpush2.xpose.msra.mxu0 0.0
    %5507 = vmatprep.subr.mxu0 0.0
    %5508 = vmatpush2.xpose.msra.mxu0 0.0
    %5509 = vmatprep.subr.mxu0 0.0
    %5510 = vmatpush2.xpose.msra.mxu0 0.0
    %5511 = vmatprep.mubr.f32.mxu0 %v4788
    %5512 = vmatmul.mubr.f32.gmra.mxu0 %v4787
    %v5513 = vpop.f32.mrf.mxu0
    %v5514 = vadd.f32 %v5444, %v5513
    %v5515 = vpop.f32.mrf.mxu0
    %5516 = vdwg.mxu0
    %5517 = vmatprep.subr.mxu0 0.0
    %5518 = vmatpush1.xpose.msra.mxu0 0.0
    %5519 = vmatprep.subr.mxu0 0.0
    %5520 = vmatpush1.xpose.msra.mxu0 0.0
    %5521 = vmatprep.subr.mxu0 0.0
    %5522 = vmatpush1.xpose.msra.mxu0 0.0
    %5523 = vmatprep.subr.mxu0 0.0
    %5524 = vmatpush1.xpose.msra.mxu0 0.0
    %5525 = vmatprep.subr.mxu0 0.0
    %5526 = vmatpush1.xpose.msra.mxu0 0.0
    %5527 = vmatprep.subr.mxu0 0.0
    %5528 = vmatpush1.xpose.msra.mxu0 0.0
    %5529 = vmatprep.subr.mxu0 0.0
    %5530 = vmatpush1.xpose.msra.mxu0 0.0
    %5531 = vmatprep.subr.mxu0 0.0
    %5532 = vmatpush1.xpose.msra.mxu0 0.0
    %5533 = vmatprep.subr.mxu0 0.0
    %5534 = vmatpush1.xpose.msra.mxu0 0.0
    %5535 = vmatprep.subr.mxu0 0.0
    %5536 = vmatpush1.xpose.msra.mxu0 0.0
    %5537 = vmatprep.subr.mxu0 0.0
    %5538 = vmatpush1.xpose.msra.mxu0 0.0
    %5539 = vmatprep.subr.mxu0 0.0
    %5540 = vmatpush1.xpose.msra.mxu0 0.0
    %5541 = vmatprep.subr.mxu0 0.0
    %5542 = vmatpush1.xpose.msra.mxu0 0.0
    %5543 = vmatprep.subr.mxu0 0.0
    %5544 = vmatpush1.xpose.msra.mxu0 0.0
    %5545 = vmatprep.subr.mxu0 0.0
    %5546 = vmatpush1.xpose.msra.mxu0 0.0
    %5547 = vmatprep.subr.mxu0 %v2063
    %5548 = vmatpush1.xpose.msra.mxu0 %v1967
    %5549 = vmatprep.subr.mxu0 0.0
    %5550 = vmatpush2.xpose.msra.mxu0 0.0
    %5551 = vmatprep.subr.mxu0 0.0
    %5552 = vmatpush2.xpose.msra.mxu0 0.0
    %5553 = vmatprep.subr.mxu0 0.0
    %5554 = vmatpush2.xpose.msra.mxu0 0.0
    %5555 = vmatprep.subr.mxu0 0.0
    %5556 = vmatpush2.xpose.msra.mxu0 0.0
    %5557 = vmatprep.subr.mxu0 0.0
    %5558 = vmatpush2.xpose.msra.mxu0 0.0
    %5559 = vmatprep.subr.mxu0 0.0
    %5560 = vmatpush2.xpose.msra.mxu0 0.0
    %5561 = vmatprep.subr.mxu0 0.0
    %5562 = vmatpush2.xpose.msra.mxu0 0.0
    %5563 = vmatprep.subr.mxu0 0.0
    %5564 = vmatpush2.xpose.msra.mxu0 0.0
    %5565 = vmatprep.subr.mxu0 0.0
    %5566 = vmatpush2.xpose.msra.mxu0 0.0
    %5567 = vmatprep.subr.mxu0 0.0
    %5568 = vmatpush2.xpose.msra.mxu0 0.0
    %5569 = vmatprep.subr.mxu0 0.0
    %5570 = vmatpush2.xpose.msra.mxu0 0.0
    %5571 = vmatprep.subr.mxu0 0.0
    %5572 = vmatpush2.xpose.msra.mxu0 0.0
    %5573 = vmatprep.subr.mxu0 0.0
    %5574 = vmatpush2.xpose.msra.mxu0 0.0
    %5575 = vmatprep.subr.mxu0 0.0
    %5576 = vmatpush2.xpose.msra.mxu0 0.0
    %5577 = vmatprep.subr.mxu0 0.0
    %5578 = vmatpush2.xpose.msra.mxu0 0.0
    %5579 = vmatprep.subr.mxu0 0.0
    %5580 = vmatpush2.xpose.msra.mxu0 0.0
    %5581 = vmatprep.mubr.f32.mxu0 %v4790
    %5582 = vmatmul.mubr.f32.gmra.mxu0 %v4789
    %v5583 = vpop.f32.mrf.mxu0
    %v5584 = vadd.f32 %v5514, %v5583
    %v5585 = vpop.f32.mrf.mxu0
    %5586 = vdwg.mxu0
    %5587 = vmatprep.subr.mxu0 0.0
    %5588 = vmatpush1.xpose.msra.mxu0 0.0
    %5589 = vmatprep.subr.mxu0 0.0
    %5590 = vmatpush1.xpose.msra.mxu0 0.0
    %5591 = vmatprep.subr.mxu0 0.0
    %5592 = vmatpush1.xpose.msra.mxu0 0.0
    %5593 = vmatprep.subr.mxu0 0.0
    %5594 = vmatpush1.xpose.msra.mxu0 0.0
    %5595 = vmatprep.subr.mxu0 0.0
    %5596 = vmatpush1.xpose.msra.mxu0 0.0
    %5597 = vmatprep.subr.mxu0 0.0
    %5598 = vmatpush1.xpose.msra.mxu0 0.0
    %5599 = vmatprep.subr.mxu0 0.0
    %5600 = vmatpush1.xpose.msra.mxu0 0.0
    %5601 = vmatprep.subr.mxu0 0.0
    %5602 = vmatpush1.xpose.msra.mxu0 0.0
    %5603 = vmatprep.subr.mxu0 0.0
    %5604 = vmatpush1.xpose.msra.mxu0 0.0
    %5605 = vmatprep.subr.mxu0 0.0
    %5606 = vmatpush1.xpose.msra.mxu0 0.0
    %5607 = vmatprep.subr.mxu0 0.0
    %5608 = vmatpush1.xpose.msra.mxu0 0.0
    %5609 = vmatprep.subr.mxu0 0.0
    %5610 = vmatpush1.xpose.msra.mxu0 0.0
    %5611 = vmatprep.subr.mxu0 0.0
    %5612 = vmatpush1.xpose.msra.mxu0 0.0
    %5613 = vmatprep.subr.mxu0 0.0
    %5614 = vmatpush1.xpose.msra.mxu0 0.0
    %5615 = vmatprep.subr.mxu0 0.0
    %5616 = vmatpush1.xpose.msra.mxu0 0.0
    %5617 = vmatprep.subr.mxu0 %v2064
    %5618 = vmatpush1.xpose.msra.mxu0 %v1968
    %5619 = vmatprep.subr.mxu0 0.0
    %5620 = vmatpush2.xpose.msra.mxu0 0.0
    %5621 = vmatprep.subr.mxu0 0.0
    %5622 = vmatpush2.xpose.msra.mxu0 0.0
    %5623 = vmatprep.subr.mxu0 0.0
    %5624 = vmatpush2.xpose.msra.mxu0 0.0
    %5625 = vmatprep.subr.mxu0 0.0
    %5626 = vmatpush2.xpose.msra.mxu0 0.0
    %5627 = vmatprep.subr.mxu0 0.0
    %5628 = vmatpush2.xpose.msra.mxu0 0.0
    %5629 = vmatprep.subr.mxu0 0.0
    %5630 = vmatpush2.xpose.msra.mxu0 0.0
    %5631 = vmatprep.subr.mxu0 0.0
    %5632 = vmatpush2.xpose.msra.mxu0 0.0
    %5633 = vmatprep.subr.mxu0 0.0
    %5634 = vmatpush2.xpose.msra.mxu0 0.0
    %5635 = vmatprep.subr.mxu0 0.0
    %5636 = vmatpush2.xpose.msra.mxu0 0.0
    %5637 = vmatprep.subr.mxu0 0.0
    %5638 = vmatpush2.xpose.msra.mxu0 0.0
    %5639 = vmatprep.subr.mxu0 0.0
    %5640 = vmatpush2.xpose.msra.mxu0 0.0
    %5641 = vmatprep.subr.mxu0 0.0
    %5642 = vmatpush2.xpose.msra.mxu0 0.0
    %5643 = vmatprep.subr.mxu0 0.0
    %5644 = vmatpush2.xpose.msra.mxu0 0.0
    %5645 = vmatprep.subr.mxu0 0.0
    %5646 = vmatpush2.xpose.msra.mxu0 0.0
    %5647 = vmatprep.subr.mxu0 0.0
    %5648 = vmatpush2.xpose.msra.mxu0 0.0
    %5649 = vmatprep.subr.mxu0 0.0
    %5650 = vmatpush2.xpose.msra.mxu0 0.0
    %5651 = vmatprep.mubr.f32.mxu0 %v4792
    %5652 = vmatmul.mubr.f32.gmra.mxu0 %v4791
    %v5653 = vpop.f32.mrf.mxu0
    %v5654 = vadd.f32 %v5584, %v5653
    %v5655 = vpop.f32.mrf.mxu0
    %5656 = vdwg.mxu0
    %v5657 = vadd.f32 %v4718, %v5654
    %v5658 = vadd.f32 %v5657, %v2918
    %vm5659 = vcmask 27648
    %v5660 = vsel %vm5659, %v2919, 0.0
    %5661 = vadd.xlane.f32.xlu0 %v5660
    %v5662 = vpop.xlane.xlu0 %5661
    %v5663 = vrot.slane %v5662, 4
    %v5664 = vadd.f32 %v5662, %v5663
    %v5665 = vrot.slane %v5664, 2
    %v5666 = vadd.f32 %v5664, %v5665
    %v5667 = vrot.slane %v5666, 1
    %v5668 = vadd.f32 %v5666, %v5667
    %s5669 = vtos %v5668
    %v5670 = vsel %vm5659, %v5658, 0.0
    %5671 = vadd.xlane.f32.xlu0 %v5670
    %v5672 = vpop.xlane.xlu0 %5671
    %v5673 = vrot.slane %v5672, 4
    %v5674 = vadd.f32 %v5672, %v5673
    %v5675 = vrot.slane %v5674, 2
    %v5676 = vadd.f32 %v5674, %v5675
    %v5677 = vrot.slane %v5676, 1
    %v5678 = vadd.f32 %v5676, %v5677
    %s5679 = vtos %v5678
    %s5680 = sadd.f32 %s5669, 0.0
    %s5681 = sadd.f32 %s5680, %s5679
    %v5682 = vrcp.pop 32.0
    %s5683 = vtos %v5682
    %s5684 = smul.f32 %s5681, %s5683
    %v5685 = vstv %s5684
    %v5686 = vsub.f32 %v2919, %v5685
    %v5687 = vmul.f32 %v5686, %v5686
    %v5688 = vsel %vm5659, %v5687, 0.0
    %5689 = vadd.xlane.f32.xlu0 %v5688
    %v5690 = vpop.xlane.xlu0 %5689
    %v5691 = vrot.slane %v5690, 4
    %v5692 = vadd.f32 %v5690, %v5691
    %v5693 = vrot.slane %v5692, 2
    %v5694 = vadd.f32 %v5692, %v5693
    %v5695 = vrot.slane %v5694, 1
    %v5696 = vadd.f32 %v5694, %v5695
    %s5697 = vtos %v5696
    %v5698 = vsub.f32 %v5658, %v5685
    %v5699 = vmul.f32 %v5698, %v5698
    %v5700 = vsel %vm5659, %v5699, 0.0
    %5701 = vadd.xlane.f32.xlu0 %v5700
    %v5702 = vpop.xlane.xlu0 %5701
    %v5703 = vrot.slane %v5702, 4
    %v5704 = vadd.f32 %v5702, %v5703
    %v5705 = vrot.slane %v5704, 2
    %v5706 = vadd.f32 %v5704, %v5705
    %v5707 = vrot.slane %v5706, 1
    %v5708 = vadd.f32 %v5706, %v5707
    %s5709 = vtos %v5708
    %s5710 = sadd.f32 %s5697, 0.0
    %s5711 = sadd.f32 %s5710, %s5709
    %v5712 = vrcp.pop 32.0
    %s5713 = vtos %v5712
    %s5714 = smul.f32 %s5711, %s5713
    %s5715 = sadd.f32 %s5714, 2e-05
    %v5716 = vstv %s5715
    %v5717 = vrsqrt.pop %v5716
    %s5718 = vtos %v5717
    %s5719 = smul.f32 %s5718, %s32
    %v5720 = vld [vmem:[%s2] sm:$0xf]
    %v5721 = vlaneseq
    %v5722 = vand.u32 %v5721, 127
    %v5723 = vstv %s5719
    %v5724 = vmul.f32 %v5686, %v5723
    %v5725 = vstv %s33
    %v5726 = vadd.f32 %v5724, %v5725
    %v5727 = vmax.f32 %v5726, 0.0
    %v5728 = vmul.f32 %v5727, %v5720
    %v5729 = vsel %vm5659, %v5728, 0.0
    %5730 = vadd.xlane.f32.xlu0 %v5729
    %v5731 = vpop.xlane.xlu0 %5730
    %v5732 = vrot.slane %v5731, 4
    %v5733 = vadd.f32 %v5731, %v5732
    %v5734 = vrot.slane %v5733, 2
    %v5735 = vadd.f32 %v5733, %v5734
    %v5736 = vrot.slane %v5735, 1
    %v5737 = vadd.f32 %v5735, %v5736
    %s5738 = vtos %v5737
    %s5739 = sadd.f32 %s5738, %s34
    %vm5740 = vcmp.eq.s32.totalorder %v5722, 0
    %v5741 = vstv %s5739
    %v5742 = vsel %vm5740, %v5741, 0.0
    %v5743 = vmul.f32 %v5698, %v5723
    %v5744 = vadd.f32 %v5743, %v5725
    %v5745 = vmax.f32 %v5744, 0.0
    %v5746 = vmul.f32 %v5745, %v5720
    %v5747 = vsel %vm5659, %v5746, 0.0
    %5748 = vadd.xlane.f32.xlu0 %v5747
    %v5749 = vpop.xlane.xlu0 %5748
    %v5750 = vrot.slane %v5749, 4
    %v5751 = vadd.f32 %v5749, %v5750
    %v5752 = vrot.slane %v5751, 2
    %v5753 = vadd.f32 %v5751, %v5752
    %v5754 = vrot.slane %v5753, 1
    %v5755 = vadd.f32 %v5753, %v5754
    %s5756 = vtos %v5755
    %s5757 = sadd.f32 %s5756, %s34
    %vm5758 = vcmp.eq.s32.totalorder %v5722, 1
    %v5759 = vstv %s5757
    %v5760 = vsel %vm5758, %v5759, %v5742
    %vm5761 = vcmp.gt.f32.partialorder %v5760, 20.0
    %v5762 = vmin.f32 %v5760, 20.0
    %v5763 = vmul.f32 %v5762, 1.442695
    %v5764 = vpow.pop %v5763
    %v5765 = vadd.f32 %v5764, 1.0
    %v5766 = vlog2.pop %v5765
    %v5767 = vmul.f32 %v5766, 0.6931472
    %v5768 = vmul.f32 -0.5, %v5764
    %v5769 = vadd.f32 %v5768, 1.0
    %v5770 = vmul.f32 %v5769, %v5764
    %v5771 = vand.u32 2147483647, %v5764
    %vm5772 = vcmp.lt.f32.partialorder %v5771, 0.0004427343
    %v5773 = vsel %vm5772, %v5770, %v5767
    %v5774 = vsel %vm5761, %v5760, %v5773
    %vm5775 = vcmask 8192
    %5776 = vst.msk [vmem:[#allocation5] sm:$0x1] %vm5775, %v5774
    // Predicated region
    $region22: #{lengthscale_forward.1} parent=1 // pred_check
      _
    $region23: #{lengthscale_forward.1} parent=1 // pred_check_branch
      %5778 = sbr.rel (0) target = $region25
    $region24: #{lengthscale_forward.1} parent=1 // pred_region
      %s5780 = ssub.s32 16, 16
      %5781 = vsyncadd [#allocation3], %s5780
      %s5783 = sshll.u32 [#allocation5], 4
      %s5784 = int_to_ptr.vmem [resolvable:$true] %s5783
      %5786 = dma.vmem_to_hbm [thread:$0]  %s5784, 16, %s4, [#allocation3]
    $region25: #{lengthscale_forward.1} parent=1 // pred_fallthru
      _
    // Predicated region
    $region26: #{lengthscale_forward.1} parent=1 // pred_check
      _
    $region27: #{lengthscale_forward.1} parent=1 // pred_check_branch
      %5788 = sbr.rel (0) target = $region29
    $region28: #{lengthscale_forward.1} parent=1 // pred_region
      %5789 = dma.done [#allocation3], 16
    $region29: #{lengthscale_forward.1} parent=1 // pred_fallthru
      _
    %5790 = vsyncpa [#allocation3], 1
    %5791 = vsyncpa [#allocation4], 1

</llo_original>
